<compile_context>
chip_gen: v5e
topology: v5e:2x2
jax: 0.10.0
libtpu: 0.0.40
codegen_flags: <defaults>
</compile_context>

<pallas_src>
import functools

import jax
import jax.numpy as jnp
import numpy as np
from jax.experimental import pallas as pl
from jax.experimental.pallas import tpu as pltpu


def sage_kernel(*refs, lin_before_mp):
    if lin_before_mp:
        a_ref, s_ref, x_row_ref, deg_ref, ws_ref, b_ref, out_ref, acc_ref = refs
        wn_ref = None
    else:
        (a_ref, s_ref, x_row_ref, deg_ref, wn_ref, ws_ref, b_ref,
         out_ref, acc_ref) = refs

    k = pl.program_id(1)

    @pl.when(k == 0)
    def _init():
        acc_ref[...] = jnp.zeros_like(acc_ref)

    # Streamed aggregation: bf16 A tile (exact 0/1) x bf16 source chunk,
    # single-pass full-rate MXU with f32 accumulation.  No in-kernel casts.
    acc_ref[...] += jnp.dot(a_ref[...], s_ref[...],
                            preferred_element_type=jnp.float32)

    @pl.when(k == pl.num_programs(1) - 1)
    def _finalize():
        # Mean normalization hoisted out of the k-loop (reciprocal-multiply).
        inv_deg = pl.reciprocal(deg_ref[...], approx=False)      # (tile_n, 1)
        if lin_before_mp:
            h_neigh = acc_ref[...] * inv_deg                     # (tile_n, Fout)
        else:
            agg = acc_ref[...] * inv_deg                         # (tile_n, Fin)
            # Once per row tile; kept f32-accurate (tiny vs the k-loop matmul).
            h_neigh = jnp.dot(agg, wn_ref[...],
                              preferred_element_type=jnp.float32)
        h_self = jnp.dot(x_row_ref[...], ws_ref[...],
                         preferred_element_type=jnp.float32) + b_ref[...]
        out_ref[...] = (h_self + h_neigh).astype(out_ref.dtype)


def _round_up(x, m):
    return x + (-x) % m


def _pad2(x, rows, cols, value=0.0):
    r, c = x.shape
    if r == rows and c == cols:
        return x
    return jnp.pad(x, ((0, rows - r), (0, cols - c)), constant_values=value)


def _vmem_limit_bytes():
    # 3/4 of physical VMEM, capped at 96 MiB:
    #   v5e/v6e (128 MiB) -> 96 MiB, v7x (64 MiB) -> 48 MiB.
    try:
        cap = pltpu.get_tpu_info().vmem_capacity_bytes
    except Exception:
        cap = 64 * 1024 * 1024
    return int(min(96 * 1024 * 1024, cap * 3 // 4))


def sage_forward(adj, feat, in_deg, wn, ws, b, *, tile_n=512, tile_k=1024):
    """Fused SAGE-conv forward.

    adj: (N, N) dense dst-by-src adjacency (0/1), feat: (N, Fin),
    in_deg: (N, 1) clamped (>=1) in-degrees, wn/ws: (Fin, Fout), b: (1, Fout).
    tile_n / tile_k: row / source-chunk tile sizes (sweep per chip; defaults
    512 / 1024 are good on v5e/v6e/v7x -- try tile_n=1024, tile_k=2048 on big
    graphs if VMEM allows).
    """
    N, Fin = feat.shape
    Fout = wn.shape[1]
    lin_before_mp = Fin > Fout

    # Clamp tiles for small graphs, then pad the node dim so both the row
    # tiling (tile_n) and the contraction tiling (tile_k) divide evenly.
    # Feature dims are padded to 128 lanes: lane-dense loads/stores, full MXU.
    Np0 = _round_up(N, 128)
    tile_n = min(tile_n, Np0)
    tile_k = min(tile_k, Np0)
    assert tile_n % 8 == 0 and tile_k % 128 == 0
    Np = _round_up(N, int(np.lcm(tile_n, tile_k)))
    Fin_p = _round_up(Fin, 128)
    Fout_p = _round_up(Fout, 128)

    # All dtype conversions happen on the host (never on large tiles in-kernel).
    adj_p = _pad2(adj, Np, Np).astype(jnp.bfloat16)        # 0/1 exact in bf16
    feat_p = _pad2(feat, Np, Fin_p)                        # f32 self rows
    deg_p = jnp.pad(in_deg, ((0, Np - N), (0, 0)), constant_values=1.0)
    wn_p = _pad2(wn, Fin_p, Fout_p)
    ws_p = _pad2(ws, Fin_p, Fout_p)
    b_p = _pad2(b, 1, Fout_p)

    if lin_before_mp:
        # Neighbour projection precomputed ONCE (default precision; result is
        # rounded to bf16 for streaming anyway), then streamed as the source.
        src = jnp.dot(feat_p, wn_p,
                      preferred_element_type=jnp.float32).astype(jnp.bfloat16)
        Fs = Fout_p
    else:
        src = feat_p.astype(jnp.bfloat16)                  # (Np, Fin_p) bf16
        Fs = Fin_p

    in_specs = [
        pl.BlockSpec((tile_n, tile_k), lambda i, k: (i, k)),   # A tile (bf16 stream)
        pl.BlockSpec((tile_k, Fs), lambda i, k: (k, 0)),       # src chunk (bf16 stream)
        pl.BlockSpec((tile_n, Fin_p), lambda i, k: (i, 0)),    # self rows (resident over k)
        pl.BlockSpec((tile_n, 1), lambda i, k: (i, 0)),        # in-degrees
    ]
    args = [adj_p, src, feat_p, deg_p]
    if not lin_before_mp:
        in_specs.append(pl.BlockSpec((Fin_p, Fout_p), lambda i, k: (0, 0)))  # Wn
        args.append(wn_p)
    in_specs += [
        pl.BlockSpec((Fin_p, Fout_p), lambda i, k: (0, 0)),    # Ws
        pl.BlockSpec((1, Fout_p), lambda i, k: (0, 0)),        # fc_self bias
    ]
    args += [ws_p, b_p]

    n_row_tiles = Np // tile_n
    flops = 2 * Np * Np * Fs + 2 * Np * Fin_p * Fout_p
    if not lin_before_mp:
        flops += 2 * Np * Fin_p * Fout_p
    bytes_accessed = (
        Np * Np * 2                       # bf16 adjacency
        + Np * Fs * 2 * n_row_tiles       # bf16 source stream re-read per row tile
        + Np * Fin_p * 4                  # f32 self rows
        + Np * Fout_p * 4                 # f32 output
        + 2 * Fin_p * Fout_p * 4)         # weights

    kernel = functools.partial(sage_kernel, lin_before_mp=lin_before_mp)

    out_p = pl.pallas_call(
        kernel,
        out_shape=jax.ShapeDtypeStruct((Np, Fout_p), feat.dtype),
        grid=(Np // tile_n, Np // tile_k),
        in_specs=in_specs,
        out_specs=pl.BlockSpec((tile_n, Fout_p), lambda i, k: (i, 0)),
        scratch_shapes=[pltpu.VMEM((tile_n, Fs), jnp.float32)],
        compiler_params=pltpu.CompilerParams(
            dimension_semantics=("parallel", "arbitrary"),
            vmem_limit_bytes=_vmem_limit_bytes()),
        cost_estimate=pl.CostEstimate(flops=flops, transcendentals=0,
                                      bytes_accessed=bytes_accessed),
    )(*args)

    return out_p[:N, :Fout]


if __name__ == "__main__":
    # Small synthetic graph; both branches of lin_before_mp are exercised.
    N = 1024
    TILE_N, TILE_K = 512, 1024

    key = jax.random.PRNGKey(0)
    k_adj, k_a, k_b2 = jax.random.split(key, 3)

    # Dense random adjacency; A[dst, src] = 1 if edge src -> dst.
    adj = (jax.random.uniform(k_adj, (N, N)) < 0.05).astype(jnp.float32)
    # in_degrees clamped to min 1 (as in the module's set_graph_data).
    in_deg = jnp.clip(jnp.sum(adj, axis=1, keepdims=True), 1.0, None)

    def make_params(k, fin, fout):
        k_feat, k_wn, k_ws, k_bias = jax.random.split(k, 4)
        feat = jax.random.normal(k_feat, (N, fin), dtype=jnp.float32)
        # xavier_uniform with gain = calculate_gain('relu') = sqrt(2), stored
        # as [in, out]; fc_self.bias keeps nn.Linear default U(-1/sqrt(in), .).
        gain = np.sqrt(2.0)
        w_bound = gain * np.sqrt(6.0 / (fin + fout))
        wn = jax.random.uniform(k_wn, (fin, fout), minval=-w_bound,
                                maxval=w_bound, dtype=jnp.float32)
        ws = jax.random.uniform(k_ws, (fin, fout), minval=-w_bound,
                                maxval=w_bound, dtype=jnp.float32)
        b_bound = 1.0 / np.sqrt(fin)
        b = jax.random.uniform(k_bias, (1, fout), minval=-b_bound,
                               maxval=b_bound, dtype=jnp.float32)
        return feat, wn, ws, b

    def reference(feat, wn, ws, b):
        A = np.asarray(adj, dtype=np.float64)
        X = np.asarray(feat, dtype=np.float64)
        D = np.asarray(in_deg, dtype=np.float64)
        Wn = np.asarray(wn, dtype=np.float64)
        Ws = np.asarray(ws, dtype=np.float64)
        B = np.asarray(b, dtype=np.float64)
        fin, fout = Wn.shape
        if fin > fout:
            h_neigh = (A @ (X @ Wn)) / D
        else:
            h_neigh = ((A @ X) / D) @ Wn
        return X @ Ws + B + h_neigh

    # (Fin=256, Fout=128) -> lin_before_mp branch;
    # (Fin=128, Fout=256) -> aggregate-then-linear branch.
    # Tolerance reflects bf16 streaming of the source features (A is exact in
    # bf16; all accumulation is f32); observed error is ~1e-3 relative.
    for fin, fout, kk in [(256, 128, k_a), (128, 256, k_b2)]:
        feat, wn, ws, b = make_params(kk, fin, fout)
        out = sage_forward(adj, feat, in_deg, wn, ws, b,
                           tile_n=TILE_N, tile_k=TILE_K)
        out = jax.block_until_ready(out)
        ref = reference(feat, wn, ws, b)
        np.testing.assert_allclose(np.asarray(out, dtype=np.float64), ref,
                                   rtol=2e-2, atol=2e-2)

    print("KERNEL_OK")
</pallas_src>

<mosaic_0001>
module attributes {stable_mosaic.version = 11 : i64} {
  func.func @sage_kernel(%arg0: i32, %arg1: i32, %arg2: memref<512x1024xbf16, #tpu.memory_space<vmem>>, %arg3: memref<1024x128xbf16, #tpu.memory_space<vmem>>, %arg4: memref<512x256xf32, #tpu.memory_space<vmem>>, %arg5: memref<512x1xf32, #tpu.memory_space<vmem>>, %arg6: memref<256x128xf32, #tpu.memory_space<vmem>>, %arg7: memref<1x128xf32, #tpu.memory_space<vmem>>, %arg8: memref<512x128xf32, #tpu.memory_space<vmem>>, %arg9: memref<512x128xf32, #tpu.memory_space<vmem>>) attributes {dimension_semantics = [#tpu.dimension_semantics<parallel>, #tpu.dimension_semantics<arbitrary>], iteration_bounds = array<i64: 2, 1>, scalar_prefetch = 0 : i64, scratch_operands = 1 : i64, tpu.core_type = #tpu.core_type<tc>, window_params = [{transform_indices = @transform_0, window_bounds = array<i64: 512, 1024>}, {transform_indices = @transform_1, window_bounds = array<i64: 1024, 128>}, {transform_indices = @transform_2, window_bounds = array<i64: 512, 256>}, {transform_indices = @transform_3, window_bounds = array<i64: 512, 1>}, {pipeline_mode = #tpu.pipeline_mode<synchronous>, transform_indices = @transform_4, window_bounds = array<i64: 256, 128>}, {pipeline_mode = #tpu.pipeline_mode<synchronous>, transform_indices = @transform_5, window_bounds = array<i64: 1, 128>}, {transform_indices = @transform_6, window_bounds = array<i64: 512, 128>}]} {
    %c0_i32 = arith.constant 0 : i32
    %0 = arith.cmpi eq, %arg1, %c0_i32 : i32
    %1 = arith.extui %0 : i1 to i32
    %c0_i32_0 = arith.constant 0 : i32
    %2 = arith.cmpi ne, %1, %c0_i32_0 : i32
    scf.if %2 {
      %cst_10 = arith.constant 0.000000e+00 : f32
      %12 = vector.broadcast %cst_10 : f32 to vector<512x128xf32>
      %c0_11 = arith.constant 0 : index
      %c0_12 = arith.constant 0 : index
      %13 = vector.load %arg9[%c0_11, %c0_12] : memref<512x128xf32, #tpu.memory_space<vmem>>, vector<512x128xf32>
      tpu.vector_store %arg9[%c0_11, %c0_12], %12 {strides = array<i32>} : memref<512x128xf32, #tpu.memory_space<vmem>>, vector<512x128xf32>,
    } else {
    }
    %c0 = arith.constant 0 : index
    %c0_1 = arith.constant 0 : index
    %3 = vector.load %arg9[%c0, %c0_1] : memref<512x128xf32, #tpu.memory_space<vmem>>, vector<512x128xf32>
    %c0_2 = arith.constant 0 : index
    %c0_3 = arith.constant 0 : index
    %4 = vector.load %arg2[%c0_2, %c0_3] : memref<512x1024xbf16, #tpu.memory_space<vmem>>, vector<512x1024xbf16>
    %c0_4 = arith.constant 0 : index
    %c0_5 = arith.constant 0 : index
    %5 = vector.load %arg3[%c0_4, %c0_5] : memref<1024x128xbf16, #tpu.memory_space<vmem>>, vector<1024x128xbf16>
    %cst = arith.constant dense<0.000000e+00> : vector<512x128xf32>
    %6 = tpu.matmul %4, %5, %cst {dimension_numbers = #tpu.dot_dimension_numbers<[1], [0], [0], [1], [0, 0, 1, 1], [], []>} : vector<512x1024xbf16>, vector<1024x128xbf16>, vector<512x128xf32> -> vector<512x128xf32>
    %7 = arith.addf %3, %6 : vector<512x128xf32>
    %c0_6 = arith.constant 0 : index
    %c0_7 = arith.constant 0 : index
    %8 = vector.load %arg9[%c0_6, %c0_7] : memref<512x128xf32, #tpu.memory_space<vmem>>, vector<512x128xf32>
    tpu.vector_store %arg9[%c0_6, %c0_7], %7 {strides = array<i32>} : memref<512x128xf32, #tpu.memory_space<vmem>>, vector<512x128xf32>,
    %c0_i32_8 = arith.constant 0 : i32
    %9 = arith.cmpi eq, %arg1, %c0_i32_8 : i32
    %10 = arith.extui %9 : i1 to i32
    %c0_i32_9 = arith.constant 0 : i32
    %11 = arith.cmpi ne, %10, %c0_i32_9 : i32
    scf.if %11 {
      %c0_10 = arith.constant 0 : index
      %c0_11 = arith.constant 0 : index
      %12 = vector.load %arg5[%c0_10, %c0_11] : memref<512x1xf32, #tpu.memory_space<vmem>>, vector<512x1xf32>
      %13 = tpu.reciprocal %12 : vector<512x1xf32> -> vector<512x1xf32>
      %c0_12 = arith.constant 0 : index
      %c0_13 = arith.constant 0 : index
      %14 = vector.load %arg9[%c0_12, %c0_13] : memref<512x128xf32, #tpu.memory_space<vmem>>, vector<512x128xf32>
      %15 = vector.broadcast %13 : vector<512x1xf32> to vector<512x128xf32>
      %16 = arith.mulf %14, %15 : vector<512x128xf32>
      %c0_14 = arith.constant 0 : index
      %c0_15 = arith.constant 0 : index
      %17 = vector.load %arg4[%c0_14, %c0_15] : memref<512x256xf32, #tpu.memory_space<vmem>>, vector<512x256xf32>
      %c0_16 = arith.constant 0 : index
      %c0_17 = arith.constant 0 : index
      %18 = vector.load %arg6[%c0_16, %c0_17] : memref<256x128xf32, #tpu.memory_space<vmem>>, vector<256x128xf32>
      %cst_18 = arith.constant dense<0.000000e+00> : vector<512x128xf32>
      %19 = tpu.matmul %17, %18, %cst_18 {dimension_numbers = #tpu.dot_dimension_numbers<[1], [0], [0], [1], [0, 0, 1, 1], [], []>} : vector<512x256xf32>, vector<256x128xf32>, vector<512x128xf32> -> vector<512x128xf32>
      %c0_19 = arith.constant 0 : index
      %c0_20 = arith.constant 0 : index
      %20 = vector.load %arg7[%c0_19, %c0_20] : memref<1x128xf32, #tpu.memory_space<vmem>>, vector<1x128xf32>
      %21 = vector.broadcast %20 : vector<1x128xf32> to vector<512x128xf32>
      %22 = arith.addf %19, %21 : vector<512x128xf32>
      %23 = arith.addf %22, %16 : vector<512x128xf32>
      %c0_21 = arith.constant 0 : index
      %c0_22 = arith.constant 0 : index
      %24 = vector.load %arg8[%c0_21, %c0_22] : memref<512x128xf32, #tpu.memory_space<vmem>>, vector<512x128xf32>
      tpu.vector_store %arg8[%c0_21, %c0_22], %23 {strides = array<i32>} : memref<512x128xf32, #tpu.memory_space<vmem>>, vector<512x128xf32>,
    } else {
    }
    return
  }
  func.func @transform_0(%arg0: i32, %arg1: i32) -> (i32, i32) {
    %c0_i32 = arith.constant 0 : i32
    return %arg0, %arg1 : i32, i32
  }
  func.func @transform_1(%arg0: i32, %arg1: i32) -> (i32, i32) {
    %c0_i32 = arith.constant 0 : i32
    %c0_i32_0 = arith.constant 0 : i32
    return %arg1, %c0_i32 : i32, i32
  }
  func.func @transform_2(%arg0: i32, %arg1: i32) -> (i32, i32) {
    %c0_i32 = arith.constant 0 : i32
    %c0_i32_0 = arith.constant 0 : i32
    return %arg0, %c0_i32 : i32, i32
  }
  func.func @transform_3(%arg0: i32, %arg1: i32) -> (i32, i32) {
    %c0_i32 = arith.constant 0 : i32
    %c0_i32_0 = arith.constant 0 : i32
    return %arg0, %c0_i32 : i32, i32
  }
  func.func @transform_4(%arg0: i32, %arg1: i32) -> (i32, i32) {
    %c0_i32 = arith.constant 0 : i32
    %c0_i32_0 = arith.constant 0 : i32
    %c0_i32_1 = arith.constant 0 : i32
    return %c0_i32, %c0_i32_0 : i32, i32
  }
  func.func @transform_5(%arg0: i32, %arg1: i32) -> (i32, i32) {
    %c0_i32 = arith.constant 0 : i32
    %c0_i32_0 = arith.constant 0 : i32
    %c0_i32_1 = arith.constant 0 : i32
    return %c0_i32, %c0_i32_0 : i32, i32
  }
  func.func @transform_6(%arg0: i32, %arg1: i32) -> (i32, i32) {
    %c0_i32 = arith.constant 0 : i32
    %c0_i32_0 = arith.constant 0 : i32
    return %arg0, %c0_i32 : i32, i32
  }
}

</mosaic_0001>

<llo_original>
// kernel: tpu_custom_call.1
$region0: #{tpu_custom_call.1}
  #allocation0 [shape = 'u32[]', space=smem, size = 0x4, offset = 0x4, fixed_abs, tag = 'smem constant byte address 0x4 - core index']
  #allocation1 [shape = 'u32[72,128]{1,0:T(1,128)}', space=vmem, size = 0x9000, scoped, tag = 'internal scratch']
  #allocation2 [shape = 'f32[512,128]{1,0:T(8,128)}', space=vmem, size = 0x40000, scoped, tag = 'scratch operand']
  %s0 = inlined_call_operand.hbm [shape: bf16[1024,1024], index: 0, kind: input, shape index: {}]
  %s1 = inlined_call_operand.hbm [shape: bf16[1024,128], index: 1, kind: input, shape index: {}]
  %s2 = inlined_call_operand.hbm [shape: f32[1024,256], index: 2, kind: input, shape index: {}]
  %s3 = inlined_call_operand.vmem [shape: f32[1024,1], index: 3, kind: input, shape index: {}]
  %s4 = inlined_call_operand.hbm [shape: f32[256,128], index: 4, kind: input, shape index: {}]
  %s5 = inlined_call_operand.hbm [shape: f32[1,128], index: 5, kind: input, shape index: {}]
  %s6 = inlined_call_operand.hbm [shape: f32[1024,128], index: 6, kind: output, shape index: {}]
  %s7 = sld [smem:[#allocation0]]
  $region85: #{tpu_custom_call.1} parent=0
    _
  %s9 = ssub.s32 1, %s7
  %s10 = scalar_select 0, %s9, %s7
  $region1: #{tpu_custom_call.1} parent=0
    #allocation3 [shape = 'u8[2097152]{0}', space=vmem, size = 0x200000, scoped, tag = 'input window, operand 0']
    #allocation4 [shape = 's32[2]{0}', space=sflag, size = 0x8, scoped, tag = 'scoped memory for tpu_custom_call.1']
    #allocation5 [shape = 's32[2]{0}', space=sflag, size = 0x8, scoped, tag = 'scoped memory for tpu_custom_call.1']
    #allocation6 [shape = 'u8[262144]{0}', space=vmem, size = 0x40000, scoped, tag = 'input window, operand 1, single buffered']
    #allocation7 [shape = 's32[1]{0}', space=sflag, size = 0x4, scoped, tag = 'scoped memory for tpu_custom_call.1']
    #allocation8 [shape = 'u8[1048576]{0}', space=vmem, size = 0x100000, scoped, tag = 'input window, operand 2']
    #allocation9 [shape = 'u8[131072]{0}', space=vmem, size = 0x20000, scoped, tag = 'input window, operand 4, single buffered']
    #allocation10 [shape = 'u8[512]{0}', space=vmem, size = 0x400, scoped, tag = 'input window, operand 5, single buffered']
    #allocation11 [shape = 's32[1]{0}', space=sflag, size = 0x4, scoped, tag = 'scoped memory for tpu_custom_call.1']
    #allocation12 [shape = 'u8[524288]{0}', space=vmem, size = 0x80000, scoped, tag = 'output window, operand 0']
    %11 = vsyncpa [#allocation4], 0
    %s12 = scalar_lea.sflag [#allocation4], 1
    %13 = vsyncpa %s12, 0
    %14 = vsyncpa [#allocation7], 0
    %15 = vsyncpa [#allocation11], 0
    %16 = vsyncpa [#allocation5], 0
    %s17 = scalar_lea.sflag [#allocation5], 1
    %18 = vsyncpa %s17, 0
    loop: start=0, step=1, limit=4
    $region2: #{tpu_custom_call.1} parent=1 // loop_pre_header
      _
    $region3: #{tpu_custom_call.1} parent=1 // loop_header
      %s20 = sphi 0, %s24
      %p21 = scmp.ge.s32.totalorder %s20, 4
      %s27 = sphi 0, %s39
      %s28 = sphi 0, %s35
      %s29 = sphi 0, %s27
      %s30 = sphi 0, %s28
      %s31 = sphi 0, %s29
      %s32 = sphi 0, %s30
      %s44 = sphi 0, %s46
      %s47 = sphi 0, %s44
      %s48 = sphi 0, %s47
      %s64 = sphi 0, %s48
      %s70 = sphi 0, %s72
      %s73 = sphi 0, %s70
      %s74 = sphi 0, %s73
      %s90 = sphi 0, %s74
      %s96 = sphi 0, %s98
      %s99 = sphi 0, %s96
      %s100 = sphi 0, %s99
      %s116 = sphi 0, %s100
      %s122 = sphi 0, %s124
      %s125 = sphi 0, %s122
      %s126 = sphi 0, %s125
      %s142 = sphi 0, %s126
      %s146 = sphi 0, %s146
      %s148 = sphi 0, %s146
      %s149 = sphi 0, %s148
      %s163 = sphi 0, %s149
      %s167 = sphi 0, %s167
      %s169 = sphi 0, %s167
      %s170 = sphi 0, %s169
      %s184 = sphi 0, %s170
      %s190 = sphi 0, %s192
      %s193 = sphi 0, %s190
      %s194 = sphi 0, %s193
      %s210 = sphi 0, %s194
    $region4: #{tpu_custom_call.1} parent=1 // loop_header_branch
      %23 = sbr.rel (%p21) target = $region8
    $region5: #{tpu_custom_call.1} parent=1 // loop_body
      %s25 = ssub.s32 %s20, 1
      %s26 = ssub.s32 %s20, 2
      %s33 = sadd.s32 1, %s28
      %p34 = scmp.ge.s32.totalorder %s33, 1
      %s35 = scalar_select %p34, 0, %s33
      %s36 = sadd.s32 1, %s27
      %s37 = scalar_select %p34, %s36, %s27
      %p38 = scmp.ge.s32.totalorder %s37, 2
      %s39 = scalar_select %p38, 0, %s37
      %s40 = ssub.s32 %s27, %s39
      %s41 = ssub.s32 %s28, %s35
      %s42 = sor.u32 %s40, %s41
      %p43 = scmp.eq.s32.totalorder %s42, 0
      %s45 = sadd.s32 %s44, 1
      %s46 = scalar_select %p43, %s44, %s45
      %p49 = pneg %p43
      %p50 = scmp.eq.s32.totalorder %s20, 1
      %p51 = por %p49, %p50
      %p52 = scmp.ne.s32.totalorder %s44, %s47
      %p53 = scmp.eq.s32.totalorder %s20, 0
      %p54 = por %p52, %p53
      %p55 = scmp.ne.s32.totalorder %s44, %s47
      %p56 = scmp.eq.s32.totalorder %s25, 1
      %p57 = por %p55, %p56
      %p58 = scmp.ne.s32.totalorder %s47, %s48
      %p59 = scmp.eq.s32.totalorder %s25, 0
      %p60 = por %p58, %p59
      %p61 = scmp.ne.s32.totalorder %s47, %s48
      %p62 = scmp.eq.s32.totalorder %s26, 1
      %p63 = por %p61, %p62
      %p65 = scmp.ne.s32.totalorder %s48, %s64
      %p66 = scmp.eq.s32.totalorder %s26, 0
      %p67 = por %p65, %p66
      %s68 = ssub.s32 %s28, %s35
      %p69 = scmp.eq.s32.totalorder %s68, 0
      %s71 = sadd.s32 %s70, 1
      %s72 = scalar_select %p69, %s70, %s71
      %p75 = pneg %p69
      %p76 = scmp.eq.s32.totalorder %s20, 1
      %p77 = por %p75, %p76
      %p78 = scmp.ne.s32.totalorder %s70, %s73
      %p79 = scmp.eq.s32.totalorder %s20, 0
      %p80 = por %p78, %p79
      %p81 = scmp.ne.s32.totalorder %s70, %s73
      %p82 = scmp.eq.s32.totalorder %s25, 1
      %p83 = por %p81, %p82
      %p84 = scmp.ne.s32.totalorder %s73, %s74
      %p85 = scmp.eq.s32.totalorder %s25, 0
      %p86 = por %p84, %p85
      %p87 = scmp.ne.s32.totalorder %s73, %s74
      %p88 = scmp.eq.s32.totalorder %s26, 1
      %p89 = por %p87, %p88
      %p91 = scmp.ne.s32.totalorder %s74, %s90
      %p92 = scmp.eq.s32.totalorder %s26, 0
      %p93 = por %p91, %p92
      %s94 = ssub.s32 %s27, %s39
      %p95 = scmp.eq.s32.totalorder %s94, 0
      %s97 = sadd.s32 %s96, 1
      %s98 = scalar_select %p95, %s96, %s97
      %p101 = pneg %p95
      %p102 = scmp.eq.s32.totalorder %s20, 1
      %p103 = por %p101, %p102
      %p104 = scmp.ne.s32.totalorder %s96, %s99
      %p105 = scmp.eq.s32.totalorder %s20, 0
      %p106 = por %p104, %p105
      %p107 = scmp.ne.s32.totalorder %s96, %s99
      %p108 = scmp.eq.s32.totalorder %s25, 1
      %p109 = por %p107, %p108
      %p110 = scmp.ne.s32.totalorder %s99, %s100
      %p111 = scmp.eq.s32.totalorder %s25, 0
      %p112 = por %p110, %p111
      %p113 = scmp.ne.s32.totalorder %s99, %s100
      %p114 = scmp.eq.s32.totalorder %s26, 1
      %p115 = por %p113, %p114
      %p117 = scmp.ne.s32.totalorder %s100, %s116
      %p118 = scmp.eq.s32.totalorder %s26, 0
      %p119 = por %p117, %p118
      %s120 = ssub.s32 %s27, %s39
      %p121 = scmp.eq.s32.totalorder %s120, 0
      %s123 = sadd.s32 %s122, 1
      %s124 = scalar_select %p121, %s122, %s123
      %p127 = pneg %p121
      %p128 = scmp.eq.s32.totalorder %s20, 1
      %p129 = por %p127, %p128
      %p130 = scmp.ne.s32.totalorder %s122, %s125
      %p131 = scmp.eq.s32.totalorder %s20, 0
      %p132 = por %p130, %p131
      %p133 = scmp.ne.s32.totalorder %s122, %s125
      %p134 = scmp.eq.s32.totalorder %s25, 1
      %p135 = por %p133, %p134
      %p136 = scmp.ne.s32.totalorder %s125, %s126
      %p137 = scmp.eq.s32.totalorder %s25, 0
      %p138 = por %p136, %p137
      %p139 = scmp.ne.s32.totalorder %s125, %s126
      %p140 = scmp.eq.s32.totalorder %s26, 1
      %p141 = por %p139, %p140
      %p143 = scmp.ne.s32.totalorder %s126, %s142
      %p144 = scmp.eq.s32.totalorder %s26, 0
      %p145 = por %p143, %p144
      %s147 = sadd.s32 %s146, 1
      %p150 = scmp.eq.s32.totalorder %s20, 1
      %p151 = scmp.ne.s32.totalorder %s146, %s148
      %p152 = scmp.eq.s32.totalorder %s20, 0
      %p153 = por %p151, %p152
      %p154 = scmp.ne.s32.totalorder %s146, %s148
      %p155 = scmp.eq.s32.totalorder %s25, 1
      %p156 = por %p154, %p155
      %p157 = scmp.ne.s32.totalorder %s148, %s149
      %p158 = scmp.eq.s32.totalorder %s25, 0
      %p159 = por %p157, %p158
      %p160 = scmp.ne.s32.totalorder %s148, %s149
      %p161 = scmp.eq.s32.totalorder %s26, 1
      %p162 = por %p160, %p161
      %p164 = scmp.ne.s32.totalorder %s149, %s163
      %p165 = scmp.eq.s32.totalorder %s26, 0
      %p166 = por %p164, %p165
      %s168 = sadd.s32 %s167, 1
      %p171 = scmp.eq.s32.totalorder %s20, 1
      %p172 = scmp.ne.s32.totalorder %s167, %s169
      %p173 = scmp.eq.s32.totalorder %s20, 0
      %p174 = por %p172, %p173
      %p175 = scmp.ne.s32.totalorder %s167, %s169
      %p176 = scmp.eq.s32.totalorder %s25, 1
      %p177 = por %p175, %p176
      %p178 = scmp.ne.s32.totalorder %s169, %s170
      %p179 = scmp.eq.s32.totalorder %s25, 0
      %p180 = por %p178, %p179
      %p181 = scmp.ne.s32.totalorder %s169, %s170
      %p182 = scmp.eq.s32.totalorder %s26, 1
      %p183 = por %p181, %p182
      %p185 = scmp.ne.s32.totalorder %s170, %s184
      %p186 = scmp.eq.s32.totalorder %s26, 0
      %p187 = por %p185, %p186
      %s188 = ssub.s32 %s27, %s39
      %p189 = scmp.eq.s32.totalorder %s188, 0
      %s191 = sadd.s32 %s190, 1
      %s192 = scalar_select %p189, %s190, %s191
      %p195 = pneg %p189
      %p196 = scmp.eq.s32.totalorder %s20, 1
      %p197 = por %p195, %p196
      %p198 = scmp.ne.s32.totalorder %s190, %s193
      %p199 = scmp.eq.s32.totalorder %s20, 0
      %p200 = por %p198, %p199
      %p201 = scmp.ne.s32.totalorder %s190, %s193
      %p202 = scmp.eq.s32.totalorder %s25, 1
      %p203 = por %p201, %p202
      %p204 = scmp.ne.s32.totalorder %s193, %s194
      %p205 = scmp.eq.s32.totalorder %s25, 0
      %p206 = por %p204, %p205
      %p207 = scmp.ne.s32.totalorder %s193, %s194
      %p208 = scmp.eq.s32.totalorder %s26, 1
      %p209 = por %p207, %p208
      %p211 = scmp.ne.s32.totalorder %s194, %s210
      %p212 = scmp.eq.s32.totalorder %s26, 0
      %p213 = por %p211, %p212
      %p214 = scmp.le.s32.totalorder 1, %s20
      %p215 = scmp.lt.s32.totalorder %s20, 3
      %p216 = pnand %p214, %p215
      %p217 = pneg %p216
      // Predicated region
      $region9: #{tpu_custom_call.1} parent=5 // pred_check
        _
      $region10: #{tpu_custom_call.1} parent=5 // pred_check_branch
        %219 = sbr.rel (%p216) target = $region12
      $region11: #{tpu_custom_call.1} parent=5 // pred_region
        %s220 = ssub.s32 %s20, 1
        // Predicated region
        $region13: #{tpu_custom_call.1} parent=11 // pred_check
          %p221 = pneg %p86
        $region14: #{tpu_custom_call.1} parent=11 // pred_check_branch
          %223 = sbr.rel (%p221) target = $region16
        $region15: #{tpu_custom_call.1} parent=11 // pred_region
          %s224 = smul.u32 128, %s30
          %226 = vsyncadd [#allocation7], 0
          %s227 = smul.addr %s224, 4
          %s228 = scalar_lea.hbm %s1, %s227
          %s229 = sshll.u32 %s228, 4
          %s230 = int_to_ptr.hbm [resolvable:$true] %s229
          %s231 = sshll.u32 [#allocation6], 4
          %s232 = int_to_ptr.vmem [resolvable:$true] %s231
          %237 = dma.hbm_to_vmem [thread:$0]  %s230, 8192, %s232, [#allocation7], 64, 64, 4
        $region16: #{tpu_custom_call.1} parent=11 // pred_fallthru
          _
        // Predicated region
        $region17: #{tpu_custom_call.1} parent=11 // pred_check
          %p238 = pneg %p159
        $region18: #{tpu_custom_call.1} parent=11 // pred_check_branch
          %240 = sbr.rel (%p238) target = $region20
        $region19: #{tpu_custom_call.1} parent=11 // pred_region
          %242 = vsyncadd [#allocation7], 0
          %s243 = sshll.u32 %s4, 4
          %s244 = int_to_ptr.hbm [resolvable:$true] %s243
          %s245 = sshll.u32 [#allocation9], 4
          %s246 = int_to_ptr.vmem [resolvable:$true] %s245
          %251 = dma.hbm_to_vmem [thread:$0]  %s244, 4096, %s246, [#allocation7], 128, 128, 8
        $region20: #{tpu_custom_call.1} parent=11 // pred_fallthru
          _
        // Predicated region
        $region21: #{tpu_custom_call.1} parent=11 // pred_check
          %p252 = pneg %p180
        $region22: #{tpu_custom_call.1} parent=11 // pred_check_branch
          %254 = sbr.rel (%p252) target = $region24
        $region23: #{tpu_custom_call.1} parent=11 // pred_region
          %256 = vsyncadd [#allocation11], 0
          %s258 = sshll.u32 %s5, 4
          %s259 = int_to_ptr.hbm [resolvable:$true] %s258
          %s260 = sshll.u32 [#allocation10], 4
          %s261 = int_to_ptr.vmem [resolvable:$true] %s260
          %263 = dma.hbm_to_vmem [thread:$0]  %s259, 16, %s261, [#allocation11]
        $region24: #{tpu_custom_call.1} parent=11 // pred_fallthru
          _
      $region12: #{tpu_custom_call.1} parent=5 // pred_fallthru
        _
      %p264 = scmp.lt.s32.totalorder %s20, 2
      // Predicated region
      $region25: #{tpu_custom_call.1} parent=5 // pred_check
        %p265 = pneg %p264
      $region26: #{tpu_custom_call.1} parent=5 // pred_check_branch
        %267 = sbr.rel (%p265) target = $region28
      $region27: #{tpu_custom_call.1} parent=5 // pred_region
        // Predicated region
        $region29: #{tpu_custom_call.1} parent=27 // pred_check
          %p268 = pneg %p54
        $region30: #{tpu_custom_call.1} parent=27 // pred_check_branch
          %270 = sbr.rel (%p268) target = $region32
        $region31: #{tpu_custom_call.1} parent=27 // pred_region
          %s271 = sand.u32 %s20, 1
          %s272 = scalar_lea.sflag [#allocation4], %s271
          %s273 = sand.u32 %s44, 1
          %s274 = smul.addr %s273, 2048
          %s275 = scalar_lea.vmem [#allocation3], %s274
          %s276 = smul.u32 64, %s27
          %s277 = smul.u32 8, %s28
          %279 = vsyncadd %s272, 0
          %s280 = smul.addr %s276, 8
          %s281 = sadd.s32 %s277, %s280
          %s282 = smul.addr %s281, 4
          %s283 = scalar_lea.hbm %s0, %s282
          %s284 = sshll.u32 %s283, 4
          %s285 = int_to_ptr.hbm [resolvable:$true] %s284
          %s286 = sshll.u32 %s275, 4
          %s287 = int_to_ptr.vmem [resolvable:$true] %s286
          %292 = dma.hbm_to_vmem [thread:$0]  %s285, 32768, %s287, %s272, 512, 512, 32
        $region32: #{tpu_custom_call.1} parent=27 // pred_fallthru
          _
        // Predicated region
        $region33: #{tpu_custom_call.1} parent=27 // pred_check
          %p293 = pneg %p106
        $region34: #{tpu_custom_call.1} parent=27 // pred_check_branch
          %295 = sbr.rel (%p293) target = $region36
        $region35: #{tpu_custom_call.1} parent=27 // pred_region
          %s296 = sand.u32 %s20, 1
          %s297 = scalar_lea.sflag [#allocation4], %s296
          %s298 = sand.u32 %s96, 1
          %s299 = smul.addr %s298, 1024
          %s300 = scalar_lea.vmem [#allocation8], %s299
          %s301 = smul.u32 64, %s27
          %303 = vsyncadd %s297, 0
          %s304 = smul.addr %s301, 2
          %s305 = smul.addr %s304, 8
          %s306 = scalar_lea.hbm %s2, %s305
          %s307 = sshll.u32 %s306, 4
          %s308 = int_to_ptr.hbm [resolvable:$true] %s307
          %s309 = sshll.u32 %s300, 4
          %s310 = int_to_ptr.vmem [resolvable:$true] %s309
          %315 = dma.hbm_to_vmem [thread:$0]  %s308, 16384, %s310, %s297, 256, 256, 16
        $region36: #{tpu_custom_call.1} parent=27 // pred_fallthru
          _
        // Predicated region
        $region37: #{tpu_custom_call.1} parent=27 // pred_check
          %p316 = pneg %p132
        $region38: #{tpu_custom_call.1} parent=27 // pred_check_branch
          %318 = sbr.rel (%p316) target = $region40
        $region39: #{tpu_custom_call.1} parent=27 // pred_region
          %s319 = smul.u32 64, %s27
          %p320 = scmp.lt.s32.totalorder %s319, 127
          %s321 = scalar_select %p320, %s319, 127
          %s322 = smul.addr %s321, 8
          %s323 = scalar_lea.vmem %s3, %s322
          %s324 = smul.u32 64, %s27
        $region40: #{tpu_custom_call.1} parent=27 // pred_fallthru
          _
      $region28: #{tpu_custom_call.1} parent=5 // pred_fallthru
        _
      %p325 = scmp.le.s32.totalorder 1, %s20
      %p326 = scmp.lt.s32.totalorder %s20, 3
      %p327 = pnand %p325, %p326
      %p328 = pneg %p327
      // Predicated region
      $region41: #{tpu_custom_call.1} parent=5 // pred_check
        _
      $region42: #{tpu_custom_call.1} parent=5 // pred_check_branch
        %330 = sbr.rel (%p327) target = $region44
      $region43: #{tpu_custom_call.1} parent=5 // pred_region
        %s331 = ssub.s32 %s20, 1
        %s332 = sand.u32 %s25, 1
        %s333 = scalar_lea.sflag [#allocation4], %s332
        %s334 = sand.u32 %s47, 1
        %s335 = smul.addr %s334, 2048
        %s336 = scalar_lea.vmem [#allocation3], %s335
        // Predicated region
        $region45: #{tpu_custom_call.1} parent=43 // pred_check
          %p337 = pneg %p60
        $region46: #{tpu_custom_call.1} parent=43 // pred_check_branch
          %339 = sbr.rel (%p337) target = $region48
        $region47: #{tpu_custom_call.1} parent=43 // pred_region
          %341 = dma.done %s333, 32768
        $region48: #{tpu_custom_call.1} parent=43 // pred_fallthru
          _
        // Predicated region
        $region49: #{tpu_custom_call.1} parent=43 // pred_check
          %p342 = pneg %p86
        $region50: #{tpu_custom_call.1} parent=43 // pred_check_branch
          %344 = sbr.rel (%p342) target = $region52
        $region51: #{tpu_custom_call.1} parent=43 // pred_region
          %346 = dma.done [#allocation7], 8192
        $region52: #{tpu_custom_call.1} parent=43 // pred_fallthru
          _
        %s347 = sand.u32 %s25, 1
        %s348 = scalar_lea.sflag [#allocation4], %s347
        %s349 = sand.u32 %s99, 1
        %s350 = smul.addr %s349, 1024
        %s351 = scalar_lea.vmem [#allocation8], %s350
        // Predicated region
        $region53: #{tpu_custom_call.1} parent=43 // pred_check
          %p352 = pneg %p112
        $region54: #{tpu_custom_call.1} parent=43 // pred_check_branch
          %354 = sbr.rel (%p352) target = $region56
        $region55: #{tpu_custom_call.1} parent=43 // pred_region
          %356 = dma.done %s348, 16384
        $region56: #{tpu_custom_call.1} parent=43 // pred_fallthru
          _
        // Predicated region
        $region57: #{tpu_custom_call.1} parent=43 // pred_check
          %p357 = pneg %p159
        $region58: #{tpu_custom_call.1} parent=43 // pred_check_branch
          %359 = sbr.rel (%p357) target = $region60
        $region59: #{tpu_custom_call.1} parent=43 // pred_region
          %361 = dma.done [#allocation7], 4096
        $region60: #{tpu_custom_call.1} parent=43 // pred_fallthru
          _
        // Predicated region
        $region61: #{tpu_custom_call.1} parent=43 // pred_check
          %p362 = pneg %p180
        $region62: #{tpu_custom_call.1} parent=43 // pred_check_branch
          %364 = sbr.rel (%p362) target = $region64
        $region63: #{tpu_custom_call.1} parent=43 // pred_region
          %366 = dma.done [#allocation11], 16
        $region64: #{tpu_custom_call.1} parent=43 // pred_fallthru
          _
        %s367 = sand.u32 %s25, 1
        %s368 = scalar_lea.sflag [#allocation4], %s367
        %s369 = sand.u32 %s47, 1
        %s370 = smul.addr %s369, 2048
        %s371 = scalar_lea.vmem [#allocation3], %s370
        %p372 = pneg %p60
        %p373 = pneg %p57
        %p374 = pneg %p86
        %p375 = pneg %p83
        %s376 = sand.u32 %s25, 1
        %s377 = scalar_lea.sflag [#allocation4], %s376
        %s378 = sand.u32 %s99, 1
        %s379 = smul.addr %s378, 1024
        %s380 = scalar_lea.vmem [#allocation8], %s379
        %p381 = pneg %p112
        %p382 = pneg %p109
        %s383 = smul.u32 64, %s29
        %p384 = scmp.lt.s32.totalorder %s383, 127
        %s385 = scalar_select %p384, %s383, 127
        %s386 = smul.addr %s385, 8
        %s387 = scalar_lea.vmem %s3, %s386
        %p388 = pneg %p138
        %p389 = pneg %p135
        %p390 = pneg %p159
        %p391 = pneg %p156
        %p392 = pneg %p180
        %p393 = pneg %p177
        %p394 = pneg %p206
        %p395 = pneg %p203
        %s396 = sand.u32 %s193, 1
        %s397 = scalar_lea.sflag [#allocation5], %s396
        %s398 = sand.u32 %s193, 1
        %s399 = smul.addr %s398, 512
        %s400 = scalar_lea.vmem [#allocation12], %s399
        %s401 = smul.u32 64, %s29
        %s402 = smul.u32 8, %s30
        %s403 = smul.u32 128, %s30
        %s404 = smul.u32 64, %s29
        %s405 = smul.u32 64, %s29
        %p406 = scmp.lt.s32.totalorder %s405, 127
        %s407 = scalar_select %p406, %s405, 127
        %s408 = smul.addr %s407, 8
        %s409 = scalar_lea.vmem %s3, %s408
        %s410 = smul.u32 64, %s29
        %s411 = smul.u32 64, %s29
        %p412 = scmp.eq.s32.totalorder %s30, 0
        // Predicated region
        $region65: #{tpu_custom_call.1} parent=43 // pred_check
          %p413 = pneg %p412
        $region66: #{tpu_custom_call.1} parent=43 // pred_check_branch
          %415 = sbr.rel (%p413) target = $region68
        $region67: #{tpu_custom_call.1} parent=43 // pred_region
          %416 = vst [vmem:[#allocation2] sm:$0xff] 0.0
          %417 = vst [vmem:[#allocation2 + $0x8] sm:$0xff] 0.0
          %418 = vst [vmem:[#allocation2 + $0x10] sm:$0xff] 0.0
          %419 = vst [vmem:[#allocation2 + $0x18] sm:$0xff] 0.0
          %420 = vst [vmem:[#allocation2 + $0x20] sm:$0xff] 0.0
          %421 = vst [vmem:[#allocation2 + $0x28] sm:$0xff] 0.0
          %422 = vst [vmem:[#allocation2 + $0x30] sm:$0xff] 0.0
          %423 = vst [vmem:[#allocation2 + $0x38] sm:$0xff] 0.0
          %424 = vst [vmem:[#allocation2 + $0x40] sm:$0xff] 0.0
          %425 = vst [vmem:[#allocation2 + $0x48] sm:$0xff] 0.0
          %426 = vst [vmem:[#allocation2 + $0x50] sm:$0xff] 0.0
          %427 = vst [vmem:[#allocation2 + $0x58] sm:$0xff] 0.0
          %428 = vst [vmem:[#allocation2 + $0x60] sm:$0xff] 0.0
          %429 = vst [vmem:[#allocation2 + $0x68] sm:$0xff] 0.0
          %430 = vst [vmem:[#allocation2 + $0x70] sm:$0xff] 0.0
          %431 = vst [vmem:[#allocation2 + $0x78] sm:$0xff] 0.0
          %432 = vst [vmem:[#allocation2 + $0x80] sm:$0xff] 0.0
          %433 = vst [vmem:[#allocation2 + $0x88] sm:$0xff] 0.0
          %434 = vst [vmem:[#allocation2 + $0x90] sm:$0xff] 0.0
          %435 = vst [vmem:[#allocation2 + $0x98] sm:$0xff] 0.0
          %436 = vst [vmem:[#allocation2 + $0xa0] sm:$0xff] 0.0
          %437 = vst [vmem:[#allocation2 + $0xa8] sm:$0xff] 0.0
          %438 = vst [vmem:[#allocation2 + $0xb0] sm:$0xff] 0.0
          %439 = vst [vmem:[#allocation2 + $0xb8] sm:$0xff] 0.0
          %440 = vst [vmem:[#allocation2 + $0xc0] sm:$0xff] 0.0
          %441 = vst [vmem:[#allocation2 + $0xc8] sm:$0xff] 0.0
          %442 = vst [vmem:[#allocation2 + $0xd0] sm:$0xff] 0.0
          %443 = vst [vmem:[#allocation2 + $0xd8] sm:$0xff] 0.0
          %444 = vst [vmem:[#allocation2 + $0xe0] sm:$0xff] 0.0
          %445 = vst [vmem:[#allocation2 + $0xe8] sm:$0xff] 0.0
          %446 = vst [vmem:[#allocation2 + $0xf0] sm:$0xff] 0.0
          %447 = vst [vmem:[#allocation2 + $0xf8] sm:$0xff] 0.0
          %448 = vst [vmem:[#allocation2 + $0x100] sm:$0xff] 0.0
          %449 = vst [vmem:[#allocation2 + $0x108] sm:$0xff] 0.0
          %450 = vst [vmem:[#allocation2 + $0x110] sm:$0xff] 0.0
          %451 = vst [vmem:[#allocation2 + $0x118] sm:$0xff] 0.0
          %452 = vst [vmem:[#allocation2 + $0x120] sm:$0xff] 0.0
          %453 = vst [vmem:[#allocation2 + $0x128] sm:$0xff] 0.0
          %454 = vst [vmem:[#allocation2 + $0x130] sm:$0xff] 0.0
          %455 = vst [vmem:[#allocation2 + $0x138] sm:$0xff] 0.0
          %456 = vst [vmem:[#allocation2 + $0x140] sm:$0xff] 0.0
          %457 = vst [vmem:[#allocation2 + $0x148] sm:$0xff] 0.0
          %458 = vst [vmem:[#allocation2 + $0x150] sm:$0xff] 0.0
          %459 = vst [vmem:[#allocation2 + $0x158] sm:$0xff] 0.0
          %460 = vst [vmem:[#allocation2 + $0x160] sm:$0xff] 0.0
          %461 = vst [vmem:[#allocation2 + $0x168] sm:$0xff] 0.0
          %462 = vst [vmem:[#allocation2 + $0x170] sm:$0xff] 0.0
          %463 = vst [vmem:[#allocation2 + $0x178] sm:$0xff] 0.0
          %464 = vst [vmem:[#allocation2 + $0x180] sm:$0xff] 0.0
          %465 = vst [vmem:[#allocation2 + $0x188] sm:$0xff] 0.0
          %466 = vst [vmem:[#allocation2 + $0x190] sm:$0xff] 0.0
          %467 = vst [vmem:[#allocation2 + $0x198] sm:$0xff] 0.0
          %468 = vst [vmem:[#allocation2 + $0x1a0] sm:$0xff] 0.0
          %469 = vst [vmem:[#allocation2 + $0x1a8] sm:$0xff] 0.0
          %470 = vst [vmem:[#allocation2 + $0x1b0] sm:$0xff] 0.0
          %471 = vst [vmem:[#allocation2 + $0x1b8] sm:$0xff] 0.0
          %472 = vst [vmem:[#allocation2 + $0x1c0] sm:$0xff] 0.0
          %473 = vst [vmem:[#allocation2 + $0x1c8] sm:$0xff] 0.0
          %474 = vst [vmem:[#allocation2 + $0x1d0] sm:$0xff] 0.0
          %475 = vst [vmem:[#allocation2 + $0x1d8] sm:$0xff] 0.0
          %476 = vst [vmem:[#allocation2 + $0x1e0] sm:$0xff] 0.0
          %477 = vst [vmem:[#allocation2 + $0x1e8] sm:$0xff] 0.0
          %478 = vst [vmem:[#allocation2 + $0x1f0] sm:$0xff] 0.0
          %479 = vst [vmem:[#allocation2 + $0x1f8] sm:$0xff] 0.0
        $region68: #{tpu_custom_call.1} parent=43 // pred_fallthru
          _
        %v480 = vld [vmem:[#allocation2] sm:$0xff]
        %v481 = vld [vmem:[#allocation2 + $0x8] sm:$0xff]
        %v482 = vld [vmem:[#allocation2 + $0x10] sm:$0xff]
        %v483 = vld [vmem:[#allocation2 + $0x18] sm:$0xff]
        %v484 = vld [vmem:[#allocation2 + $0x20] sm:$0xff]
        %v485 = vld [vmem:[#allocation2 + $0x28] sm:$0xff]
        %v486 = vld [vmem:[#allocation2 + $0x30] sm:$0xff]
        %v487 = vld [vmem:[#allocation2 + $0x38] sm:$0xff]
        %v488 = vld [vmem:[#allocation2 + $0x40] sm:$0xff]
        %v489 = vld [vmem:[#allocation2 + $0x48] sm:$0xff]
        %v490 = vld [vmem:[#allocation2 + $0x50] sm:$0xff]
        %v491 = vld [vmem:[#allocation2 + $0x58] sm:$0xff]
        %v492 = vld [vmem:[#allocation2 + $0x60] sm:$0xff]
        %v493 = vld [vmem:[#allocation2 + $0x68] sm:$0xff]
        %v494 = vld [vmem:[#allocation2 + $0x70] sm:$0xff]
        %v495 = vld [vmem:[#allocation2 + $0x78] sm:$0xff]
        %v496 = vld [vmem:[#allocation2 + $0x80] sm:$0xff]
        %v497 = vld [vmem:[#allocation2 + $0x88] sm:$0xff]
        %v498 = vld [vmem:[#allocation2 + $0x90] sm:$0xff]
        %v499 = vld [vmem:[#allocation2 + $0x98] sm:$0xff]
        %v500 = vld [vmem:[#allocation2 + $0xa0] sm:$0xff]
        %v501 = vld [vmem:[#allocation2 + $0xa8] sm:$0xff]
        %v502 = vld [vmem:[#allocation2 + $0xb0] sm:$0xff]
        %v503 = vld [vmem:[#allocation2 + $0xb8] sm:$0xff]
        %v504 = vld [vmem:[#allocation2 + $0xc0] sm:$0xff]
        %v505 = vld [vmem:[#allocation2 + $0xc8] sm:$0xff]
        %v506 = vld [vmem:[#allocation2 + $0xd0] sm:$0xff]
        %v507 = vld [vmem:[#allocation2 + $0xd8] sm:$0xff]
        %v508 = vld [vmem:[#allocation2 + $0xe0] sm:$0xff]
        %v509 = vld [vmem:[#allocation2 + $0xe8] sm:$0xff]
        %v510 = vld [vmem:[#allocation2 + $0xf0] sm:$0xff]
        %v511 = vld [vmem:[#allocation2 + $0xf8] sm:$0xff]
        %v512 = vld [vmem:[#allocation2 + $0x100] sm:$0xff]
        %v513 = vld [vmem:[#allocation2 + $0x108] sm:$0xff]
        %v514 = vld [vmem:[#allocation2 + $0x110] sm:$0xff]
        %v515 = vld [vmem:[#allocation2 + $0x118] sm:$0xff]
        %v516 = vld [vmem:[#allocation2 + $0x120] sm:$0xff]
        %v517 = vld [vmem:[#allocation2 + $0x128] sm:$0xff]
        %v518 = vld [vmem:[#allocation2 + $0x130] sm:$0xff]
        %v519 = vld [vmem:[#allocation2 + $0x138] sm:$0xff]
        %v520 = vld [vmem:[#allocation2 + $0x140] sm:$0xff]
        %v521 = vld [vmem:[#allocation2 + $0x148] sm:$0xff]
        %v522 = vld [vmem:[#allocation2 + $0x150] sm:$0xff]
        %v523 = vld [vmem:[#allocation2 + $0x158] sm:$0xff]
        %v524 = vld [vmem:[#allocation2 + $0x160] sm:$0xff]
        %v525 = vld [vmem:[#allocation2 + $0x168] sm:$0xff]
        %v526 = vld [vmem:[#allocation2 + $0x170] sm:$0xff]
        %v527 = vld [vmem:[#allocation2 + $0x178] sm:$0xff]
        %v528 = vld [vmem:[#allocation2 + $0x180] sm:$0xff]
        %v529 = vld [vmem:[#allocation2 + $0x188] sm:$0xff]
        %v530 = vld [vmem:[#allocation2 + $0x190] sm:$0xff]
        %v531 = vld [vmem:[#allocation2 + $0x198] sm:$0xff]
        %v532 = vld [vmem:[#allocation2 + $0x1a0] sm:$0xff]
        %v533 = vld [vmem:[#allocation2 + $0x1a8] sm:$0xff]
        %v534 = vld [vmem:[#allocation2 + $0x1b0] sm:$0xff]
        %v535 = vld [vmem:[#allocation2 + $0x1b8] sm:$0xff]
        %v536 = vld [vmem:[#allocation2 + $0x1c0] sm:$0xff]
        %v537 = vld [vmem:[#allocation2 + $0x1c8] sm:$0xff]
        %v538 = vld [vmem:[#allocation2 + $0x1d0] sm:$0xff]
        %v539 = vld [vmem:[#allocation2 + $0x1d8] sm:$0xff]
        %v540 = vld [vmem:[#allocation2 + $0x1e0] sm:$0xff]
        %v541 = vld [vmem:[#allocation2 + $0x1e8] sm:$0xff]
        %v542 = vld [vmem:[#allocation2 + $0x1f0] sm:$0xff]
        %v543 = vld [vmem:[#allocation2 + $0x1f8] sm:$0xff]
        %v544 = vld [vmem:[%s336] sm:$0xff]
        %v545 = vld [vmem:[%s336 + $0x8] sm:$0xff]
        %v546 = vld [vmem:[%s336 + $0x10] sm:$0xff]
        %v547 = vld [vmem:[%s336 + $0x18] sm:$0xff]
        %v548 = vld [vmem:[%s336 + $0x20] sm:$0xff]
        %v549 = vld [vmem:[%s336 + $0x28] sm:$0xff]
        %v550 = vld [vmem:[%s336 + $0x30] sm:$0xff]
        %v551 = vld [vmem:[%s336 + $0x38] sm:$0xff]
        %v552 = vld [vmem:[%s336 + $0x40] sm:$0xff]
        %v553 = vld [vmem:[%s336 + $0x48] sm:$0xff]
        %v554 = vld [vmem:[%s336 + $0x50] sm:$0xff]
        %v555 = vld [vmem:[%s336 + $0x58] sm:$0xff]
        %v556 = vld [vmem:[%s336 + $0x60] sm:$0xff]
        %v557 = vld [vmem:[%s336 + $0x68] sm:$0xff]
        %v558 = vld [vmem:[%s336 + $0x70] sm:$0xff]
        %v559 = vld [vmem:[%s336 + $0x78] sm:$0xff]
        %v560 = vld [vmem:[%s336 + $0x80] sm:$0xff]
        %v561 = vld [vmem:[%s336 + $0x88] sm:$0xff]
        %v562 = vld [vmem:[%s336 + $0x90] sm:$0xff]
        %v563 = vld [vmem:[%s336 + $0x98] sm:$0xff]
        %v564 = vld [vmem:[%s336 + $0xa0] sm:$0xff]
        %v565 = vld [vmem:[%s336 + $0xa8] sm:$0xff]
        %v566 = vld [vmem:[%s336 + $0xb0] sm:$0xff]
        %v567 = vld [vmem:[%s336 + $0xb8] sm:$0xff]
        %v568 = vld [vmem:[%s336 + $0xc0] sm:$0xff]
        %v569 = vld [vmem:[%s336 + $0xc8] sm:$0xff]
        %v570 = vld [vmem:[%s336 + $0xd0] sm:$0xff]
        %v571 = vld [vmem:[%s336 + $0xd8] sm:$0xff]
        %v572 = vld [vmem:[%s336 + $0xe0] sm:$0xff]
        %v573 = vld [vmem:[%s336 + $0xe8] sm:$0xff]
        %v574 = vld [vmem:[%s336 + $0xf0] sm:$0xff]
        %v575 = vld [vmem:[%s336 + $0xf8] sm:$0xff]
        %v576 = vld [vmem:[%s336 + $0x100] sm:$0xff]
        %v577 = vld [vmem:[%s336 + $0x108] sm:$0xff]
        %v578 = vld [vmem:[%s336 + $0x110] sm:$0xff]
        %v579 = vld [vmem:[%s336 + $0x118] sm:$0xff]
        %v580 = vld [vmem:[%s336 + $0x120] sm:$0xff]
        %v581 = vld [vmem:[%s336 + $0x128] sm:$0xff]
        %v582 = vld [vmem:[%s336 + $0x130] sm:$0xff]
        %v583 = vld [vmem:[%s336 + $0x138] sm:$0xff]
        %v584 = vld [vmem:[%s336 + $0x140] sm:$0xff]
        %v585 = vld [vmem:[%s336 + $0x148] sm:$0xff]
        %v586 = vld [vmem:[%s336 + $0x150] sm:$0xff]
        %v587 = vld [vmem:[%s336 + $0x158] sm:$0xff]
        %v588 = vld [vmem:[%s336 + $0x160] sm:$0xff]
        %v589 = vld [vmem:[%s336 + $0x168] sm:$0xff]
        %v590 = vld [vmem:[%s336 + $0x170] sm:$0xff]
        %v591 = vld [vmem:[%s336 + $0x178] sm:$0xff]
        %v592 = vld [vmem:[%s336 + $0x180] sm:$0xff]
        %v593 = vld [vmem:[%s336 + $0x188] sm:$0xff]
        %v594 = vld [vmem:[%s336 + $0x190] sm:$0xff]
        %v595 = vld [vmem:[%s336 + $0x198] sm:$0xff]
        %v596 = vld [vmem:[%s336 + $0x1a0] sm:$0xff]
        %v597 = vld [vmem:[%s336 + $0x1a8] sm:$0xff]
        %v598 = vld [vmem:[%s336 + $0x1b0] sm:$0xff]
        %v599 = vld [vmem:[%s336 + $0x1b8] sm:$0xff]
        %v600 = vld [vmem:[%s336 + $0x1c0] sm:$0xff]
        %v601 = vld [vmem:[%s336 + $0x1c8] sm:$0xff]
        %v602 = vld [vmem:[%s336 + $0x1d0] sm:$0xff]
        %v603 = vld [vmem:[%s336 + $0x1d8] sm:$0xff]
        %v604 = vld [vmem:[%s336 + $0x1e0] sm:$0xff]
        %v605 = vld [vmem:[%s336 + $0x1e8] sm:$0xff]
        %v606 = vld [vmem:[%s336 + $0x1f0] sm:$0xff]
        %v607 = vld [vmem:[%s336 + $0x1f8] sm:$0xff]
        %v608 = vld [vmem:[%s336 + $0x200] sm:$0xff]
        %v609 = vld [vmem:[%s336 + $0x208] sm:$0xff]
        %v610 = vld [vmem:[%s336 + $0x210] sm:$0xff]
        %v611 = vld [vmem:[%s336 + $0x218] sm:$0xff]
        %v612 = vld [vmem:[%s336 + $0x220] sm:$0xff]
        %v613 = vld [vmem:[%s336 + $0x228] sm:$0xff]
        %v614 = vld [vmem:[%s336 + $0x230] sm:$0xff]
        %v615 = vld [vmem:[%s336 + $0x238] sm:$0xff]
        %v616 = vld [vmem:[%s336 + $0x240] sm:$0xff]
        %v617 = vld [vmem:[%s336 + $0x248] sm:$0xff]
        %v618 = vld [vmem:[%s336 + $0x250] sm:$0xff]
        %v619 = vld [vmem:[%s336 + $0x258] sm:$0xff]
        %v620 = vld [vmem:[%s336 + $0x260] sm:$0xff]
        %v621 = vld [vmem:[%s336 + $0x268] sm:$0xff]
        %v622 = vld [vmem:[%s336 + $0x270] sm:$0xff]
        %v623 = vld [vmem:[%s336 + $0x278] sm:$0xff]
        %v624 = vld [vmem:[%s336 + $0x280] sm:$0xff]
        %v625 = vld [vmem:[%s336 + $0x288] sm:$0xff]
        %v626 = vld [vmem:[%s336 + $0x290] sm:$0xff]
        %v627 = vld [vmem:[%s336 + $0x298] sm:$0xff]
        %v628 = vld [vmem:[%s336 + $0x2a0] sm:$0xff]
        %v629 = vld [vmem:[%s336 + $0x2a8] sm:$0xff]
        %v630 = vld [vmem:[%s336 + $0x2b0] sm:$0xff]
        %v631 = vld [vmem:[%s336 + $0x2b8] sm:$0xff]
        %v632 = vld [vmem:[%s336 + $0x2c0] sm:$0xff]
        %v633 = vld [vmem:[%s336 + $0x2c8] sm:$0xff]
        %v634 = vld [vmem:[%s336 + $0x2d0] sm:$0xff]
        %v635 = vld [vmem:[%s336 + $0x2d8] sm:$0xff]
        %v636 = vld [vmem:[%s336 + $0x2e0] sm:$0xff]
        %v637 = vld [vmem:[%s336 + $0x2e8] sm:$0xff]
        %v638 = vld [vmem:[%s336 + $0x2f0] sm:$0xff]
        %v639 = vld [vmem:[%s336 + $0x2f8] sm:$0xff]
        %v640 = vld [vmem:[%s336 + $0x300] sm:$0xff]
        %v641 = vld [vmem:[%s336 + $0x308] sm:$0xff]
        %v642 = vld [vmem:[%s336 + $0x310] sm:$0xff]
        %v643 = vld [vmem:[%s336 + $0x318] sm:$0xff]
        %v644 = vld [vmem:[%s336 + $0x320] sm:$0xff]
        %v645 = vld [vmem:[%s336 + $0x328] sm:$0xff]
        %v646 = vld [vmem:[%s336 + $0x330] sm:$0xff]
        %v647 = vld [vmem:[%s336 + $0x338] sm:$0xff]
        %v648 = vld [vmem:[%s336 + $0x340] sm:$0xff]
        %v649 = vld [vmem:[%s336 + $0x348] sm:$0xff]
        %v650 = vld [vmem:[%s336 + $0x350] sm:$0xff]
        %v651 = vld [vmem:[%s336 + $0x358] sm:$0xff]
        %v652 = vld [vmem:[%s336 + $0x360] sm:$0xff]
        %v653 = vld [vmem:[%s336 + $0x368] sm:$0xff]
        %v654 = vld [vmem:[%s336 + $0x370] sm:$0xff]
        %v655 = vld [vmem:[%s336 + $0x378] sm:$0xff]
        %v656 = vld [vmem:[%s336 + $0x380] sm:$0xff]
        %v657 = vld [vmem:[%s336 + $0x388] sm:$0xff]
        %v658 = vld [vmem:[%s336 + $0x390] sm:$0xff]
        %v659 = vld [vmem:[%s336 + $0x398] sm:$0xff]
        %v660 = vld [vmem:[%s336 + $0x3a0] sm:$0xff]
        %v661 = vld [vmem:[%s336 + $0x3a8] sm:$0xff]
        %v662 = vld [vmem:[%s336 + $0x3b0] sm:$0xff]
        %v663 = vld [vmem:[%s336 + $0x3b8] sm:$0xff]
        %v664 = vld [vmem:[%s336 + $0x3c0] sm:$0xff]
        %v665 = vld [vmem:[%s336 + $0x3c8] sm:$0xff]
        %v666 = vld [vmem:[%s336 + $0x3d0] sm:$0xff]
        %v667 = vld [vmem:[%s336 + $0x3d8] sm:$0xff]
        %v668 = vld [vmem:[%s336 + $0x3e0] sm:$0xff]
        %v669 = vld [vmem:[%s336 + $0x3e8] sm:$0xff]
        %v670 = vld [vmem:[%s336 + $0x3f0] sm:$0xff]
        %v671 = vld [vmem:[%s336 + $0x3f8] sm:$0xff]
        %v672 = vld [vmem:[%s336 + $0x400] sm:$0xff]
        %v673 = vld [vmem:[%s336 + $0x408] sm:$0xff]
        %v674 = vld [vmem:[%s336 + $0x410] sm:$0xff]
        %v675 = vld [vmem:[%s336 + $0x418] sm:$0xff]
        %v676 = vld [vmem:[%s336 + $0x420] sm:$0xff]
        %v677 = vld [vmem:[%s336 + $0x428] sm:$0xff]
        %v678 = vld [vmem:[%s336 + $0x430] sm:$0xff]
        %v679 = vld [vmem:[%s336 + $0x438] sm:$0xff]
        %v680 = vld [vmem:[%s336 + $0x440] sm:$0xff]
        %v681 = vld [vmem:[%s336 + $0x448] sm:$0xff]
        %v682 = vld [vmem:[%s336 + $0x450] sm:$0xff]
        %v683 = vld [vmem:[%s336 + $0x458] sm:$0xff]
        %v684 = vld [vmem:[%s336 + $0x460] sm:$0xff]
        %v685 = vld [vmem:[%s336 + $0x468] sm:$0xff]
        %v686 = vld [vmem:[%s336 + $0x470] sm:$0xff]
        %v687 = vld [vmem:[%s336 + $0x478] sm:$0xff]
        %v688 = vld [vmem:[%s336 + $0x480] sm:$0xff]
        %v689 = vld [vmem:[%s336 + $0x488] sm:$0xff]
        %v690 = vld [vmem:[%s336 + $0x490] sm:$0xff]
        %v691 = vld [vmem:[%s336 + $0x498] sm:$0xff]
        %v692 = vld [vmem:[%s336 + $0x4a0] sm:$0xff]
        %v693 = vld [vmem:[%s336 + $0x4a8] sm:$0xff]
        %v694 = vld [vmem:[%s336 + $0x4b0] sm:$0xff]
        %v695 = vld [vmem:[%s336 + $0x4b8] sm:$0xff]
        %v696 = vld [vmem:[%s336 + $0x4c0] sm:$0xff]
        %v697 = vld [vmem:[%s336 + $0x4c8] sm:$0xff]
        %v698 = vld [vmem:[%s336 + $0x4d0] sm:$0xff]
        %v699 = vld [vmem:[%s336 + $0x4d8] sm:$0xff]
        %v700 = vld [vmem:[%s336 + $0x4e0] sm:$0xff]
        %v701 = vld [vmem:[%s336 + $0x4e8] sm:$0xff]
        %v702 = vld [vmem:[%s336 + $0x4f0] sm:$0xff]
        %v703 = vld [vmem:[%s336 + $0x4f8] sm:$0xff]
        %v704 = vld [vmem:[%s336 + $0x500] sm:$0xff]
        %v705 = vld [vmem:[%s336 + $0x508] sm:$0xff]
        %v706 = vld [vmem:[%s336 + $0x510] sm:$0xff]
        %v707 = vld [vmem:[%s336 + $0x518] sm:$0xff]
        %v708 = vld [vmem:[%s336 + $0x520] sm:$0xff]
        %v709 = vld [vmem:[%s336 + $0x528] sm:$0xff]
        %v710 = vld [vmem:[%s336 + $0x530] sm:$0xff]
        %v711 = vld [vmem:[%s336 + $0x538] sm:$0xff]
        %v712 = vld [vmem:[%s336 + $0x540] sm:$0xff]
        %v713 = vld [vmem:[%s336 + $0x548] sm:$0xff]
        %v714 = vld [vmem:[%s336 + $0x550] sm:$0xff]
        %v715 = vld [vmem:[%s336 + $0x558] sm:$0xff]
        %v716 = vld [vmem:[%s336 + $0x560] sm:$0xff]
        %v717 = vld [vmem:[%s336 + $0x568] sm:$0xff]
        %v718 = vld [vmem:[%s336 + $0x570] sm:$0xff]
        %v719 = vld [vmem:[%s336 + $0x578] sm:$0xff]
        %v720 = vld [vmem:[%s336 + $0x580] sm:$0xff]
        %v721 = vld [vmem:[%s336 + $0x588] sm:$0xff]
        %v722 = vld [vmem:[%s336 + $0x590] sm:$0xff]
        %v723 = vld [vmem:[%s336 + $0x598] sm:$0xff]
        %v724 = vld [vmem:[%s336 + $0x5a0] sm:$0xff]
        %v725 = vld [vmem:[%s336 + $0x5a8] sm:$0xff]
        %v726 = vld [vmem:[%s336 + $0x5b0] sm:$0xff]
        %v727 = vld [vmem:[%s336 + $0x5b8] sm:$0xff]
        %v728 = vld [vmem:[%s336 + $0x5c0] sm:$0xff]
        %v729 = vld [vmem:[%s336 + $0x5c8] sm:$0xff]
        %v730 = vld [vmem:[%s336 + $0x5d0] sm:$0xff]
        %v731 = vld [vmem:[%s336 + $0x5d8] sm:$0xff]
        %v732 = vld [vmem:[%s336 + $0x5e0] sm:$0xff]
        %v733 = vld [vmem:[%s336 + $0x5e8] sm:$0xff]
        %v734 = vld [vmem:[%s336 + $0x5f0] sm:$0xff]
        %v735 = vld [vmem:[%s336 + $0x5f8] sm:$0xff]
        %v736 = vld [vmem:[%s336 + $0x600] sm:$0xff]
        %v737 = vld [vmem:[%s336 + $0x608] sm:$0xff]
        %v738 = vld [vmem:[%s336 + $0x610] sm:$0xff]
        %v739 = vld [vmem:[%s336 + $0x618] sm:$0xff]
        %v740 = vld [vmem:[%s336 + $0x620] sm:$0xff]
        %v741 = vld [vmem:[%s336 + $0x628] sm:$0xff]
        %v742 = vld [vmem:[%s336 + $0x630] sm:$0xff]
        %v743 = vld [vmem:[%s336 + $0x638] sm:$0xff]
        %v744 = vld [vmem:[%s336 + $0x640] sm:$0xff]
        %v745 = vld [vmem:[%s336 + $0x648] sm:$0xff]
        %v746 = vld [vmem:[%s336 + $0x650] sm:$0xff]
        %v747 = vld [vmem:[%s336 + $0x658] sm:$0xff]
        %v748 = vld [vmem:[%s336 + $0x660] sm:$0xff]
        %v749 = vld [vmem:[%s336 + $0x668] sm:$0xff]
        %v750 = vld [vmem:[%s336 + $0x670] sm:$0xff]
        %v751 = vld [vmem:[%s336 + $0x678] sm:$0xff]
        %v752 = vld [vmem:[%s336 + $0x680] sm:$0xff]
        %v753 = vld [vmem:[%s336 + $0x688] sm:$0xff]
        %v754 = vld [vmem:[%s336 + $0x690] sm:$0xff]
        %v755 = vld [vmem:[%s336 + $0x698] sm:$0xff]
        %v756 = vld [vmem:[%s336 + $0x6a0] sm:$0xff]
        %v757 = vld [vmem:[%s336 + $0x6a8] sm:$0xff]
        %v758 = vld [vmem:[%s336 + $0x6b0] sm:$0xff]
        %v759 = vld [vmem:[%s336 + $0x6b8] sm:$0xff]
        %v760 = vld [vmem:[%s336 + $0x6c0] sm:$0xff]
        %v761 = vld [vmem:[%s336 + $0x6c8] sm:$0xff]
        %v762 = vld [vmem:[%s336 + $0x6d0] sm:$0xff]
        %v763 = vld [vmem:[%s336 + $0x6d8] sm:$0xff]
        %v764 = vld [vmem:[%s336 + $0x6e0] sm:$0xff]
        %v765 = vld [vmem:[%s336 + $0x6e8] sm:$0xff]
        %v766 = vld [vmem:[%s336 + $0x6f0] sm:$0xff]
        %v767 = vld [vmem:[%s336 + $0x6f8] sm:$0xff]
        %v768 = vld [vmem:[%s336 + $0x700] sm:$0xff]
        %v769 = vld [vmem:[%s336 + $0x708] sm:$0xff]
        %v770 = vld [vmem:[%s336 + $0x710] sm:$0xff]
        %v771 = vld [vmem:[%s336 + $0x718] sm:$0xff]
        %v772 = vld [vmem:[%s336 + $0x720] sm:$0xff]
        %v773 = vld [vmem:[%s336 + $0x728] sm:$0xff]
        %v774 = vld [vmem:[%s336 + $0x730] sm:$0xff]
        %v775 = vld [vmem:[%s336 + $0x738] sm:$0xff]
        %v776 = vld [vmem:[%s336 + $0x740] sm:$0xff]
        %v777 = vld [vmem:[%s336 + $0x748] sm:$0xff]
        %v778 = vld [vmem:[%s336 + $0x750] sm:$0xff]
        %v779 = vld [vmem:[%s336 + $0x758] sm:$0xff]
        %v780 = vld [vmem:[%s336 + $0x760] sm:$0xff]
        %v781 = vld [vmem:[%s336 + $0x768] sm:$0xff]
        %v782 = vld [vmem:[%s336 + $0x770] sm:$0xff]
        %v783 = vld [vmem:[%s336 + $0x778] sm:$0xff]
        %v784 = vld [vmem:[%s336 + $0x780] sm:$0xff]
        %v785 = vld [vmem:[%s336 + $0x788] sm:$0xff]
        %v786 = vld [vmem:[%s336 + $0x790] sm:$0xff]
        %v787 = vld [vmem:[%s336 + $0x798] sm:$0xff]
        %v788 = vld [vmem:[%s336 + $0x7a0] sm:$0xff]
        %v789 = vld [vmem:[%s336 + $0x7a8] sm:$0xff]
        %v790 = vld [vmem:[%s336 + $0x7b0] sm:$0xff]
        %v791 = vld [vmem:[%s336 + $0x7b8] sm:$0xff]
        %v792 = vld [vmem:[%s336 + $0x7c0] sm:$0xff]
        %v793 = vld [vmem:[%s336 + $0x7c8] sm:$0xff]
        %v794 = vld [vmem:[%s336 + $0x7d0] sm:$0xff]
        %v795 = vld [vmem:[%s336 + $0x7d8] sm:$0xff]
        %v796 = vld [vmem:[%s336 + $0x7e0] sm:$0xff]
        %v797 = vld [vmem:[%s336 + $0x7e8] sm:$0xff]
        %v798 = vld [vmem:[%s336 + $0x7f0] sm:$0xff]
        %v799 = vld [vmem:[%s336 + $0x7f8] sm:$0xff]
        %v800 = vld [vmem:[#allocation6] sm:$0xf]
        %v801 = vld [vmem:[#allocation6 + $0x4] sm:$0xf]
        %v802 = vld [vmem:[#allocation6 + $0x8] sm:$0xf]
        %v803 = vld [vmem:[#allocation6 + $0xc] sm:$0xf]
        %v804 = vld [vmem:[#allocation6 + $0x10] sm:$0xf]
        %v805 = vld [vmem:[#allocation6 + $0x14] sm:$0xf]
        %v806 = vld [vmem:[#allocation6 + $0x18] sm:$0xf]
        %v807 = vld [vmem:[#allocation6 + $0x1c] sm:$0xf]
        %v808 = vld [vmem:[#allocation6 + $0x20] sm:$0xf]
        %v809 = vld [vmem:[#allocation6 + $0x24] sm:$0xf]
        %v810 = vld [vmem:[#allocation6 + $0x28] sm:$0xf]
        %v811 = vld [vmem:[#allocation6 + $0x2c] sm:$0xf]
        %v812 = vld [vmem:[#allocation6 + $0x30] sm:$0xf]
        %v813 = vld [vmem:[#allocation6 + $0x34] sm:$0xf]
        %v814 = vld [vmem:[#allocation6 + $0x38] sm:$0xf]
        %v815 = vld [vmem:[#allocation6 + $0x3c] sm:$0xf]
        %v816 = vld [vmem:[#allocation6 + $0x40] sm:$0xf]
        %v817 = vld [vmem:[#allocation6 + $0x44] sm:$0xf]
        %v818 = vld [vmem:[#allocation6 + $0x48] sm:$0xf]
        %v819 = vld [vmem:[#allocation6 + $0x4c] sm:$0xf]
        %v820 = vld [vmem:[#allocation6 + $0x50] sm:$0xf]
        %v821 = vld [vmem:[#allocation6 + $0x54] sm:$0xf]
        %v822 = vld [vmem:[#allocation6 + $0x58] sm:$0xf]
        %v823 = vld [vmem:[#allocation6 + $0x5c] sm:$0xf]
        %v824 = vld [vmem:[#allocation6 + $0x60] sm:$0xf]
        %v825 = vld [vmem:[#allocation6 + $0x64] sm:$0xf]
        %v826 = vld [vmem:[#allocation6 + $0x68] sm:$0xf]
        %v827 = vld [vmem:[#allocation6 + $0x6c] sm:$0xf]
        %v828 = vld [vmem:[#allocation6 + $0x70] sm:$0xf]
        %v829 = vld [vmem:[#allocation6 + $0x74] sm:$0xf]
        %v830 = vld [vmem:[#allocation6 + $0x78] sm:$0xf]
        %v831 = vld [vmem:[#allocation6 + $0x7c] sm:$0xf]
        %v832 = vld [vmem:[#allocation6 + $0x80] sm:$0xf]
        %v833 = vld [vmem:[#allocation6 + $0x84] sm:$0xf]
        %v834 = vld [vmem:[#allocation6 + $0x88] sm:$0xf]
        %v835 = vld [vmem:[#allocation6 + $0x8c] sm:$0xf]
        %v836 = vld [vmem:[#allocation6 + $0x90] sm:$0xf]
        %v837 = vld [vmem:[#allocation6 + $0x94] sm:$0xf]
        %v838 = vld [vmem:[#allocation6 + $0x98] sm:$0xf]
        %v839 = vld [vmem:[#allocation6 + $0x9c] sm:$0xf]
        %v840 = vld [vmem:[#allocation6 + $0xa0] sm:$0xf]
        %v841 = vld [vmem:[#allocation6 + $0xa4] sm:$0xf]
        %v842 = vld [vmem:[#allocation6 + $0xa8] sm:$0xf]
        %v843 = vld [vmem:[#allocation6 + $0xac] sm:$0xf]
        %v844 = vld [vmem:[#allocation6 + $0xb0] sm:$0xf]
        %v845 = vld [vmem:[#allocation6 + $0xb4] sm:$0xf]
        %v846 = vld [vmem:[#allocation6 + $0xb8] sm:$0xf]
        %v847 = vld [vmem:[#allocation6 + $0xbc] sm:$0xf]
        %v848 = vld [vmem:[#allocation6 + $0xc0] sm:$0xf]
        %v849 = vld [vmem:[#allocation6 + $0xc4] sm:$0xf]
        %v850 = vld [vmem:[#allocation6 + $0xc8] sm:$0xf]
        %v851 = vld [vmem:[#allocation6 + $0xcc] sm:$0xf]
        %v852 = vld [vmem:[#allocation6 + $0xd0] sm:$0xf]
        %v853 = vld [vmem:[#allocation6 + $0xd4] sm:$0xf]
        %v854 = vld [vmem:[#allocation6 + $0xd8] sm:$0xf]
        %v855 = vld [vmem:[#allocation6 + $0xdc] sm:$0xf]
        %v856 = vld [vmem:[#allocation6 + $0xe0] sm:$0xf]
        %v857 = vld [vmem:[#allocation6 + $0xe4] sm:$0xf]
        %v858 = vld [vmem:[#allocation6 + $0xe8] sm:$0xf]
        %v859 = vld [vmem:[#allocation6 + $0xec] sm:$0xf]
        %v860 = vld [vmem:[#allocation6 + $0xf0] sm:$0xf]
        %v861 = vld [vmem:[#allocation6 + $0xf4] sm:$0xf]
        %v862 = vld [vmem:[#allocation6 + $0xf8] sm:$0xf]
        %v863 = vld [vmem:[#allocation6 + $0xfc] sm:$0xf]
        %v864 = vld [vmem:[#allocation6 + $0x100] sm:$0xf]
        %v865 = vld [vmem:[#allocation6 + $0x104] sm:$0xf]
        %v866 = vld [vmem:[#allocation6 + $0x108] sm:$0xf]
        %v867 = vld [vmem:[#allocation6 + $0x10c] sm:$0xf]
        %v868 = vld [vmem:[#allocation6 + $0x110] sm:$0xf]
        %v869 = vld [vmem:[#allocation6 + $0x114] sm:$0xf]
        %v870 = vld [vmem:[#allocation6 + $0x118] sm:$0xf]
        %v871 = vld [vmem:[#allocation6 + $0x11c] sm:$0xf]
        %v872 = vld [vmem:[#allocation6 + $0x120] sm:$0xf]
        %v873 = vld [vmem:[#allocation6 + $0x124] sm:$0xf]
        %v874 = vld [vmem:[#allocation6 + $0x128] sm:$0xf]
        %v875 = vld [vmem:[#allocation6 + $0x12c] sm:$0xf]
        %v876 = vld [vmem:[#allocation6 + $0x130] sm:$0xf]
        %v877 = vld [vmem:[#allocation6 + $0x134] sm:$0xf]
        %v878 = vld [vmem:[#allocation6 + $0x138] sm:$0xf]
        %v879 = vld [vmem:[#allocation6 + $0x13c] sm:$0xf]
        %v880 = vld [vmem:[#allocation6 + $0x140] sm:$0xf]
        %v881 = vld [vmem:[#allocation6 + $0x144] sm:$0xf]
        %v882 = vld [vmem:[#allocation6 + $0x148] sm:$0xf]
        %v883 = vld [vmem:[#allocation6 + $0x14c] sm:$0xf]
        %v884 = vld [vmem:[#allocation6 + $0x150] sm:$0xf]
        %v885 = vld [vmem:[#allocation6 + $0x154] sm:$0xf]
        %v886 = vld [vmem:[#allocation6 + $0x158] sm:$0xf]
        %v887 = vld [vmem:[#allocation6 + $0x15c] sm:$0xf]
        %v888 = vld [vmem:[#allocation6 + $0x160] sm:$0xf]
        %v889 = vld [vmem:[#allocation6 + $0x164] sm:$0xf]
        %v890 = vld [vmem:[#allocation6 + $0x168] sm:$0xf]
        %v891 = vld [vmem:[#allocation6 + $0x16c] sm:$0xf]
        %v892 = vld [vmem:[#allocation6 + $0x170] sm:$0xf]
        %v893 = vld [vmem:[#allocation6 + $0x174] sm:$0xf]
        %v894 = vld [vmem:[#allocation6 + $0x178] sm:$0xf]
        %v895 = vld [vmem:[#allocation6 + $0x17c] sm:$0xf]
        %v896 = vld [vmem:[#allocation6 + $0x180] sm:$0xf]
        %v897 = vld [vmem:[#allocation6 + $0x184] sm:$0xf]
        %v898 = vld [vmem:[#allocation6 + $0x188] sm:$0xf]
        %v899 = vld [vmem:[#allocation6 + $0x18c] sm:$0xf]
        %v900 = vld [vmem:[#allocation6 + $0x190] sm:$0xf]
        %v901 = vld [vmem:[#allocation6 + $0x194] sm:$0xf]
        %v902 = vld [vmem:[#allocation6 + $0x198] sm:$0xf]
        %v903 = vld [vmem:[#allocation6 + $0x19c] sm:$0xf]
        %v904 = vld [vmem:[#allocation6 + $0x1a0] sm:$0xf]
        %v905 = vld [vmem:[#allocation6 + $0x1a4] sm:$0xf]
        %v906 = vld [vmem:[#allocation6 + $0x1a8] sm:$0xf]
        %v907 = vld [vmem:[#allocation6 + $0x1ac] sm:$0xf]
        %v908 = vld [vmem:[#allocation6 + $0x1b0] sm:$0xf]
        %v909 = vld [vmem:[#allocation6 + $0x1b4] sm:$0xf]
        %v910 = vld [vmem:[#allocation6 + $0x1b8] sm:$0xf]
        %v911 = vld [vmem:[#allocation6 + $0x1bc] sm:$0xf]
        %v912 = vld [vmem:[#allocation6 + $0x1c0] sm:$0xf]
        %v913 = vld [vmem:[#allocation6 + $0x1c4] sm:$0xf]
        %v914 = vld [vmem:[#allocation6 + $0x1c8] sm:$0xf]
        %v915 = vld [vmem:[#allocation6 + $0x1cc] sm:$0xf]
        %v916 = vld [vmem:[#allocation6 + $0x1d0] sm:$0xf]
        %v917 = vld [vmem:[#allocation6 + $0x1d4] sm:$0xf]
        %v918 = vld [vmem:[#allocation6 + $0x1d8] sm:$0xf]
        %v919 = vld [vmem:[#allocation6 + $0x1dc] sm:$0xf]
        %v920 = vld [vmem:[#allocation6 + $0x1e0] sm:$0xf]
        %v921 = vld [vmem:[#allocation6 + $0x1e4] sm:$0xf]
        %v922 = vld [vmem:[#allocation6 + $0x1e8] sm:$0xf]
        %v923 = vld [vmem:[#allocation6 + $0x1ec] sm:$0xf]
        %v924 = vld [vmem:[#allocation6 + $0x1f0] sm:$0xf]
        %v925 = vld [vmem:[#allocation6 + $0x1f4] sm:$0xf]
        %v926 = vld [vmem:[#allocation6 + $0x1f8] sm:$0xf]
        %v927 = vld [vmem:[#allocation6 + $0x1fc] sm:$0xf]
        %v1184 = vunpack.c.l.b16 %v544
        %v1185 = vunpack.c.h.b16 %v544
        %v1186 = vunpack.c.l.b16 %v545
        %v1187 = vunpack.c.h.b16 %v545
        %v1188 = vunpack.c.l.b16 %v546
        %v1189 = vunpack.c.h.b16 %v546
        %v1190 = vunpack.c.l.b16 %v547
        %v1191 = vunpack.c.h.b16 %v547
        %v1192 = vunpack.c.l.b16 %v548
        %v1193 = vunpack.c.h.b16 %v548
        %v1194 = vunpack.c.l.b16 %v549
        %v1195 = vunpack.c.h.b16 %v549
        %v1196 = vunpack.c.l.b16 %v550
        %v1197 = vunpack.c.h.b16 %v550
        %v1198 = vunpack.c.l.b16 %v551
        %v1199 = vunpack.c.h.b16 %v551
        %v1200 = vunpack.c.l.b16 %v552
        %v1201 = vunpack.c.h.b16 %v552
        %v1202 = vunpack.c.l.b16 %v553
        %v1203 = vunpack.c.h.b16 %v553
        %v1204 = vunpack.c.l.b16 %v554
        %v1205 = vunpack.c.h.b16 %v554
        %v1206 = vunpack.c.l.b16 %v555
        %v1207 = vunpack.c.h.b16 %v555
        %v1208 = vunpack.c.l.b16 %v556
        %v1209 = vunpack.c.h.b16 %v556
        %v1210 = vunpack.c.l.b16 %v557
        %v1211 = vunpack.c.h.b16 %v557
        %v1212 = vunpack.c.l.b16 %v558
        %v1213 = vunpack.c.h.b16 %v558
        %v1214 = vunpack.c.l.b16 %v559
        %v1215 = vunpack.c.h.b16 %v559
        %v1216 = vunpack.c.l.b16 %v560
        %v1217 = vunpack.c.h.b16 %v560
        %v1218 = vunpack.c.l.b16 %v561
        %v1219 = vunpack.c.h.b16 %v561
        %v1220 = vunpack.c.l.b16 %v562
        %v1221 = vunpack.c.h.b16 %v562
        %v1222 = vunpack.c.l.b16 %v563
        %v1223 = vunpack.c.h.b16 %v563
        %v1224 = vunpack.c.l.b16 %v564
        %v1225 = vunpack.c.h.b16 %v564
        %v1226 = vunpack.c.l.b16 %v565
        %v1227 = vunpack.c.h.b16 %v565
        %v1228 = vunpack.c.l.b16 %v566
        %v1229 = vunpack.c.h.b16 %v566
        %v1230 = vunpack.c.l.b16 %v567
        %v1231 = vunpack.c.h.b16 %v567
        %v1232 = vunpack.c.l.b16 %v568
        %v1233 = vunpack.c.h.b16 %v568
        %v1234 = vunpack.c.l.b16 %v569
        %v1235 = vunpack.c.h.b16 %v569
        %v1236 = vunpack.c.l.b16 %v570
        %v1237 = vunpack.c.h.b16 %v570
        %v1238 = vunpack.c.l.b16 %v571
        %v1239 = vunpack.c.h.b16 %v571
        %v1240 = vunpack.c.l.b16 %v572
        %v1241 = vunpack.c.h.b16 %v572
        %v1242 = vunpack.c.l.b16 %v573
        %v1243 = vunpack.c.h.b16 %v573
        %v1244 = vunpack.c.l.b16 %v574
        %v1245 = vunpack.c.h.b16 %v574
        %v1246 = vunpack.c.l.b16 %v575
        %v1247 = vunpack.c.h.b16 %v575
        %v1248 = vunpack.c.l.b16 %v576
        %v1249 = vunpack.c.h.b16 %v576
        %v1250 = vunpack.c.l.b16 %v577
        %v1251 = vunpack.c.h.b16 %v577
        %v1252 = vunpack.c.l.b16 %v578
        %v1253 = vunpack.c.h.b16 %v578
        %v1254 = vunpack.c.l.b16 %v579
        %v1255 = vunpack.c.h.b16 %v579
        %v1256 = vunpack.c.l.b16 %v580
        %v1257 = vunpack.c.h.b16 %v580
        %v1258 = vunpack.c.l.b16 %v581
        %v1259 = vunpack.c.h.b16 %v581
        %v1260 = vunpack.c.l.b16 %v582
        %v1261 = vunpack.c.h.b16 %v582
        %v1262 = vunpack.c.l.b16 %v583
        %v1263 = vunpack.c.h.b16 %v583
        %v1264 = vunpack.c.l.b16 %v584
        %v1265 = vunpack.c.h.b16 %v584
        %v1266 = vunpack.c.l.b16 %v585
        %v1267 = vunpack.c.h.b16 %v585
        %v1268 = vunpack.c.l.b16 %v586
        %v1269 = vunpack.c.h.b16 %v586
        %v1270 = vunpack.c.l.b16 %v587
        %v1271 = vunpack.c.h.b16 %v587
        %v1272 = vunpack.c.l.b16 %v588
        %v1273 = vunpack.c.h.b16 %v588
        %v1274 = vunpack.c.l.b16 %v589
        %v1275 = vunpack.c.h.b16 %v589
        %v1276 = vunpack.c.l.b16 %v590
        %v1277 = vunpack.c.h.b16 %v590
        %v1278 = vunpack.c.l.b16 %v591
        %v1279 = vunpack.c.h.b16 %v591
        %v1280 = vunpack.c.l.b16 %v592
        %v1281 = vunpack.c.h.b16 %v592
        %v1282 = vunpack.c.l.b16 %v593
        %v1283 = vunpack.c.h.b16 %v593
        %v1284 = vunpack.c.l.b16 %v594
        %v1285 = vunpack.c.h.b16 %v594
        %v1286 = vunpack.c.l.b16 %v595
        %v1287 = vunpack.c.h.b16 %v595
        %v1288 = vunpack.c.l.b16 %v596
        %v1289 = vunpack.c.h.b16 %v596
        %v1290 = vunpack.c.l.b16 %v597
        %v1291 = vunpack.c.h.b16 %v597
        %v1292 = vunpack.c.l.b16 %v598
        %v1293 = vunpack.c.h.b16 %v598
        %v1294 = vunpack.c.l.b16 %v599
        %v1295 = vunpack.c.h.b16 %v599
        %v1296 = vunpack.c.l.b16 %v600
        %v1297 = vunpack.c.h.b16 %v600
        %v1298 = vunpack.c.l.b16 %v601
        %v1299 = vunpack.c.h.b16 %v601
        %v1300 = vunpack.c.l.b16 %v602
        %v1301 = vunpack.c.h.b16 %v602
        %v1302 = vunpack.c.l.b16 %v603
        %v1303 = vunpack.c.h.b16 %v603
        %v1304 = vunpack.c.l.b16 %v604
        %v1305 = vunpack.c.h.b16 %v604
        %v1306 = vunpack.c.l.b16 %v605
        %v1307 = vunpack.c.h.b16 %v605
        %v1308 = vunpack.c.l.b16 %v606
        %v1309 = vunpack.c.h.b16 %v606
        %v1310 = vunpack.c.l.b16 %v607
        %v1311 = vunpack.c.h.b16 %v607
        %v1312 = vunpack.c.l.b16 %v608
        %v1313 = vunpack.c.h.b16 %v608
        %v1314 = vunpack.c.l.b16 %v609
        %v1315 = vunpack.c.h.b16 %v609
        %v1316 = vunpack.c.l.b16 %v610
        %v1317 = vunpack.c.h.b16 %v610
        %v1318 = vunpack.c.l.b16 %v611
        %v1319 = vunpack.c.h.b16 %v611
        %v1320 = vunpack.c.l.b16 %v612
        %v1321 = vunpack.c.h.b16 %v612
        %v1322 = vunpack.c.l.b16 %v613
        %v1323 = vunpack.c.h.b16 %v613
        %v1324 = vunpack.c.l.b16 %v614
        %v1325 = vunpack.c.h.b16 %v614
        %v1326 = vunpack.c.l.b16 %v615
        %v1327 = vunpack.c.h.b16 %v615
        %v1328 = vunpack.c.l.b16 %v616
        %v1329 = vunpack.c.h.b16 %v616
        %v1330 = vunpack.c.l.b16 %v617
        %v1331 = vunpack.c.h.b16 %v617
        %v1332 = vunpack.c.l.b16 %v618
        %v1333 = vunpack.c.h.b16 %v618
        %v1334 = vunpack.c.l.b16 %v619
        %v1335 = vunpack.c.h.b16 %v619
        %v1336 = vunpack.c.l.b16 %v620
        %v1337 = vunpack.c.h.b16 %v620
        %v1338 = vunpack.c.l.b16 %v621
        %v1339 = vunpack.c.h.b16 %v621
        %v1340 = vunpack.c.l.b16 %v622
        %v1341 = vunpack.c.h.b16 %v622
        %v1342 = vunpack.c.l.b16 %v623
        %v1343 = vunpack.c.h.b16 %v623
        %v1344 = vunpack.c.l.b16 %v624
        %v1345 = vunpack.c.h.b16 %v624
        %v1346 = vunpack.c.l.b16 %v625
        %v1347 = vunpack.c.h.b16 %v625
        %v1348 = vunpack.c.l.b16 %v626
        %v1349 = vunpack.c.h.b16 %v626
        %v1350 = vunpack.c.l.b16 %v627
        %v1351 = vunpack.c.h.b16 %v627
        %v1352 = vunpack.c.l.b16 %v628
        %v1353 = vunpack.c.h.b16 %v628
        %v1354 = vunpack.c.l.b16 %v629
        %v1355 = vunpack.c.h.b16 %v629
        %v1356 = vunpack.c.l.b16 %v630
        %v1357 = vunpack.c.h.b16 %v630
        %v1358 = vunpack.c.l.b16 %v631
        %v1359 = vunpack.c.h.b16 %v631
        %v1360 = vunpack.c.l.b16 %v632
        %v1361 = vunpack.c.h.b16 %v632
        %v1362 = vunpack.c.l.b16 %v633
        %v1363 = vunpack.c.h.b16 %v633
        %v1364 = vunpack.c.l.b16 %v634
        %v1365 = vunpack.c.h.b16 %v634
        %v1366 = vunpack.c.l.b16 %v635
        %v1367 = vunpack.c.h.b16 %v635
        %v1368 = vunpack.c.l.b16 %v636
        %v1369 = vunpack.c.h.b16 %v636
        %v1370 = vunpack.c.l.b16 %v637
        %v1371 = vunpack.c.h.b16 %v637
        %v1372 = vunpack.c.l.b16 %v638
        %v1373 = vunpack.c.h.b16 %v638
        %v1374 = vunpack.c.l.b16 %v639
        %v1375 = vunpack.c.h.b16 %v639
        %v1376 = vunpack.c.l.b16 %v640
        %v1377 = vunpack.c.h.b16 %v640
        %v1378 = vunpack.c.l.b16 %v641
        %v1379 = vunpack.c.h.b16 %v641
        %v1380 = vunpack.c.l.b16 %v642
        %v1381 = vunpack.c.h.b16 %v642
        %v1382 = vunpack.c.l.b16 %v643
        %v1383 = vunpack.c.h.b16 %v643
        %v1384 = vunpack.c.l.b16 %v644
        %v1385 = vunpack.c.h.b16 %v644
        %v1386 = vunpack.c.l.b16 %v645
        %v1387 = vunpack.c.h.b16 %v645
        %v1388 = vunpack.c.l.b16 %v646
        %v1389 = vunpack.c.h.b16 %v646
        %v1390 = vunpack.c.l.b16 %v647
        %v1391 = vunpack.c.h.b16 %v647
        %v1392 = vunpack.c.l.b16 %v648
        %v1393 = vunpack.c.h.b16 %v648
        %v1394 = vunpack.c.l.b16 %v649
        %v1395 = vunpack.c.h.b16 %v649
        %v1396 = vunpack.c.l.b16 %v650
        %v1397 = vunpack.c.h.b16 %v650
        %v1398 = vunpack.c.l.b16 %v651
        %v1399 = vunpack.c.h.b16 %v651
        %v1400 = vunpack.c.l.b16 %v652
        %v1401 = vunpack.c.h.b16 %v652
        %v1402 = vunpack.c.l.b16 %v653
        %v1403 = vunpack.c.h.b16 %v653
        %v1404 = vunpack.c.l.b16 %v654
        %v1405 = vunpack.c.h.b16 %v654
        %v1406 = vunpack.c.l.b16 %v655
        %v1407 = vunpack.c.h.b16 %v655
        %v1408 = vunpack.c.l.b16 %v656
        %v1409 = vunpack.c.h.b16 %v656
        %v1410 = vunpack.c.l.b16 %v657
        %v1411 = vunpack.c.h.b16 %v657
        %v1412 = vunpack.c.l.b16 %v658
        %v1413 = vunpack.c.h.b16 %v658
        %v1414 = vunpack.c.l.b16 %v659
        %v1415 = vunpack.c.h.b16 %v659
        %v1416 = vunpack.c.l.b16 %v660
        %v1417 = vunpack.c.h.b16 %v660
        %v1418 = vunpack.c.l.b16 %v661
        %v1419 = vunpack.c.h.b16 %v661
        %v1420 = vunpack.c.l.b16 %v662
        %v1421 = vunpack.c.h.b16 %v662
        %v1422 = vunpack.c.l.b16 %v663
        %v1423 = vunpack.c.h.b16 %v663
        %v1424 = vunpack.c.l.b16 %v664
        %v1425 = vunpack.c.h.b16 %v664
        %v1426 = vunpack.c.l.b16 %v665
        %v1427 = vunpack.c.h.b16 %v665
        %v1428 = vunpack.c.l.b16 %v666
        %v1429 = vunpack.c.h.b16 %v666
        %v1430 = vunpack.c.l.b16 %v667
        %v1431 = vunpack.c.h.b16 %v667
        %v1432 = vunpack.c.l.b16 %v668
        %v1433 = vunpack.c.h.b16 %v668
        %v1434 = vunpack.c.l.b16 %v669
        %v1435 = vunpack.c.h.b16 %v669
        %v1436 = vunpack.c.l.b16 %v670
        %v1437 = vunpack.c.h.b16 %v670
        %v1438 = vunpack.c.l.b16 %v671
        %v1439 = vunpack.c.h.b16 %v671
        %v1440 = vunpack.c.l.b16 %v672
        %v1441 = vunpack.c.h.b16 %v672
        %v1442 = vunpack.c.l.b16 %v673
        %v1443 = vunpack.c.h.b16 %v673
        %v1444 = vunpack.c.l.b16 %v674
        %v1445 = vunpack.c.h.b16 %v674
        %v1446 = vunpack.c.l.b16 %v675
        %v1447 = vunpack.c.h.b16 %v675
        %v1448 = vunpack.c.l.b16 %v676
        %v1449 = vunpack.c.h.b16 %v676
        %v1450 = vunpack.c.l.b16 %v677
        %v1451 = vunpack.c.h.b16 %v677
        %v1452 = vunpack.c.l.b16 %v678
        %v1453 = vunpack.c.h.b16 %v678
        %v1454 = vunpack.c.l.b16 %v679
        %v1455 = vunpack.c.h.b16 %v679
        %v1456 = vunpack.c.l.b16 %v680
        %v1457 = vunpack.c.h.b16 %v680
        %v1458 = vunpack.c.l.b16 %v681
        %v1459 = vunpack.c.h.b16 %v681
        %v1460 = vunpack.c.l.b16 %v682
        %v1461 = vunpack.c.h.b16 %v682
        %v1462 = vunpack.c.l.b16 %v683
        %v1463 = vunpack.c.h.b16 %v683
        %v1464 = vunpack.c.l.b16 %v684
        %v1465 = vunpack.c.h.b16 %v684
        %v1466 = vunpack.c.l.b16 %v685
        %v1467 = vunpack.c.h.b16 %v685
        %v1468 = vunpack.c.l.b16 %v686
        %v1469 = vunpack.c.h.b16 %v686
        %v1470 = vunpack.c.l.b16 %v687
        %v1471 = vunpack.c.h.b16 %v687
        %v1472 = vunpack.c.l.b16 %v688
        %v1473 = vunpack.c.h.b16 %v688
        %v1474 = vunpack.c.l.b16 %v689
        %v1475 = vunpack.c.h.b16 %v689
        %v1476 = vunpack.c.l.b16 %v690
        %v1477 = vunpack.c.h.b16 %v690
        %v1478 = vunpack.c.l.b16 %v691
        %v1479 = vunpack.c.h.b16 %v691
        %v1480 = vunpack.c.l.b16 %v692
        %v1481 = vunpack.c.h.b16 %v692
        %v1482 = vunpack.c.l.b16 %v693
        %v1483 = vunpack.c.h.b16 %v693
        %v1484 = vunpack.c.l.b16 %v694
        %v1485 = vunpack.c.h.b16 %v694
        %v1486 = vunpack.c.l.b16 %v695
        %v1487 = vunpack.c.h.b16 %v695
        %v1488 = vunpack.c.l.b16 %v696
        %v1489 = vunpack.c.h.b16 %v696
        %v1490 = vunpack.c.l.b16 %v697
        %v1491 = vunpack.c.h.b16 %v697
        %v1492 = vunpack.c.l.b16 %v698
        %v1493 = vunpack.c.h.b16 %v698
        %v1494 = vunpack.c.l.b16 %v699
        %v1495 = vunpack.c.h.b16 %v699
        %v1496 = vunpack.c.l.b16 %v700
        %v1497 = vunpack.c.h.b16 %v700
        %v1498 = vunpack.c.l.b16 %v701
        %v1499 = vunpack.c.h.b16 %v701
        %v1500 = vunpack.c.l.b16 %v702
        %v1501 = vunpack.c.h.b16 %v702
        %v1502 = vunpack.c.l.b16 %v703
        %v1503 = vunpack.c.h.b16 %v703
        %v1504 = vunpack.c.l.b16 %v704
        %v1505 = vunpack.c.h.b16 %v704
        %v1506 = vunpack.c.l.b16 %v705
        %v1507 = vunpack.c.h.b16 %v705
        %v1508 = vunpack.c.l.b16 %v706
        %v1509 = vunpack.c.h.b16 %v706
        %v1510 = vunpack.c.l.b16 %v707
        %v1511 = vunpack.c.h.b16 %v707
        %v1512 = vunpack.c.l.b16 %v708
        %v1513 = vunpack.c.h.b16 %v708
        %v1514 = vunpack.c.l.b16 %v709
        %v1515 = vunpack.c.h.b16 %v709
        %v1516 = vunpack.c.l.b16 %v710
        %v1517 = vunpack.c.h.b16 %v710
        %v1518 = vunpack.c.l.b16 %v711
        %v1519 = vunpack.c.h.b16 %v711
        %v1520 = vunpack.c.l.b16 %v712
        %v1521 = vunpack.c.h.b16 %v712
        %v1522 = vunpack.c.l.b16 %v713
        %v1523 = vunpack.c.h.b16 %v713
        %v1524 = vunpack.c.l.b16 %v714
        %v1525 = vunpack.c.h.b16 %v714
        %v1526 = vunpack.c.l.b16 %v715
        %v1527 = vunpack.c.h.b16 %v715
        %v1528 = vunpack.c.l.b16 %v716
        %v1529 = vunpack.c.h.b16 %v716
        %v1530 = vunpack.c.l.b16 %v717
        %v1531 = vunpack.c.h.b16 %v717
        %v1532 = vunpack.c.l.b16 %v718
        %v1533 = vunpack.c.h.b16 %v718
        %v1534 = vunpack.c.l.b16 %v719
        %v1535 = vunpack.c.h.b16 %v719
        %v1536 = vunpack.c.l.b16 %v720
        %v1537 = vunpack.c.h.b16 %v720
        %v1538 = vunpack.c.l.b16 %v721
        %v1539 = vunpack.c.h.b16 %v721
        %v1540 = vunpack.c.l.b16 %v722
        %v1541 = vunpack.c.h.b16 %v722
        %v1542 = vunpack.c.l.b16 %v723
        %v1543 = vunpack.c.h.b16 %v723
        %v1544 = vunpack.c.l.b16 %v724
        %v1545 = vunpack.c.h.b16 %v724
        %v1546 = vunpack.c.l.b16 %v725
        %v1547 = vunpack.c.h.b16 %v725
        %v1548 = vunpack.c.l.b16 %v726
        %v1549 = vunpack.c.h.b16 %v726
        %v1550 = vunpack.c.l.b16 %v727
        %v1551 = vunpack.c.h.b16 %v727
        %v1552 = vunpack.c.l.b16 %v728
        %v1553 = vunpack.c.h.b16 %v728
        %v1554 = vunpack.c.l.b16 %v729
        %v1555 = vunpack.c.h.b16 %v729
        %v1556 = vunpack.c.l.b16 %v730
        %v1557 = vunpack.c.h.b16 %v730
        %v1558 = vunpack.c.l.b16 %v731
        %v1559 = vunpack.c.h.b16 %v731
        %v1560 = vunpack.c.l.b16 %v732
        %v1561 = vunpack.c.h.b16 %v732
        %v1562 = vunpack.c.l.b16 %v733
        %v1563 = vunpack.c.h.b16 %v733
        %v1564 = vunpack.c.l.b16 %v734
        %v1565 = vunpack.c.h.b16 %v734
        %v1566 = vunpack.c.l.b16 %v735
        %v1567 = vunpack.c.h.b16 %v735
        %v1568 = vunpack.c.l.b16 %v736
        %v1569 = vunpack.c.h.b16 %v736
        %v1570 = vunpack.c.l.b16 %v737
        %v1571 = vunpack.c.h.b16 %v737
        %v1572 = vunpack.c.l.b16 %v738
        %v1573 = vunpack.c.h.b16 %v738
        %v1574 = vunpack.c.l.b16 %v739
        %v1575 = vunpack.c.h.b16 %v739
        %v1576 = vunpack.c.l.b16 %v740
        %v1577 = vunpack.c.h.b16 %v740
        %v1578 = vunpack.c.l.b16 %v741
        %v1579 = vunpack.c.h.b16 %v741
        %v1580 = vunpack.c.l.b16 %v742
        %v1581 = vunpack.c.h.b16 %v742
        %v1582 = vunpack.c.l.b16 %v743
        %v1583 = vunpack.c.h.b16 %v743
        %v1584 = vunpack.c.l.b16 %v744
        %v1585 = vunpack.c.h.b16 %v744
        %v1586 = vunpack.c.l.b16 %v745
        %v1587 = vunpack.c.h.b16 %v745
        %v1588 = vunpack.c.l.b16 %v746
        %v1589 = vunpack.c.h.b16 %v746
        %v1590 = vunpack.c.l.b16 %v747
        %v1591 = vunpack.c.h.b16 %v747
        %v1592 = vunpack.c.l.b16 %v748
        %v1593 = vunpack.c.h.b16 %v748
        %v1594 = vunpack.c.l.b16 %v749
        %v1595 = vunpack.c.h.b16 %v749
        %v1596 = vunpack.c.l.b16 %v750
        %v1597 = vunpack.c.h.b16 %v750
        %v1598 = vunpack.c.l.b16 %v751
        %v1599 = vunpack.c.h.b16 %v751
        %v1600 = vunpack.c.l.b16 %v752
        %v1601 = vunpack.c.h.b16 %v752
        %v1602 = vunpack.c.l.b16 %v753
        %v1603 = vunpack.c.h.b16 %v753
        %v1604 = vunpack.c.l.b16 %v754
        %v1605 = vunpack.c.h.b16 %v754
        %v1606 = vunpack.c.l.b16 %v755
        %v1607 = vunpack.c.h.b16 %v755
        %v1608 = vunpack.c.l.b16 %v756
        %v1609 = vunpack.c.h.b16 %v756
        %v1610 = vunpack.c.l.b16 %v757
        %v1611 = vunpack.c.h.b16 %v757
        %v1612 = vunpack.c.l.b16 %v758
        %v1613 = vunpack.c.h.b16 %v758
        %v1614 = vunpack.c.l.b16 %v759
        %v1615 = vunpack.c.h.b16 %v759
        %v1616 = vunpack.c.l.b16 %v760
        %v1617 = vunpack.c.h.b16 %v760
        %v1618 = vunpack.c.l.b16 %v761
        %v1619 = vunpack.c.h.b16 %v761
        %v1620 = vunpack.c.l.b16 %v762
        %v1621 = vunpack.c.h.b16 %v762
        %v1622 = vunpack.c.l.b16 %v763
        %v1623 = vunpack.c.h.b16 %v763
        %v1624 = vunpack.c.l.b16 %v764
        %v1625 = vunpack.c.h.b16 %v764
        %v1626 = vunpack.c.l.b16 %v765
        %v1627 = vunpack.c.h.b16 %v765
        %v1628 = vunpack.c.l.b16 %v766
        %v1629 = vunpack.c.h.b16 %v766
        %v1630 = vunpack.c.l.b16 %v767
        %v1631 = vunpack.c.h.b16 %v767
        %v1632 = vunpack.c.l.b16 %v768
        %v1633 = vunpack.c.h.b16 %v768
        %v1634 = vunpack.c.l.b16 %v769
        %v1635 = vunpack.c.h.b16 %v769
        %v1636 = vunpack.c.l.b16 %v770
        %v1637 = vunpack.c.h.b16 %v770
        %v1638 = vunpack.c.l.b16 %v771
        %v1639 = vunpack.c.h.b16 %v771
        %v1640 = vunpack.c.l.b16 %v772
        %v1641 = vunpack.c.h.b16 %v772
        %v1642 = vunpack.c.l.b16 %v773
        %v1643 = vunpack.c.h.b16 %v773
        %v1644 = vunpack.c.l.b16 %v774
        %v1645 = vunpack.c.h.b16 %v774
        %v1646 = vunpack.c.l.b16 %v775
        %v1647 = vunpack.c.h.b16 %v775
        %v1648 = vunpack.c.l.b16 %v776
        %v1649 = vunpack.c.h.b16 %v776
        %v1650 = vunpack.c.l.b16 %v777
        %v1651 = vunpack.c.h.b16 %v777
        %v1652 = vunpack.c.l.b16 %v778
        %v1653 = vunpack.c.h.b16 %v778
        %v1654 = vunpack.c.l.b16 %v779
        %v1655 = vunpack.c.h.b16 %v779
        %v1656 = vunpack.c.l.b16 %v780
        %v1657 = vunpack.c.h.b16 %v780
        %v1658 = vunpack.c.l.b16 %v781
        %v1659 = vunpack.c.h.b16 %v781
        %v1660 = vunpack.c.l.b16 %v782
        %v1661 = vunpack.c.h.b16 %v782
        %v1662 = vunpack.c.l.b16 %v783
        %v1663 = vunpack.c.h.b16 %v783
        %v1664 = vunpack.c.l.b16 %v784
        %v1665 = vunpack.c.h.b16 %v784
        %v1666 = vunpack.c.l.b16 %v785
        %v1667 = vunpack.c.h.b16 %v785
        %v1668 = vunpack.c.l.b16 %v786
        %v1669 = vunpack.c.h.b16 %v786
        %v1670 = vunpack.c.l.b16 %v787
        %v1671 = vunpack.c.h.b16 %v787
        %v1672 = vunpack.c.l.b16 %v788
        %v1673 = vunpack.c.h.b16 %v788
        %v1674 = vunpack.c.l.b16 %v789
        %v1675 = vunpack.c.h.b16 %v789
        %v1676 = vunpack.c.l.b16 %v790
        %v1677 = vunpack.c.h.b16 %v790
        %v1678 = vunpack.c.l.b16 %v791
        %v1679 = vunpack.c.h.b16 %v791
        %v1680 = vunpack.c.l.b16 %v792
        %v1681 = vunpack.c.h.b16 %v792
        %v1682 = vunpack.c.l.b16 %v793
        %v1683 = vunpack.c.h.b16 %v793
        %v1684 = vunpack.c.l.b16 %v794
        %v1685 = vunpack.c.h.b16 %v794
        %v1686 = vunpack.c.l.b16 %v795
        %v1687 = vunpack.c.h.b16 %v795
        %v1688 = vunpack.c.l.b16 %v796
        %v1689 = vunpack.c.h.b16 %v796
        %v1690 = vunpack.c.l.b16 %v797
        %v1691 = vunpack.c.h.b16 %v797
        %v1692 = vunpack.c.l.b16 %v798
        %v1693 = vunpack.c.h.b16 %v798
        %v1694 = vunpack.c.l.b16 %v799
        %v1695 = vunpack.c.h.b16 %v799
        %v1696 = vpack.c.b16 %v1192, %v1184
        %v1697 = vpack.c.b16 %v1193, %v1185
        %v1698 = vpack.c.b16 %v1194, %v1186
        %v1699 = vpack.c.b16 %v1195, %v1187
        %v1700 = vpack.c.b16 %v1196, %v1188
        %v1701 = vpack.c.b16 %v1197, %v1189
        %v1702 = vpack.c.b16 %v1198, %v1190
        %v1703 = vpack.c.b16 %v1199, %v1191
        %v1704 = vpack.c.b16 %v1208, %v1200
        %v1705 = vpack.c.b16 %v1209, %v1201
        %v1706 = vpack.c.b16 %v1210, %v1202
        %v1707 = vpack.c.b16 %v1211, %v1203
        %v1708 = vpack.c.b16 %v1212, %v1204
        %v1709 = vpack.c.b16 %v1213, %v1205
        %v1710 = vpack.c.b16 %v1214, %v1206
        %v1711 = vpack.c.b16 %v1215, %v1207
        %v1712 = vpack.c.b16 %v1224, %v1216
        %v1713 = vpack.c.b16 %v1225, %v1217
        %v1714 = vpack.c.b16 %v1226, %v1218
        %v1715 = vpack.c.b16 %v1227, %v1219
        %v1716 = vpack.c.b16 %v1228, %v1220
        %v1717 = vpack.c.b16 %v1229, %v1221
        %v1718 = vpack.c.b16 %v1230, %v1222
        %v1719 = vpack.c.b16 %v1231, %v1223
        %v1720 = vpack.c.b16 %v1240, %v1232
        %v1721 = vpack.c.b16 %v1241, %v1233
        %v1722 = vpack.c.b16 %v1242, %v1234
        %v1723 = vpack.c.b16 %v1243, %v1235
        %v1724 = vpack.c.b16 %v1244, %v1236
        %v1725 = vpack.c.b16 %v1245, %v1237
        %v1726 = vpack.c.b16 %v1246, %v1238
        %v1727 = vpack.c.b16 %v1247, %v1239
        %v1728 = vpack.c.b16 %v1256, %v1248
        %v1729 = vpack.c.b16 %v1257, %v1249
        %v1730 = vpack.c.b16 %v1258, %v1250
        %v1731 = vpack.c.b16 %v1259, %v1251
        %v1732 = vpack.c.b16 %v1260, %v1252
        %v1733 = vpack.c.b16 %v1261, %v1253
        %v1734 = vpack.c.b16 %v1262, %v1254
        %v1735 = vpack.c.b16 %v1263, %v1255
        %v1736 = vpack.c.b16 %v1272, %v1264
        %v1737 = vpack.c.b16 %v1273, %v1265
        %v1738 = vpack.c.b16 %v1274, %v1266
        %v1739 = vpack.c.b16 %v1275, %v1267
        %v1740 = vpack.c.b16 %v1276, %v1268
        %v1741 = vpack.c.b16 %v1277, %v1269
        %v1742 = vpack.c.b16 %v1278, %v1270
        %v1743 = vpack.c.b16 %v1279, %v1271
        %v1744 = vpack.c.b16 %v1288, %v1280
        %v1745 = vpack.c.b16 %v1289, %v1281
        %v1746 = vpack.c.b16 %v1290, %v1282
        %v1747 = vpack.c.b16 %v1291, %v1283
        %v1748 = vpack.c.b16 %v1292, %v1284
        %v1749 = vpack.c.b16 %v1293, %v1285
        %v1750 = vpack.c.b16 %v1294, %v1286
        %v1751 = vpack.c.b16 %v1295, %v1287
        %v1752 = vpack.c.b16 %v1304, %v1296
        %v1753 = vpack.c.b16 %v1305, %v1297
        %v1754 = vpack.c.b16 %v1306, %v1298
        %v1755 = vpack.c.b16 %v1307, %v1299
        %v1756 = vpack.c.b16 %v1308, %v1300
        %v1757 = vpack.c.b16 %v1309, %v1301
        %v1758 = vpack.c.b16 %v1310, %v1302
        %v1759 = vpack.c.b16 %v1311, %v1303
        %v1760 = vpack.c.b16 %v1320, %v1312
        %v1761 = vpack.c.b16 %v1321, %v1313
        %v1762 = vpack.c.b16 %v1322, %v1314
        %v1763 = vpack.c.b16 %v1323, %v1315
        %v1764 = vpack.c.b16 %v1324, %v1316
        %v1765 = vpack.c.b16 %v1325, %v1317
        %v1766 = vpack.c.b16 %v1326, %v1318
        %v1767 = vpack.c.b16 %v1327, %v1319
        %v1768 = vpack.c.b16 %v1336, %v1328
        %v1769 = vpack.c.b16 %v1337, %v1329
        %v1770 = vpack.c.b16 %v1338, %v1330
        %v1771 = vpack.c.b16 %v1339, %v1331
        %v1772 = vpack.c.b16 %v1340, %v1332
        %v1773 = vpack.c.b16 %v1341, %v1333
        %v1774 = vpack.c.b16 %v1342, %v1334
        %v1775 = vpack.c.b16 %v1343, %v1335
        %v1776 = vpack.c.b16 %v1352, %v1344
        %v1777 = vpack.c.b16 %v1353, %v1345
        %v1778 = vpack.c.b16 %v1354, %v1346
        %v1779 = vpack.c.b16 %v1355, %v1347
        %v1780 = vpack.c.b16 %v1356, %v1348
        %v1781 = vpack.c.b16 %v1357, %v1349
        %v1782 = vpack.c.b16 %v1358, %v1350
        %v1783 = vpack.c.b16 %v1359, %v1351
        %v1784 = vpack.c.b16 %v1368, %v1360
        %v1785 = vpack.c.b16 %v1369, %v1361
        %v1786 = vpack.c.b16 %v1370, %v1362
        %v1787 = vpack.c.b16 %v1371, %v1363
        %v1788 = vpack.c.b16 %v1372, %v1364
        %v1789 = vpack.c.b16 %v1373, %v1365
        %v1790 = vpack.c.b16 %v1374, %v1366
        %v1791 = vpack.c.b16 %v1375, %v1367
        %v1792 = vpack.c.b16 %v1384, %v1376
        %v1793 = vpack.c.b16 %v1385, %v1377
        %v1794 = vpack.c.b16 %v1386, %v1378
        %v1795 = vpack.c.b16 %v1387, %v1379
        %v1796 = vpack.c.b16 %v1388, %v1380
        %v1797 = vpack.c.b16 %v1389, %v1381
        %v1798 = vpack.c.b16 %v1390, %v1382
        %v1799 = vpack.c.b16 %v1391, %v1383
        %v1800 = vpack.c.b16 %v1400, %v1392
        %v1801 = vpack.c.b16 %v1401, %v1393
        %v1802 = vpack.c.b16 %v1402, %v1394
        %v1803 = vpack.c.b16 %v1403, %v1395
        %v1804 = vpack.c.b16 %v1404, %v1396
        %v1805 = vpack.c.b16 %v1405, %v1397
        %v1806 = vpack.c.b16 %v1406, %v1398
        %v1807 = vpack.c.b16 %v1407, %v1399
        %v1808 = vpack.c.b16 %v1416, %v1408
        %v1809 = vpack.c.b16 %v1417, %v1409
        %v1810 = vpack.c.b16 %v1418, %v1410
        %v1811 = vpack.c.b16 %v1419, %v1411
        %v1812 = vpack.c.b16 %v1420, %v1412
        %v1813 = vpack.c.b16 %v1421, %v1413
        %v1814 = vpack.c.b16 %v1422, %v1414
        %v1815 = vpack.c.b16 %v1423, %v1415
        %v1816 = vpack.c.b16 %v1432, %v1424
        %v1817 = vpack.c.b16 %v1433, %v1425
        %v1818 = vpack.c.b16 %v1434, %v1426
        %v1819 = vpack.c.b16 %v1435, %v1427
        %v1820 = vpack.c.b16 %v1436, %v1428
        %v1821 = vpack.c.b16 %v1437, %v1429
        %v1822 = vpack.c.b16 %v1438, %v1430
        %v1823 = vpack.c.b16 %v1439, %v1431
        %v1824 = vpack.c.b16 %v1448, %v1440
        %v1825 = vpack.c.b16 %v1449, %v1441
        %v1826 = vpack.c.b16 %v1450, %v1442
        %v1827 = vpack.c.b16 %v1451, %v1443
        %v1828 = vpack.c.b16 %v1452, %v1444
        %v1829 = vpack.c.b16 %v1453, %v1445
        %v1830 = vpack.c.b16 %v1454, %v1446
        %v1831 = vpack.c.b16 %v1455, %v1447
        %v1832 = vpack.c.b16 %v1464, %v1456
        %v1833 = vpack.c.b16 %v1465, %v1457
        %v1834 = vpack.c.b16 %v1466, %v1458
        %v1835 = vpack.c.b16 %v1467, %v1459
        %v1836 = vpack.c.b16 %v1468, %v1460
        %v1837 = vpack.c.b16 %v1469, %v1461
        %v1838 = vpack.c.b16 %v1470, %v1462
        %v1839 = vpack.c.b16 %v1471, %v1463
        %v1840 = vpack.c.b16 %v1480, %v1472
        %v1841 = vpack.c.b16 %v1481, %v1473
        %v1842 = vpack.c.b16 %v1482, %v1474
        %v1843 = vpack.c.b16 %v1483, %v1475
        %v1844 = vpack.c.b16 %v1484, %v1476
        %v1845 = vpack.c.b16 %v1485, %v1477
        %v1846 = vpack.c.b16 %v1486, %v1478
        %v1847 = vpack.c.b16 %v1487, %v1479
        %v1848 = vpack.c.b16 %v1496, %v1488
        %v1849 = vpack.c.b16 %v1497, %v1489
        %v1850 = vpack.c.b16 %v1498, %v1490
        %v1851 = vpack.c.b16 %v1499, %v1491
        %v1852 = vpack.c.b16 %v1500, %v1492
        %v1853 = vpack.c.b16 %v1501, %v1493
        %v1854 = vpack.c.b16 %v1502, %v1494
        %v1855 = vpack.c.b16 %v1503, %v1495
        %v1856 = vpack.c.b16 %v1512, %v1504
        %v1857 = vpack.c.b16 %v1513, %v1505
        %v1858 = vpack.c.b16 %v1514, %v1506
        %v1859 = vpack.c.b16 %v1515, %v1507
        %v1860 = vpack.c.b16 %v1516, %v1508
        %v1861 = vpack.c.b16 %v1517, %v1509
        %v1862 = vpack.c.b16 %v1518, %v1510
        %v1863 = vpack.c.b16 %v1519, %v1511
        %v1864 = vpack.c.b16 %v1528, %v1520
        %v1865 = vpack.c.b16 %v1529, %v1521
        %v1866 = vpack.c.b16 %v1530, %v1522
        %v1867 = vpack.c.b16 %v1531, %v1523
        %v1868 = vpack.c.b16 %v1532, %v1524
        %v1869 = vpack.c.b16 %v1533, %v1525
        %v1870 = vpack.c.b16 %v1534, %v1526
        %v1871 = vpack.c.b16 %v1535, %v1527
        %v1872 = vpack.c.b16 %v1544, %v1536
        %v1873 = vpack.c.b16 %v1545, %v1537
        %v1874 = vpack.c.b16 %v1546, %v1538
        %v1875 = vpack.c.b16 %v1547, %v1539
        %v1876 = vpack.c.b16 %v1548, %v1540
        %v1877 = vpack.c.b16 %v1549, %v1541
        %v1878 = vpack.c.b16 %v1550, %v1542
        %v1879 = vpack.c.b16 %v1551, %v1543
        %v1880 = vpack.c.b16 %v1560, %v1552
        %v1881 = vpack.c.b16 %v1561, %v1553
        %v1882 = vpack.c.b16 %v1562, %v1554
        %v1883 = vpack.c.b16 %v1563, %v1555
        %v1884 = vpack.c.b16 %v1564, %v1556
        %v1885 = vpack.c.b16 %v1565, %v1557
        %v1886 = vpack.c.b16 %v1566, %v1558
        %v1887 = vpack.c.b16 %v1567, %v1559
        %v1888 = vpack.c.b16 %v1576, %v1568
        %v1889 = vpack.c.b16 %v1577, %v1569
        %v1890 = vpack.c.b16 %v1578, %v1570
        %v1891 = vpack.c.b16 %v1579, %v1571
        %v1892 = vpack.c.b16 %v1580, %v1572
        %v1893 = vpack.c.b16 %v1581, %v1573
        %v1894 = vpack.c.b16 %v1582, %v1574
        %v1895 = vpack.c.b16 %v1583, %v1575
        %v1896 = vpack.c.b16 %v1592, %v1584
        %v1897 = vpack.c.b16 %v1593, %v1585
        %v1898 = vpack.c.b16 %v1594, %v1586
        %v1899 = vpack.c.b16 %v1595, %v1587
        %v1900 = vpack.c.b16 %v1596, %v1588
        %v1901 = vpack.c.b16 %v1597, %v1589
        %v1902 = vpack.c.b16 %v1598, %v1590
        %v1903 = vpack.c.b16 %v1599, %v1591
        %v1904 = vpack.c.b16 %v1608, %v1600
        %v1905 = vpack.c.b16 %v1609, %v1601
        %v1906 = vpack.c.b16 %v1610, %v1602
        %v1907 = vpack.c.b16 %v1611, %v1603
        %v1908 = vpack.c.b16 %v1612, %v1604
        %v1909 = vpack.c.b16 %v1613, %v1605
        %v1910 = vpack.c.b16 %v1614, %v1606
        %v1911 = vpack.c.b16 %v1615, %v1607
        %v1912 = vpack.c.b16 %v1624, %v1616
        %v1913 = vpack.c.b16 %v1625, %v1617
        %v1914 = vpack.c.b16 %v1626, %v1618
        %v1915 = vpack.c.b16 %v1627, %v1619
        %v1916 = vpack.c.b16 %v1628, %v1620
        %v1917 = vpack.c.b16 %v1629, %v1621
        %v1918 = vpack.c.b16 %v1630, %v1622
        %v1919 = vpack.c.b16 %v1631, %v1623
        %v1920 = vpack.c.b16 %v1640, %v1632
        %v1921 = vpack.c.b16 %v1641, %v1633
        %v1922 = vpack.c.b16 %v1642, %v1634
        %v1923 = vpack.c.b16 %v1643, %v1635
        %v1924 = vpack.c.b16 %v1644, %v1636
        %v1925 = vpack.c.b16 %v1645, %v1637
        %v1926 = vpack.c.b16 %v1646, %v1638
        %v1927 = vpack.c.b16 %v1647, %v1639
        %v1928 = vpack.c.b16 %v1656, %v1648
        %v1929 = vpack.c.b16 %v1657, %v1649
        %v1930 = vpack.c.b16 %v1658, %v1650
        %v1931 = vpack.c.b16 %v1659, %v1651
        %v1932 = vpack.c.b16 %v1660, %v1652
        %v1933 = vpack.c.b16 %v1661, %v1653
        %v1934 = vpack.c.b16 %v1662, %v1654
        %v1935 = vpack.c.b16 %v1663, %v1655
        %v1936 = vpack.c.b16 %v1672, %v1664
        %v1937 = vpack.c.b16 %v1673, %v1665
        %v1938 = vpack.c.b16 %v1674, %v1666
        %v1939 = vpack.c.b16 %v1675, %v1667
        %v1940 = vpack.c.b16 %v1676, %v1668
        %v1941 = vpack.c.b16 %v1677, %v1669
        %v1942 = vpack.c.b16 %v1678, %v1670
        %v1943 = vpack.c.b16 %v1679, %v1671
        %v1944 = vpack.c.b16 %v1688, %v1680
        %v1945 = vpack.c.b16 %v1689, %v1681
        %v1946 = vpack.c.b16 %v1690, %v1682
        %v1947 = vpack.c.b16 %v1691, %v1683
        %v1948 = vpack.c.b16 %v1692, %v1684
        %v1949 = vpack.c.b16 %v1693, %v1685
        %v1950 = vpack.c.b16 %v1694, %v1686
        %v1951 = vpack.c.b16 %v1695, %v1687
        %v2336 = vunpack.c.l.b16 %v800
        %v2337 = vunpack.c.l.b16 %v801
        %v2338 = vunpack.c.l.b16 %v802
        %v2339 = vunpack.c.l.b16 %v803
        %v2340 = vunpack.c.l.b16 %v804
        %v2341 = vunpack.c.l.b16 %v805
        %v2342 = vunpack.c.l.b16 %v806
        %v2343 = vunpack.c.l.b16 %v807
        %v2344 = vunpack.c.l.b16 %v808
        %v2345 = vunpack.c.l.b16 %v809
        %v2346 = vunpack.c.l.b16 %v810
        %v2347 = vunpack.c.l.b16 %v811
        %v2348 = vunpack.c.l.b16 %v812
        %v2349 = vunpack.c.l.b16 %v813
        %v2350 = vunpack.c.l.b16 %v814
        %v2351 = vunpack.c.l.b16 %v815
        %v2352 = vunpack.c.l.b16 %v816
        %v2353 = vunpack.c.l.b16 %v817
        %v2354 = vunpack.c.l.b16 %v818
        %v2355 = vunpack.c.l.b16 %v819
        %v2356 = vunpack.c.l.b16 %v820
        %v2357 = vunpack.c.l.b16 %v821
        %v2358 = vunpack.c.l.b16 %v822
        %v2359 = vunpack.c.l.b16 %v823
        %v2360 = vunpack.c.l.b16 %v824
        %v2361 = vunpack.c.l.b16 %v825
        %v2362 = vunpack.c.l.b16 %v826
        %v2363 = vunpack.c.l.b16 %v827
        %v2364 = vunpack.c.l.b16 %v828
        %v2365 = vunpack.c.l.b16 %v829
        %v2366 = vunpack.c.l.b16 %v830
        %v2367 = vunpack.c.l.b16 %v831
        %v2368 = vunpack.c.l.b16 %v832
        %v2369 = vunpack.c.l.b16 %v833
        %v2370 = vunpack.c.l.b16 %v834
        %v2371 = vunpack.c.l.b16 %v835
        %v2372 = vunpack.c.l.b16 %v836
        %v2373 = vunpack.c.l.b16 %v837
        %v2374 = vunpack.c.l.b16 %v838
        %v2375 = vunpack.c.l.b16 %v839
        %v2376 = vunpack.c.l.b16 %v840
        %v2377 = vunpack.c.l.b16 %v841
        %v2378 = vunpack.c.l.b16 %v842
        %v2379 = vunpack.c.l.b16 %v843
        %v2380 = vunpack.c.l.b16 %v844
        %v2381 = vunpack.c.l.b16 %v845
        %v2382 = vunpack.c.l.b16 %v846
        %v2383 = vunpack.c.l.b16 %v847
        %v2384 = vunpack.c.l.b16 %v848
        %v2385 = vunpack.c.l.b16 %v849
        %v2386 = vunpack.c.l.b16 %v850
        %v2387 = vunpack.c.l.b16 %v851
        %v2388 = vunpack.c.l.b16 %v852
        %v2389 = vunpack.c.l.b16 %v853
        %v2390 = vunpack.c.l.b16 %v854
        %v2391 = vunpack.c.l.b16 %v855
        %v2392 = vunpack.c.l.b16 %v856
        %v2393 = vunpack.c.l.b16 %v857
        %v2394 = vunpack.c.l.b16 %v858
        %v2395 = vunpack.c.l.b16 %v859
        %v2396 = vunpack.c.l.b16 %v860
        %v2397 = vunpack.c.l.b16 %v861
        %v2398 = vunpack.c.l.b16 %v862
        %v2399 = vunpack.c.l.b16 %v863
        %v2400 = vunpack.c.l.b16 %v864
        %v2401 = vunpack.c.l.b16 %v865
        %v2402 = vunpack.c.l.b16 %v866
        %v2403 = vunpack.c.l.b16 %v867
        %v2404 = vunpack.c.l.b16 %v868
        %v2405 = vunpack.c.l.b16 %v869
        %v2406 = vunpack.c.l.b16 %v870
        %v2407 = vunpack.c.l.b16 %v871
        %v2408 = vunpack.c.l.b16 %v872
        %v2409 = vunpack.c.l.b16 %v873
        %v2410 = vunpack.c.l.b16 %v874
        %v2411 = vunpack.c.l.b16 %v875
        %v2412 = vunpack.c.l.b16 %v876
        %v2413 = vunpack.c.l.b16 %v877
        %v2414 = vunpack.c.l.b16 %v878
        %v2415 = vunpack.c.l.b16 %v879
        %v2416 = vunpack.c.l.b16 %v880
        %v2417 = vunpack.c.l.b16 %v881
        %v2418 = vunpack.c.l.b16 %v882
        %v2419 = vunpack.c.l.b16 %v883
        %v2420 = vunpack.c.l.b16 %v884
        %v2421 = vunpack.c.l.b16 %v885
        %v2422 = vunpack.c.l.b16 %v886
        %v2423 = vunpack.c.l.b16 %v887
        %v2424 = vunpack.c.l.b16 %v888
        %v2425 = vunpack.c.l.b16 %v889
        %v2426 = vunpack.c.l.b16 %v890
        %v2427 = vunpack.c.l.b16 %v891
        %v2428 = vunpack.c.l.b16 %v892
        %v2429 = vunpack.c.l.b16 %v893
        %v2430 = vunpack.c.l.b16 %v894
        %v2431 = vunpack.c.l.b16 %v895
        %v2432 = vunpack.c.l.b16 %v896
        %v2433 = vunpack.c.l.b16 %v897
        %v2434 = vunpack.c.l.b16 %v898
        %v2435 = vunpack.c.l.b16 %v899
        %v2436 = vunpack.c.l.b16 %v900
        %v2437 = vunpack.c.l.b16 %v901
        %v2438 = vunpack.c.l.b16 %v902
        %v2439 = vunpack.c.l.b16 %v903
        %v2440 = vunpack.c.l.b16 %v904
        %v2441 = vunpack.c.l.b16 %v905
        %v2442 = vunpack.c.l.b16 %v906
        %v2443 = vunpack.c.l.b16 %v907
        %v2444 = vunpack.c.l.b16 %v908
        %v2445 = vunpack.c.l.b16 %v909
        %v2446 = vunpack.c.l.b16 %v910
        %v2447 = vunpack.c.l.b16 %v911
        %v2448 = vunpack.c.l.b16 %v912
        %v2449 = vunpack.c.l.b16 %v913
        %v2450 = vunpack.c.l.b16 %v914
        %v2451 = vunpack.c.l.b16 %v915
        %v2452 = vunpack.c.l.b16 %v916
        %v2453 = vunpack.c.l.b16 %v917
        %v2454 = vunpack.c.l.b16 %v918
        %v2455 = vunpack.c.l.b16 %v919
        %v2456 = vunpack.c.l.b16 %v920
        %v2457 = vunpack.c.l.b16 %v921
        %v2458 = vunpack.c.l.b16 %v922
        %v2459 = vunpack.c.l.b16 %v923
        %v2460 = vunpack.c.l.b16 %v924
        %v2461 = vunpack.c.l.b16 %v925
        %v2462 = vunpack.c.l.b16 %v926
        %v2463 = vunpack.c.l.b16 %v927
        %v2464 = vpack.c.b16 %v2337, %v2336
        %v2465 = vpack.c.b16 %v2339, %v2338
        %v2466 = vpack.c.b16 %v2341, %v2340
        %v2467 = vpack.c.b16 %v2343, %v2342
        %v2468 = vpack.c.b16 %v2345, %v2344
        %v2469 = vpack.c.b16 %v2347, %v2346
        %v2470 = vpack.c.b16 %v2349, %v2348
        %v2471 = vpack.c.b16 %v2351, %v2350
        %v2472 = vpack.c.b16 %v2353, %v2352
        %v2473 = vpack.c.b16 %v2355, %v2354
        %v2474 = vpack.c.b16 %v2357, %v2356
        %v2475 = vpack.c.b16 %v2359, %v2358
        %v2476 = vpack.c.b16 %v2361, %v2360
        %v2477 = vpack.c.b16 %v2363, %v2362
        %v2478 = vpack.c.b16 %v2365, %v2364
        %v2479 = vpack.c.b16 %v2367, %v2366
        %v2480 = vpack.c.b16 %v2369, %v2368
        %v2481 = vpack.c.b16 %v2371, %v2370
        %v2482 = vpack.c.b16 %v2373, %v2372
        %v2483 = vpack.c.b16 %v2375, %v2374
        %v2484 = vpack.c.b16 %v2377, %v2376
        %v2485 = vpack.c.b16 %v2379, %v2378
        %v2486 = vpack.c.b16 %v2381, %v2380
        %v2487 = vpack.c.b16 %v2383, %v2382
        %v2488 = vpack.c.b16 %v2385, %v2384
        %v2489 = vpack.c.b16 %v2387, %v2386
        %v2490 = vpack.c.b16 %v2389, %v2388
        %v2491 = vpack.c.b16 %v2391, %v2390
        %v2492 = vpack.c.b16 %v2393, %v2392
        %v2493 = vpack.c.b16 %v2395, %v2394
        %v2494 = vpack.c.b16 %v2397, %v2396
        %v2495 = vpack.c.b16 %v2399, %v2398
        %v2496 = vpack.c.b16 %v2401, %v2400
        %v2497 = vpack.c.b16 %v2403, %v2402
        %v2498 = vpack.c.b16 %v2405, %v2404
        %v2499 = vpack.c.b16 %v2407, %v2406
        %v2500 = vpack.c.b16 %v2409, %v2408
        %v2501 = vpack.c.b16 %v2411, %v2410
        %v2502 = vpack.c.b16 %v2413, %v2412
        %v2503 = vpack.c.b16 %v2415, %v2414
        %v2504 = vpack.c.b16 %v2417, %v2416
        %v2505 = vpack.c.b16 %v2419, %v2418
        %v2506 = vpack.c.b16 %v2421, %v2420
        %v2507 = vpack.c.b16 %v2423, %v2422
        %v2508 = vpack.c.b16 %v2425, %v2424
        %v2509 = vpack.c.b16 %v2427, %v2426
        %v2510 = vpack.c.b16 %v2429, %v2428
        %v2511 = vpack.c.b16 %v2431, %v2430
        %v2512 = vpack.c.b16 %v2433, %v2432
        %v2513 = vpack.c.b16 %v2435, %v2434
        %v2514 = vpack.c.b16 %v2437, %v2436
        %v2515 = vpack.c.b16 %v2439, %v2438
        %v2516 = vpack.c.b16 %v2441, %v2440
        %v2517 = vpack.c.b16 %v2443, %v2442
        %v2518 = vpack.c.b16 %v2445, %v2444
        %v2519 = vpack.c.b16 %v2447, %v2446
        %v2520 = vpack.c.b16 %v2449, %v2448
        %v2521 = vpack.c.b16 %v2451, %v2450
        %v2522 = vpack.c.b16 %v2453, %v2452
        %v2523 = vpack.c.b16 %v2455, %v2454
        %v2524 = vpack.c.b16 %v2457, %v2456
        %v2525 = vpack.c.b16 %v2459, %v2458
        %v2526 = vpack.c.b16 %v2461, %v2460
        %v2527 = vpack.c.b16 %v2463, %v2462
        %2592 = vmatpush.bf16.msra.mxu0 %v2471
        %2593 = vmatpush.bf16.msra.mxu0 %v2470
        %2594 = vmatpush.bf16.msra.mxu0 %v2469
        %2595 = vmatpush.bf16.msra.mxu0 %v2468
        %2596 = vmatpush.bf16.msra.mxu0 %v2467
        %2597 = vmatpush.bf16.msra.mxu0 %v2466
        %2598 = vmatpush.bf16.msra.mxu0 %v2465
        %2599 = vmatpush.bf16.msra.mxu0 %v2464
        %2600 = vmatmul.bf16.gmra.mxu0 %v1696
        %v2601 = vpop.f32.mrf.mxu0
        %v2602 = vadd.f32 0.0, %v2601
        %v2603 = vpop.f32.mrf.mxu0
        %v2604 = vadd.f32 0.0, %v2603
        %2605 = vmatmul.bf16.gmra.mxu0 %v1704
        %v2606 = vpop.f32.mrf.mxu0
        %v2607 = vadd.f32 0.0, %v2606
        %v2608 = vpop.f32.mrf.mxu0
        %v2609 = vadd.f32 0.0, %v2608
        %2610 = vmatmul.bf16.gmra.mxu0 %v1712
        %v2611 = vpop.f32.mrf.mxu0
        %v2612 = vadd.f32 0.0, %v2611
        %v2613 = vpop.f32.mrf.mxu0
        %v2614 = vadd.f32 0.0, %v2613
        %2615 = vmatmul.bf16.gmra.mxu0 %v1720
        %v2616 = vpop.f32.mrf.mxu0
        %v2617 = vadd.f32 0.0, %v2616
        %v2618 = vpop.f32.mrf.mxu0
        %v2619 = vadd.f32 0.0, %v2618
        %2620 = vmatmul.bf16.gmra.mxu0 %v1728
        %v2621 = vpop.f32.mrf.mxu0
        %v2622 = vadd.f32 0.0, %v2621
        %v2623 = vpop.f32.mrf.mxu0
        %v2624 = vadd.f32 0.0, %v2623
        %2625 = vmatmul.bf16.gmra.mxu0 %v1736
        %v2626 = vpop.f32.mrf.mxu0
        %v2627 = vadd.f32 0.0, %v2626
        %v2628 = vpop.f32.mrf.mxu0
        %v2629 = vadd.f32 0.0, %v2628
        %2630 = vmatmul.bf16.gmra.mxu0 %v1744
        %v2631 = vpop.f32.mrf.mxu0
        %v2632 = vadd.f32 0.0, %v2631
        %v2633 = vpop.f32.mrf.mxu0
        %v2634 = vadd.f32 0.0, %v2633
        %2635 = vmatmul.bf16.gmra.mxu0 %v1752
        %v2636 = vpop.f32.mrf.mxu0
        %v2637 = vadd.f32 0.0, %v2636
        %v2638 = vpop.f32.mrf.mxu0
        %v2639 = vadd.f32 0.0, %v2638
        %2640 = vmatmul.bf16.gmra.mxu0 %v1760
        %v2641 = vpop.f32.mrf.mxu0
        %v2642 = vadd.f32 0.0, %v2641
        %v2643 = vpop.f32.mrf.mxu0
        %v2644 = vadd.f32 0.0, %v2643
        %2645 = vmatmul.bf16.gmra.mxu0 %v1768
        %v2646 = vpop.f32.mrf.mxu0
        %v2647 = vadd.f32 0.0, %v2646
        %v2648 = vpop.f32.mrf.mxu0
        %v2649 = vadd.f32 0.0, %v2648
        %2650 = vmatmul.bf16.gmra.mxu0 %v1776
        %v2651 = vpop.f32.mrf.mxu0
        %v2652 = vadd.f32 0.0, %v2651
        %v2653 = vpop.f32.mrf.mxu0
        %v2654 = vadd.f32 0.0, %v2653
        %2655 = vmatmul.bf16.gmra.mxu0 %v1784
        %v2656 = vpop.f32.mrf.mxu0
        %v2657 = vadd.f32 0.0, %v2656
        %v2658 = vpop.f32.mrf.mxu0
        %v2659 = vadd.f32 0.0, %v2658
        %2660 = vmatmul.bf16.gmra.mxu0 %v1792
        %v2661 = vpop.f32.mrf.mxu0
        %v2662 = vadd.f32 0.0, %v2661
        %v2663 = vpop.f32.mrf.mxu0
        %v2664 = vadd.f32 0.0, %v2663
        %2665 = vmatmul.bf16.gmra.mxu0 %v1800
        %v2666 = vpop.f32.mrf.mxu0
        %v2667 = vadd.f32 0.0, %v2666
        %v2668 = vpop.f32.mrf.mxu0
        %v2669 = vadd.f32 0.0, %v2668
        %2670 = vmatmul.bf16.gmra.mxu0 %v1808
        %v2671 = vpop.f32.mrf.mxu0
        %v2672 = vadd.f32 0.0, %v2671
        %v2673 = vpop.f32.mrf.mxu0
        %v2674 = vadd.f32 0.0, %v2673
        %2675 = vmatmul.bf16.gmra.mxu0 %v1816
        %v2676 = vpop.f32.mrf.mxu0
        %v2677 = vadd.f32 0.0, %v2676
        %v2678 = vpop.f32.mrf.mxu0
        %v2679 = vadd.f32 0.0, %v2678
        %2680 = vmatmul.bf16.gmra.mxu0 %v1824
        %v2681 = vpop.f32.mrf.mxu0
        %v2682 = vadd.f32 0.0, %v2681
        %v2683 = vpop.f32.mrf.mxu0
        %v2684 = vadd.f32 0.0, %v2683
        %2685 = vmatmul.bf16.gmra.mxu0 %v1832
        %v2686 = vpop.f32.mrf.mxu0
        %v2687 = vadd.f32 0.0, %v2686
        %v2688 = vpop.f32.mrf.mxu0
        %v2689 = vadd.f32 0.0, %v2688
        %2690 = vmatmul.bf16.gmra.mxu0 %v1840
        %v2691 = vpop.f32.mrf.mxu0
        %v2692 = vadd.f32 0.0, %v2691
        %v2693 = vpop.f32.mrf.mxu0
        %v2694 = vadd.f32 0.0, %v2693
        %2695 = vmatmul.bf16.gmra.mxu0 %v1848
        %v2696 = vpop.f32.mrf.mxu0
        %v2697 = vadd.f32 0.0, %v2696
        %v2698 = vpop.f32.mrf.mxu0
        %v2699 = vadd.f32 0.0, %v2698
        %2700 = vmatmul.bf16.gmra.mxu0 %v1856
        %v2701 = vpop.f32.mrf.mxu0
        %v2702 = vadd.f32 0.0, %v2701
        %v2703 = vpop.f32.mrf.mxu0
        %v2704 = vadd.f32 0.0, %v2703
        %2705 = vmatmul.bf16.gmra.mxu0 %v1864
        %v2706 = vpop.f32.mrf.mxu0
        %v2707 = vadd.f32 0.0, %v2706
        %v2708 = vpop.f32.mrf.mxu0
        %v2709 = vadd.f32 0.0, %v2708
        %2710 = vmatmul.bf16.gmra.mxu0 %v1872
        %v2711 = vpop.f32.mrf.mxu0
        %v2712 = vadd.f32 0.0, %v2711
        %v2713 = vpop.f32.mrf.mxu0
        %v2714 = vadd.f32 0.0, %v2713
        %2715 = vmatmul.bf16.gmra.mxu0 %v1880
        %v2716 = vpop.f32.mrf.mxu0
        %v2717 = vadd.f32 0.0, %v2716
        %v2718 = vpop.f32.mrf.mxu0
        %v2719 = vadd.f32 0.0, %v2718
        %2720 = vmatmul.bf16.gmra.mxu0 %v1888
        %v2721 = vpop.f32.mrf.mxu0
        %v2722 = vadd.f32 0.0, %v2721
        %v2723 = vpop.f32.mrf.mxu0
        %v2724 = vadd.f32 0.0, %v2723
        %2725 = vmatmul.bf16.gmra.mxu0 %v1896
        %v2726 = vpop.f32.mrf.mxu0
        %v2727 = vadd.f32 0.0, %v2726
        %v2728 = vpop.f32.mrf.mxu0
        %v2729 = vadd.f32 0.0, %v2728
        %2730 = vmatmul.bf16.gmra.mxu0 %v1904
        %v2731 = vpop.f32.mrf.mxu0
        %v2732 = vadd.f32 0.0, %v2731
        %v2733 = vpop.f32.mrf.mxu0
        %v2734 = vadd.f32 0.0, %v2733
        %2735 = vmatmul.bf16.gmra.mxu0 %v1912
        %v2736 = vpop.f32.mrf.mxu0
        %v2737 = vadd.f32 0.0, %v2736
        %v2738 = vpop.f32.mrf.mxu0
        %v2739 = vadd.f32 0.0, %v2738
        %2740 = vmatmul.bf16.gmra.mxu0 %v1920
        %v2741 = vpop.f32.mrf.mxu0
        %v2742 = vadd.f32 0.0, %v2741
        %v2743 = vpop.f32.mrf.mxu0
        %v2744 = vadd.f32 0.0, %v2743
        %2745 = vmatmul.bf16.gmra.mxu0 %v1928
        %v2746 = vpop.f32.mrf.mxu0
        %v2747 = vadd.f32 0.0, %v2746
        %v2748 = vpop.f32.mrf.mxu0
        %v2749 = vadd.f32 0.0, %v2748
        %2750 = vmatmul.bf16.gmra.mxu0 %v1936
        %v2751 = vpop.f32.mrf.mxu0
        %v2752 = vadd.f32 0.0, %v2751
        %v2753 = vpop.f32.mrf.mxu0
        %v2754 = vadd.f32 0.0, %v2753
        %2755 = vmatmul.bf16.gmra.mxu0 %v1944
        %v2756 = vpop.f32.mrf.mxu0
        %v2757 = vadd.f32 0.0, %v2756
        %v2758 = vpop.f32.mrf.mxu0
        %v2759 = vadd.f32 0.0, %v2758
        %2760 = vdwg.mxu0
        %2761 = vmatpush.bf16.msra.mxu0 %v2479
        %2762 = vmatpush.bf16.msra.mxu0 %v2478
        %2763 = vmatpush.bf16.msra.mxu0 %v2477
        %2764 = vmatpush.bf16.msra.mxu0 %v2476
        %2765 = vmatpush.bf16.msra.mxu0 %v2475
        %2766 = vmatpush.bf16.msra.mxu0 %v2474
        %2767 = vmatpush.bf16.msra.mxu0 %v2473
        %2768 = vmatpush.bf16.msra.mxu0 %v2472
        %2769 = vmatmul.bf16.gmra.mxu0 %v1697
        %v2770 = vpop.f32.mrf.mxu0
        %v2771 = vadd.f32 %v2602, %v2770
        %v2772 = vpop.f32.mrf.mxu0
        %v2773 = vadd.f32 %v2604, %v2772
        %2774 = vmatmul.bf16.gmra.mxu0 %v1705
        %v2775 = vpop.f32.mrf.mxu0
        %v2776 = vadd.f32 %v2607, %v2775
        %v2777 = vpop.f32.mrf.mxu0
        %v2778 = vadd.f32 %v2609, %v2777
        %2779 = vmatmul.bf16.gmra.mxu0 %v1713
        %v2780 = vpop.f32.mrf.mxu0
        %v2781 = vadd.f32 %v2612, %v2780
        %v2782 = vpop.f32.mrf.mxu0
        %v2783 = vadd.f32 %v2614, %v2782
        %2784 = vmatmul.bf16.gmra.mxu0 %v1721
        %v2785 = vpop.f32.mrf.mxu0
        %v2786 = vadd.f32 %v2617, %v2785
        %v2787 = vpop.f32.mrf.mxu0
        %v2788 = vadd.f32 %v2619, %v2787
        %2789 = vmatmul.bf16.gmra.mxu0 %v1729
        %v2790 = vpop.f32.mrf.mxu0
        %v2791 = vadd.f32 %v2622, %v2790
        %v2792 = vpop.f32.mrf.mxu0
        %v2793 = vadd.f32 %v2624, %v2792
        %2794 = vmatmul.bf16.gmra.mxu0 %v1737
        %v2795 = vpop.f32.mrf.mxu0
        %v2796 = vadd.f32 %v2627, %v2795
        %v2797 = vpop.f32.mrf.mxu0
        %v2798 = vadd.f32 %v2629, %v2797
        %2799 = vmatmul.bf16.gmra.mxu0 %v1745
        %v2800 = vpop.f32.mrf.mxu0
        %v2801 = vadd.f32 %v2632, %v2800
        %v2802 = vpop.f32.mrf.mxu0
        %v2803 = vadd.f32 %v2634, %v2802
        %2804 = vmatmul.bf16.gmra.mxu0 %v1753
        %v2805 = vpop.f32.mrf.mxu0
        %v2806 = vadd.f32 %v2637, %v2805
        %v2807 = vpop.f32.mrf.mxu0
        %v2808 = vadd.f32 %v2639, %v2807
        %2809 = vmatmul.bf16.gmra.mxu0 %v1761
        %v2810 = vpop.f32.mrf.mxu0
        %v2811 = vadd.f32 %v2642, %v2810
        %v2812 = vpop.f32.mrf.mxu0
        %v2813 = vadd.f32 %v2644, %v2812
        %2814 = vmatmul.bf16.gmra.mxu0 %v1769
        %v2815 = vpop.f32.mrf.mxu0
        %v2816 = vadd.f32 %v2647, %v2815
        %v2817 = vpop.f32.mrf.mxu0
        %v2818 = vadd.f32 %v2649, %v2817
        %2819 = vmatmul.bf16.gmra.mxu0 %v1777
        %v2820 = vpop.f32.mrf.mxu0
        %v2821 = vadd.f32 %v2652, %v2820
        %v2822 = vpop.f32.mrf.mxu0
        %v2823 = vadd.f32 %v2654, %v2822
        %2824 = vmatmul.bf16.gmra.mxu0 %v1785
        %v2825 = vpop.f32.mrf.mxu0
        %v2826 = vadd.f32 %v2657, %v2825
        %v2827 = vpop.f32.mrf.mxu0
        %v2828 = vadd.f32 %v2659, %v2827
        %2829 = vmatmul.bf16.gmra.mxu0 %v1793
        %v2830 = vpop.f32.mrf.mxu0
        %v2831 = vadd.f32 %v2662, %v2830
        %v2832 = vpop.f32.mrf.mxu0
        %v2833 = vadd.f32 %v2664, %v2832
        %2834 = vmatmul.bf16.gmra.mxu0 %v1801
        %v2835 = vpop.f32.mrf.mxu0
        %v2836 = vadd.f32 %v2667, %v2835
        %v2837 = vpop.f32.mrf.mxu0
        %v2838 = vadd.f32 %v2669, %v2837
        %2839 = vmatmul.bf16.gmra.mxu0 %v1809
        %v2840 = vpop.f32.mrf.mxu0
        %v2841 = vadd.f32 %v2672, %v2840
        %v2842 = vpop.f32.mrf.mxu0
        %v2843 = vadd.f32 %v2674, %v2842
        %2844 = vmatmul.bf16.gmra.mxu0 %v1817
        %v2845 = vpop.f32.mrf.mxu0
        %v2846 = vadd.f32 %v2677, %v2845
        %v2847 = vpop.f32.mrf.mxu0
        %v2848 = vadd.f32 %v2679, %v2847
        %2849 = vmatmul.bf16.gmra.mxu0 %v1825
        %v2850 = vpop.f32.mrf.mxu0
        %v2851 = vadd.f32 %v2682, %v2850
        %v2852 = vpop.f32.mrf.mxu0
        %v2853 = vadd.f32 %v2684, %v2852
        %2854 = vmatmul.bf16.gmra.mxu0 %v1833
        %v2855 = vpop.f32.mrf.mxu0
        %v2856 = vadd.f32 %v2687, %v2855
        %v2857 = vpop.f32.mrf.mxu0
        %v2858 = vadd.f32 %v2689, %v2857
        %2859 = vmatmul.bf16.gmra.mxu0 %v1841
        %v2860 = vpop.f32.mrf.mxu0
        %v2861 = vadd.f32 %v2692, %v2860
        %v2862 = vpop.f32.mrf.mxu0
        %v2863 = vadd.f32 %v2694, %v2862
        %2864 = vmatmul.bf16.gmra.mxu0 %v1849
        %v2865 = vpop.f32.mrf.mxu0
        %v2866 = vadd.f32 %v2697, %v2865
        %v2867 = vpop.f32.mrf.mxu0
        %v2868 = vadd.f32 %v2699, %v2867
        %2869 = vmatmul.bf16.gmra.mxu0 %v1857
        %v2870 = vpop.f32.mrf.mxu0
        %v2871 = vadd.f32 %v2702, %v2870
        %v2872 = vpop.f32.mrf.mxu0
        %v2873 = vadd.f32 %v2704, %v2872
        %2874 = vmatmul.bf16.gmra.mxu0 %v1865
        %v2875 = vpop.f32.mrf.mxu0
        %v2876 = vadd.f32 %v2707, %v2875
        %v2877 = vpop.f32.mrf.mxu0
        %v2878 = vadd.f32 %v2709, %v2877
        %2879 = vmatmul.bf16.gmra.mxu0 %v1873
        %v2880 = vpop.f32.mrf.mxu0
        %v2881 = vadd.f32 %v2712, %v2880
        %v2882 = vpop.f32.mrf.mxu0
        %v2883 = vadd.f32 %v2714, %v2882
        %2884 = vmatmul.bf16.gmra.mxu0 %v1881
        %v2885 = vpop.f32.mrf.mxu0
        %v2886 = vadd.f32 %v2717, %v2885
        %v2887 = vpop.f32.mrf.mxu0
        %v2888 = vadd.f32 %v2719, %v2887
        %2889 = vmatmul.bf16.gmra.mxu0 %v1889
        %v2890 = vpop.f32.mrf.mxu0
        %v2891 = vadd.f32 %v2722, %v2890
        %v2892 = vpop.f32.mrf.mxu0
        %v2893 = vadd.f32 %v2724, %v2892
        %2894 = vmatmul.bf16.gmra.mxu0 %v1897
        %v2895 = vpop.f32.mrf.mxu0
        %v2896 = vadd.f32 %v2727, %v2895
        %v2897 = vpop.f32.mrf.mxu0
        %v2898 = vadd.f32 %v2729, %v2897
        %2899 = vmatmul.bf16.gmra.mxu0 %v1905
        %v2900 = vpop.f32.mrf.mxu0
        %v2901 = vadd.f32 %v2732, %v2900
        %v2902 = vpop.f32.mrf.mxu0
        %v2903 = vadd.f32 %v2734, %v2902
        %2904 = vmatmul.bf16.gmra.mxu0 %v1913
        %v2905 = vpop.f32.mrf.mxu0
        %v2906 = vadd.f32 %v2737, %v2905
        %v2907 = vpop.f32.mrf.mxu0
        %v2908 = vadd.f32 %v2739, %v2907
        %2909 = vmatmul.bf16.gmra.mxu0 %v1921
        %v2910 = vpop.f32.mrf.mxu0
        %v2911 = vadd.f32 %v2742, %v2910
        %v2912 = vpop.f32.mrf.mxu0
        %v2913 = vadd.f32 %v2744, %v2912
        %2914 = vmatmul.bf16.gmra.mxu0 %v1929
        %v2915 = vpop.f32.mrf.mxu0
        %v2916 = vadd.f32 %v2747, %v2915
        %v2917 = vpop.f32.mrf.mxu0
        %v2918 = vadd.f32 %v2749, %v2917
        %2919 = vmatmul.bf16.gmra.mxu0 %v1937
        %v2920 = vpop.f32.mrf.mxu0
        %v2921 = vadd.f32 %v2752, %v2920
        %v2922 = vpop.f32.mrf.mxu0
        %v2923 = vadd.f32 %v2754, %v2922
        %2924 = vmatmul.bf16.gmra.mxu0 %v1945
        %v2925 = vpop.f32.mrf.mxu0
        %v2926 = vadd.f32 %v2757, %v2925
        %v2927 = vpop.f32.mrf.mxu0
        %v2928 = vadd.f32 %v2759, %v2927
        %2929 = vdwg.mxu0
        %2930 = vmatpush.bf16.msra.mxu0 %v2487
        %2931 = vmatpush.bf16.msra.mxu0 %v2486
        %2932 = vmatpush.bf16.msra.mxu0 %v2485
        %2933 = vmatpush.bf16.msra.mxu0 %v2484
        %2934 = vmatpush.bf16.msra.mxu0 %v2483
        %2935 = vmatpush.bf16.msra.mxu0 %v2482
        %2936 = vmatpush.bf16.msra.mxu0 %v2481
        %2937 = vmatpush.bf16.msra.mxu0 %v2480
        %2938 = vmatmul.bf16.gmra.mxu0 %v1698
        %v2939 = vpop.f32.mrf.mxu0
        %v2940 = vadd.f32 %v2771, %v2939
        %v2941 = vpop.f32.mrf.mxu0
        %v2942 = vadd.f32 %v2773, %v2941
        %2943 = vmatmul.bf16.gmra.mxu0 %v1706
        %v2944 = vpop.f32.mrf.mxu0
        %v2945 = vadd.f32 %v2776, %v2944
        %v2946 = vpop.f32.mrf.mxu0
        %v2947 = vadd.f32 %v2778, %v2946
        %2948 = vmatmul.bf16.gmra.mxu0 %v1714
        %v2949 = vpop.f32.mrf.mxu0
        %v2950 = vadd.f32 %v2781, %v2949
        %v2951 = vpop.f32.mrf.mxu0
        %v2952 = vadd.f32 %v2783, %v2951
        %2953 = vmatmul.bf16.gmra.mxu0 %v1722
        %v2954 = vpop.f32.mrf.mxu0
        %v2955 = vadd.f32 %v2786, %v2954
        %v2956 = vpop.f32.mrf.mxu0
        %v2957 = vadd.f32 %v2788, %v2956
        %2958 = vmatmul.bf16.gmra.mxu0 %v1730
        %v2959 = vpop.f32.mrf.mxu0
        %v2960 = vadd.f32 %v2791, %v2959
        %v2961 = vpop.f32.mrf.mxu0
        %v2962 = vadd.f32 %v2793, %v2961
        %2963 = vmatmul.bf16.gmra.mxu0 %v1738
        %v2964 = vpop.f32.mrf.mxu0
        %v2965 = vadd.f32 %v2796, %v2964
        %v2966 = vpop.f32.mrf.mxu0
        %v2967 = vadd.f32 %v2798, %v2966
        %2968 = vmatmul.bf16.gmra.mxu0 %v1746
        %v2969 = vpop.f32.mrf.mxu0
        %v2970 = vadd.f32 %v2801, %v2969
        %v2971 = vpop.f32.mrf.mxu0
        %v2972 = vadd.f32 %v2803, %v2971
        %2973 = vmatmul.bf16.gmra.mxu0 %v1754
        %v2974 = vpop.f32.mrf.mxu0
        %v2975 = vadd.f32 %v2806, %v2974
        %v2976 = vpop.f32.mrf.mxu0
        %v2977 = vadd.f32 %v2808, %v2976
        %2978 = vmatmul.bf16.gmra.mxu0 %v1762
        %v2979 = vpop.f32.mrf.mxu0
        %v2980 = vadd.f32 %v2811, %v2979
        %v2981 = vpop.f32.mrf.mxu0
        %v2982 = vadd.f32 %v2813, %v2981
        %2983 = vmatmul.bf16.gmra.mxu0 %v1770
        %v2984 = vpop.f32.mrf.mxu0
        %v2985 = vadd.f32 %v2816, %v2984
        %v2986 = vpop.f32.mrf.mxu0
        %v2987 = vadd.f32 %v2818, %v2986
        %2988 = vmatmul.bf16.gmra.mxu0 %v1778
        %v2989 = vpop.f32.mrf.mxu0
        %v2990 = vadd.f32 %v2821, %v2989
        %v2991 = vpop.f32.mrf.mxu0
        %v2992 = vadd.f32 %v2823, %v2991
        %2993 = vmatmul.bf16.gmra.mxu0 %v1786
        %v2994 = vpop.f32.mrf.mxu0
        %v2995 = vadd.f32 %v2826, %v2994
        %v2996 = vpop.f32.mrf.mxu0
        %v2997 = vadd.f32 %v2828, %v2996
        %2998 = vmatmul.bf16.gmra.mxu0 %v1794
        %v2999 = vpop.f32.mrf.mxu0
        %v3000 = vadd.f32 %v2831, %v2999
        %v3001 = vpop.f32.mrf.mxu0
        %v3002 = vadd.f32 %v2833, %v3001
        %3003 = vmatmul.bf16.gmra.mxu0 %v1802
        %v3004 = vpop.f32.mrf.mxu0
        %v3005 = vadd.f32 %v2836, %v3004
        %v3006 = vpop.f32.mrf.mxu0
        %v3007 = vadd.f32 %v2838, %v3006
        %3008 = vmatmul.bf16.gmra.mxu0 %v1810
        %v3009 = vpop.f32.mrf.mxu0
        %v3010 = vadd.f32 %v2841, %v3009
        %v3011 = vpop.f32.mrf.mxu0
        %v3012 = vadd.f32 %v2843, %v3011
        %3013 = vmatmul.bf16.gmra.mxu0 %v1818
        %v3014 = vpop.f32.mrf.mxu0
        %v3015 = vadd.f32 %v2846, %v3014
        %v3016 = vpop.f32.mrf.mxu0
        %v3017 = vadd.f32 %v2848, %v3016
        %3018 = vmatmul.bf16.gmra.mxu0 %v1826
        %v3019 = vpop.f32.mrf.mxu0
        %v3020 = vadd.f32 %v2851, %v3019
        %v3021 = vpop.f32.mrf.mxu0
        %v3022 = vadd.f32 %v2853, %v3021
        %3023 = vmatmul.bf16.gmra.mxu0 %v1834
        %v3024 = vpop.f32.mrf.mxu0
        %v3025 = vadd.f32 %v2856, %v3024
        %v3026 = vpop.f32.mrf.mxu0
        %v3027 = vadd.f32 %v2858, %v3026
        %3028 = vmatmul.bf16.gmra.mxu0 %v1842
        %v3029 = vpop.f32.mrf.mxu0
        %v3030 = vadd.f32 %v2861, %v3029
        %v3031 = vpop.f32.mrf.mxu0
        %v3032 = vadd.f32 %v2863, %v3031
        %3033 = vmatmul.bf16.gmra.mxu0 %v1850
        %v3034 = vpop.f32.mrf.mxu0
        %v3035 = vadd.f32 %v2866, %v3034
        %v3036 = vpop.f32.mrf.mxu0
        %v3037 = vadd.f32 %v2868, %v3036
        %3038 = vmatmul.bf16.gmra.mxu0 %v1858
        %v3039 = vpop.f32.mrf.mxu0
        %v3040 = vadd.f32 %v2871, %v3039
        %v3041 = vpop.f32.mrf.mxu0
        %v3042 = vadd.f32 %v2873, %v3041
        %3043 = vmatmul.bf16.gmra.mxu0 %v1866
        %v3044 = vpop.f32.mrf.mxu0
        %v3045 = vadd.f32 %v2876, %v3044
        %v3046 = vpop.f32.mrf.mxu0
        %v3047 = vadd.f32 %v2878, %v3046
        %3048 = vmatmul.bf16.gmra.mxu0 %v1874
        %v3049 = vpop.f32.mrf.mxu0
        %v3050 = vadd.f32 %v2881, %v3049
        %v3051 = vpop.f32.mrf.mxu0
        %v3052 = vadd.f32 %v2883, %v3051
        %3053 = vmatmul.bf16.gmra.mxu0 %v1882
        %v3054 = vpop.f32.mrf.mxu0
        %v3055 = vadd.f32 %v2886, %v3054
        %v3056 = vpop.f32.mrf.mxu0
        %v3057 = vadd.f32 %v2888, %v3056
        %3058 = vmatmul.bf16.gmra.mxu0 %v1890
        %v3059 = vpop.f32.mrf.mxu0
        %v3060 = vadd.f32 %v2891, %v3059
        %v3061 = vpop.f32.mrf.mxu0
        %v3062 = vadd.f32 %v2893, %v3061
        %3063 = vmatmul.bf16.gmra.mxu0 %v1898
        %v3064 = vpop.f32.mrf.mxu0
        %v3065 = vadd.f32 %v2896, %v3064
        %v3066 = vpop.f32.mrf.mxu0
        %v3067 = vadd.f32 %v2898, %v3066
        %3068 = vmatmul.bf16.gmra.mxu0 %v1906
        %v3069 = vpop.f32.mrf.mxu0
        %v3070 = vadd.f32 %v2901, %v3069
        %v3071 = vpop.f32.mrf.mxu0
        %v3072 = vadd.f32 %v2903, %v3071
        %3073 = vmatmul.bf16.gmra.mxu0 %v1914
        %v3074 = vpop.f32.mrf.mxu0
        %v3075 = vadd.f32 %v2906, %v3074
        %v3076 = vpop.f32.mrf.mxu0
        %v3077 = vadd.f32 %v2908, %v3076
        %3078 = vmatmul.bf16.gmra.mxu0 %v1922
        %v3079 = vpop.f32.mrf.mxu0
        %v3080 = vadd.f32 %v2911, %v3079
        %v3081 = vpop.f32.mrf.mxu0
        %v3082 = vadd.f32 %v2913, %v3081
        %3083 = vmatmul.bf16.gmra.mxu0 %v1930
        %v3084 = vpop.f32.mrf.mxu0
        %v3085 = vadd.f32 %v2916, %v3084
        %v3086 = vpop.f32.mrf.mxu0
        %v3087 = vadd.f32 %v2918, %v3086
        %3088 = vmatmul.bf16.gmra.mxu0 %v1938
        %v3089 = vpop.f32.mrf.mxu0
        %v3090 = vadd.f32 %v2921, %v3089
        %v3091 = vpop.f32.mrf.mxu0
        %v3092 = vadd.f32 %v2923, %v3091
        %3093 = vmatmul.bf16.gmra.mxu0 %v1946
        %v3094 = vpop.f32.mrf.mxu0
        %v3095 = vadd.f32 %v2926, %v3094
        %v3096 = vpop.f32.mrf.mxu0
        %v3097 = vadd.f32 %v2928, %v3096
        %3098 = vdwg.mxu0
        %3099 = vmatpush.bf16.msra.mxu0 %v2495
        %3100 = vmatpush.bf16.msra.mxu0 %v2494
        %3101 = vmatpush.bf16.msra.mxu0 %v2493
        %3102 = vmatpush.bf16.msra.mxu0 %v2492
        %3103 = vmatpush.bf16.msra.mxu0 %v2491
        %3104 = vmatpush.bf16.msra.mxu0 %v2490
        %3105 = vmatpush.bf16.msra.mxu0 %v2489
        %3106 = vmatpush.bf16.msra.mxu0 %v2488
        %3107 = vmatmul.bf16.gmra.mxu0 %v1699
        %v3108 = vpop.f32.mrf.mxu0
        %v3109 = vadd.f32 %v2940, %v3108
        %v3110 = vpop.f32.mrf.mxu0
        %v3111 = vadd.f32 %v2942, %v3110
        %3112 = vmatmul.bf16.gmra.mxu0 %v1707
        %v3113 = vpop.f32.mrf.mxu0
        %v3114 = vadd.f32 %v2945, %v3113
        %v3115 = vpop.f32.mrf.mxu0
        %v3116 = vadd.f32 %v2947, %v3115
        %3117 = vmatmul.bf16.gmra.mxu0 %v1715
        %v3118 = vpop.f32.mrf.mxu0
        %v3119 = vadd.f32 %v2950, %v3118
        %v3120 = vpop.f32.mrf.mxu0
        %v3121 = vadd.f32 %v2952, %v3120
        %3122 = vmatmul.bf16.gmra.mxu0 %v1723
        %v3123 = vpop.f32.mrf.mxu0
        %v3124 = vadd.f32 %v2955, %v3123
        %v3125 = vpop.f32.mrf.mxu0
        %v3126 = vadd.f32 %v2957, %v3125
        %3127 = vmatmul.bf16.gmra.mxu0 %v1731
        %v3128 = vpop.f32.mrf.mxu0
        %v3129 = vadd.f32 %v2960, %v3128
        %v3130 = vpop.f32.mrf.mxu0
        %v3131 = vadd.f32 %v2962, %v3130
        %3132 = vmatmul.bf16.gmra.mxu0 %v1739
        %v3133 = vpop.f32.mrf.mxu0
        %v3134 = vadd.f32 %v2965, %v3133
        %v3135 = vpop.f32.mrf.mxu0
        %v3136 = vadd.f32 %v2967, %v3135
        %3137 = vmatmul.bf16.gmra.mxu0 %v1747
        %v3138 = vpop.f32.mrf.mxu0
        %v3139 = vadd.f32 %v2970, %v3138
        %v3140 = vpop.f32.mrf.mxu0
        %v3141 = vadd.f32 %v2972, %v3140
        %3142 = vmatmul.bf16.gmra.mxu0 %v1755
        %v3143 = vpop.f32.mrf.mxu0
        %v3144 = vadd.f32 %v2975, %v3143
        %v3145 = vpop.f32.mrf.mxu0
        %v3146 = vadd.f32 %v2977, %v3145
        %3147 = vmatmul.bf16.gmra.mxu0 %v1763
        %v3148 = vpop.f32.mrf.mxu0
        %v3149 = vadd.f32 %v2980, %v3148
        %v3150 = vpop.f32.mrf.mxu0
        %v3151 = vadd.f32 %v2982, %v3150
        %3152 = vmatmul.bf16.gmra.mxu0 %v1771
        %v3153 = vpop.f32.mrf.mxu0
        %v3154 = vadd.f32 %v2985, %v3153
        %v3155 = vpop.f32.mrf.mxu0
        %v3156 = vadd.f32 %v2987, %v3155
        %3157 = vmatmul.bf16.gmra.mxu0 %v1779
        %v3158 = vpop.f32.mrf.mxu0
        %v3159 = vadd.f32 %v2990, %v3158
        %v3160 = vpop.f32.mrf.mxu0
        %v3161 = vadd.f32 %v2992, %v3160
        %3162 = vmatmul.bf16.gmra.mxu0 %v1787
        %v3163 = vpop.f32.mrf.mxu0
        %v3164 = vadd.f32 %v2995, %v3163
        %v3165 = vpop.f32.mrf.mxu0
        %v3166 = vadd.f32 %v2997, %v3165
        %3167 = vmatmul.bf16.gmra.mxu0 %v1795
        %v3168 = vpop.f32.mrf.mxu0
        %v3169 = vadd.f32 %v3000, %v3168
        %v3170 = vpop.f32.mrf.mxu0
        %v3171 = vadd.f32 %v3002, %v3170
        %3172 = vmatmul.bf16.gmra.mxu0 %v1803
        %v3173 = vpop.f32.mrf.mxu0
        %v3174 = vadd.f32 %v3005, %v3173
        %v3175 = vpop.f32.mrf.mxu0
        %v3176 = vadd.f32 %v3007, %v3175
        %3177 = vmatmul.bf16.gmra.mxu0 %v1811
        %v3178 = vpop.f32.mrf.mxu0
        %v3179 = vadd.f32 %v3010, %v3178
        %v3180 = vpop.f32.mrf.mxu0
        %v3181 = vadd.f32 %v3012, %v3180
        %3182 = vmatmul.bf16.gmra.mxu0 %v1819
        %v3183 = vpop.f32.mrf.mxu0
        %v3184 = vadd.f32 %v3015, %v3183
        %v3185 = vpop.f32.mrf.mxu0
        %v3186 = vadd.f32 %v3017, %v3185
        %3187 = vmatmul.bf16.gmra.mxu0 %v1827
        %v3188 = vpop.f32.mrf.mxu0
        %v3189 = vadd.f32 %v3020, %v3188
        %v3190 = vpop.f32.mrf.mxu0
        %v3191 = vadd.f32 %v3022, %v3190
        %3192 = vmatmul.bf16.gmra.mxu0 %v1835
        %v3193 = vpop.f32.mrf.mxu0
        %v3194 = vadd.f32 %v3025, %v3193
        %v3195 = vpop.f32.mrf.mxu0
        %v3196 = vadd.f32 %v3027, %v3195
        %3197 = vmatmul.bf16.gmra.mxu0 %v1843
        %v3198 = vpop.f32.mrf.mxu0
        %v3199 = vadd.f32 %v3030, %v3198
        %v3200 = vpop.f32.mrf.mxu0
        %v3201 = vadd.f32 %v3032, %v3200
        %3202 = vmatmul.bf16.gmra.mxu0 %v1851
        %v3203 = vpop.f32.mrf.mxu0
        %v3204 = vadd.f32 %v3035, %v3203
        %v3205 = vpop.f32.mrf.mxu0
        %v3206 = vadd.f32 %v3037, %v3205
        %3207 = vmatmul.bf16.gmra.mxu0 %v1859
        %v3208 = vpop.f32.mrf.mxu0
        %v3209 = vadd.f32 %v3040, %v3208
        %v3210 = vpop.f32.mrf.mxu0
        %v3211 = vadd.f32 %v3042, %v3210
        %3212 = vmatmul.bf16.gmra.mxu0 %v1867
        %v3213 = vpop.f32.mrf.mxu0
        %v3214 = vadd.f32 %v3045, %v3213
        %v3215 = vpop.f32.mrf.mxu0
        %v3216 = vadd.f32 %v3047, %v3215
        %3217 = vmatmul.bf16.gmra.mxu0 %v1875
        %v3218 = vpop.f32.mrf.mxu0
        %v3219 = vadd.f32 %v3050, %v3218
        %v3220 = vpop.f32.mrf.mxu0
        %v3221 = vadd.f32 %v3052, %v3220
        %3222 = vmatmul.bf16.gmra.mxu0 %v1883
        %v3223 = vpop.f32.mrf.mxu0
        %v3224 = vadd.f32 %v3055, %v3223
        %v3225 = vpop.f32.mrf.mxu0
        %v3226 = vadd.f32 %v3057, %v3225
        %3227 = vmatmul.bf16.gmra.mxu0 %v1891
        %v3228 = vpop.f32.mrf.mxu0
        %v3229 = vadd.f32 %v3060, %v3228
        %v3230 = vpop.f32.mrf.mxu0
        %v3231 = vadd.f32 %v3062, %v3230
        %3232 = vmatmul.bf16.gmra.mxu0 %v1899
        %v3233 = vpop.f32.mrf.mxu0
        %v3234 = vadd.f32 %v3065, %v3233
        %v3235 = vpop.f32.mrf.mxu0
        %v3236 = vadd.f32 %v3067, %v3235
        %3237 = vmatmul.bf16.gmra.mxu0 %v1907
        %v3238 = vpop.f32.mrf.mxu0
        %v3239 = vadd.f32 %v3070, %v3238
        %v3240 = vpop.f32.mrf.mxu0
        %v3241 = vadd.f32 %v3072, %v3240
        %3242 = vmatmul.bf16.gmra.mxu0 %v1915
        %v3243 = vpop.f32.mrf.mxu0
        %v3244 = vadd.f32 %v3075, %v3243
        %v3245 = vpop.f32.mrf.mxu0
        %v3246 = vadd.f32 %v3077, %v3245
        %3247 = vmatmul.bf16.gmra.mxu0 %v1923
        %v3248 = vpop.f32.mrf.mxu0
        %v3249 = vadd.f32 %v3080, %v3248
        %v3250 = vpop.f32.mrf.mxu0
        %v3251 = vadd.f32 %v3082, %v3250
        %3252 = vmatmul.bf16.gmra.mxu0 %v1931
        %v3253 = vpop.f32.mrf.mxu0
        %v3254 = vadd.f32 %v3085, %v3253
        %v3255 = vpop.f32.mrf.mxu0
        %v3256 = vadd.f32 %v3087, %v3255
        %3257 = vmatmul.bf16.gmra.mxu0 %v1939
        %v3258 = vpop.f32.mrf.mxu0
        %v3259 = vadd.f32 %v3090, %v3258
        %v3260 = vpop.f32.mrf.mxu0
        %v3261 = vadd.f32 %v3092, %v3260
        %3262 = vmatmul.bf16.gmra.mxu0 %v1947
        %v3263 = vpop.f32.mrf.mxu0
        %v3264 = vadd.f32 %v3095, %v3263
        %v3265 = vpop.f32.mrf.mxu0
        %v3266 = vadd.f32 %v3097, %v3265
        %3267 = vdwg.mxu0
        %3268 = vmatpush.bf16.msra.mxu0 %v2503
        %3269 = vmatpush.bf16.msra.mxu0 %v2502
        %3270 = vmatpush.bf16.msra.mxu0 %v2501
        %3271 = vmatpush.bf16.msra.mxu0 %v2500
        %3272 = vmatpush.bf16.msra.mxu0 %v2499
        %3273 = vmatpush.bf16.msra.mxu0 %v2498
        %3274 = vmatpush.bf16.msra.mxu0 %v2497
        %3275 = vmatpush.bf16.msra.mxu0 %v2496
        %3276 = vmatmul.bf16.gmra.mxu0 %v1700
        %v3277 = vpop.f32.mrf.mxu0
        %v3278 = vadd.f32 %v3109, %v3277
        %v3279 = vpop.f32.mrf.mxu0
        %v3280 = vadd.f32 %v3111, %v3279
        %3281 = vmatmul.bf16.gmra.mxu0 %v1708
        %v3282 = vpop.f32.mrf.mxu0
        %v3283 = vadd.f32 %v3114, %v3282
        %v3284 = vpop.f32.mrf.mxu0
        %v3285 = vadd.f32 %v3116, %v3284
        %3286 = vmatmul.bf16.gmra.mxu0 %v1716
        %v3287 = vpop.f32.mrf.mxu0
        %v3288 = vadd.f32 %v3119, %v3287
        %v3289 = vpop.f32.mrf.mxu0
        %v3290 = vadd.f32 %v3121, %v3289
        %3291 = vmatmul.bf16.gmra.mxu0 %v1724
        %v3292 = vpop.f32.mrf.mxu0
        %v3293 = vadd.f32 %v3124, %v3292
        %v3294 = vpop.f32.mrf.mxu0
        %v3295 = vadd.f32 %v3126, %v3294
        %3296 = vmatmul.bf16.gmra.mxu0 %v1732
        %v3297 = vpop.f32.mrf.mxu0
        %v3298 = vadd.f32 %v3129, %v3297
        %v3299 = vpop.f32.mrf.mxu0
        %v3300 = vadd.f32 %v3131, %v3299
        %3301 = vmatmul.bf16.gmra.mxu0 %v1740
        %v3302 = vpop.f32.mrf.mxu0
        %v3303 = vadd.f32 %v3134, %v3302
        %v3304 = vpop.f32.mrf.mxu0
        %v3305 = vadd.f32 %v3136, %v3304
        %3306 = vmatmul.bf16.gmra.mxu0 %v1748
        %v3307 = vpop.f32.mrf.mxu0
        %v3308 = vadd.f32 %v3139, %v3307
        %v3309 = vpop.f32.mrf.mxu0
        %v3310 = vadd.f32 %v3141, %v3309
        %3311 = vmatmul.bf16.gmra.mxu0 %v1756
        %v3312 = vpop.f32.mrf.mxu0
        %v3313 = vadd.f32 %v3144, %v3312
        %v3314 = vpop.f32.mrf.mxu0
        %v3315 = vadd.f32 %v3146, %v3314
        %3316 = vmatmul.bf16.gmra.mxu0 %v1764
        %v3317 = vpop.f32.mrf.mxu0
        %v3318 = vadd.f32 %v3149, %v3317
        %v3319 = vpop.f32.mrf.mxu0
        %v3320 = vadd.f32 %v3151, %v3319
        %3321 = vmatmul.bf16.gmra.mxu0 %v1772
        %v3322 = vpop.f32.mrf.mxu0
        %v3323 = vadd.f32 %v3154, %v3322
        %v3324 = vpop.f32.mrf.mxu0
        %v3325 = vadd.f32 %v3156, %v3324
        %3326 = vmatmul.bf16.gmra.mxu0 %v1780
        %v3327 = vpop.f32.mrf.mxu0
        %v3328 = vadd.f32 %v3159, %v3327
        %v3329 = vpop.f32.mrf.mxu0
        %v3330 = vadd.f32 %v3161, %v3329
        %3331 = vmatmul.bf16.gmra.mxu0 %v1788
        %v3332 = vpop.f32.mrf.mxu0
        %v3333 = vadd.f32 %v3164, %v3332
        %v3334 = vpop.f32.mrf.mxu0
        %v3335 = vadd.f32 %v3166, %v3334
        %3336 = vmatmul.bf16.gmra.mxu0 %v1796
        %v3337 = vpop.f32.mrf.mxu0
        %v3338 = vadd.f32 %v3169, %v3337
        %v3339 = vpop.f32.mrf.mxu0
        %v3340 = vadd.f32 %v3171, %v3339
        %3341 = vmatmul.bf16.gmra.mxu0 %v1804
        %v3342 = vpop.f32.mrf.mxu0
        %v3343 = vadd.f32 %v3174, %v3342
        %v3344 = vpop.f32.mrf.mxu0
        %v3345 = vadd.f32 %v3176, %v3344
        %3346 = vmatmul.bf16.gmra.mxu0 %v1812
        %v3347 = vpop.f32.mrf.mxu0
        %v3348 = vadd.f32 %v3179, %v3347
        %v3349 = vpop.f32.mrf.mxu0
        %v3350 = vadd.f32 %v3181, %v3349
        %3351 = vmatmul.bf16.gmra.mxu0 %v1820
        %v3352 = vpop.f32.mrf.mxu0
        %v3353 = vadd.f32 %v3184, %v3352
        %v3354 = vpop.f32.mrf.mxu0
        %v3355 = vadd.f32 %v3186, %v3354
        %3356 = vmatmul.bf16.gmra.mxu0 %v1828
        %v3357 = vpop.f32.mrf.mxu0
        %v3358 = vadd.f32 %v3189, %v3357
        %v3359 = vpop.f32.mrf.mxu0
        %v3360 = vadd.f32 %v3191, %v3359
        %3361 = vmatmul.bf16.gmra.mxu0 %v1836
        %v3362 = vpop.f32.mrf.mxu0
        %v3363 = vadd.f32 %v3194, %v3362
        %v3364 = vpop.f32.mrf.mxu0
        %v3365 = vadd.f32 %v3196, %v3364
        %3366 = vmatmul.bf16.gmra.mxu0 %v1844
        %v3367 = vpop.f32.mrf.mxu0
        %v3368 = vadd.f32 %v3199, %v3367
        %v3369 = vpop.f32.mrf.mxu0
        %v3370 = vadd.f32 %v3201, %v3369
        %3371 = vmatmul.bf16.gmra.mxu0 %v1852
        %v3372 = vpop.f32.mrf.mxu0
        %v3373 = vadd.f32 %v3204, %v3372
        %v3374 = vpop.f32.mrf.mxu0
        %v3375 = vadd.f32 %v3206, %v3374
        %3376 = vmatmul.bf16.gmra.mxu0 %v1860
        %v3377 = vpop.f32.mrf.mxu0
        %v3378 = vadd.f32 %v3209, %v3377
        %v3379 = vpop.f32.mrf.mxu0
        %v3380 = vadd.f32 %v3211, %v3379
        %3381 = vmatmul.bf16.gmra.mxu0 %v1868
        %v3382 = vpop.f32.mrf.mxu0
        %v3383 = vadd.f32 %v3214, %v3382
        %v3384 = vpop.f32.mrf.mxu0
        %v3385 = vadd.f32 %v3216, %v3384
        %3386 = vmatmul.bf16.gmra.mxu0 %v1876
        %v3387 = vpop.f32.mrf.mxu0
        %v3388 = vadd.f32 %v3219, %v3387
        %v3389 = vpop.f32.mrf.mxu0
        %v3390 = vadd.f32 %v3221, %v3389
        %3391 = vmatmul.bf16.gmra.mxu0 %v1884
        %v3392 = vpop.f32.mrf.mxu0
        %v3393 = vadd.f32 %v3224, %v3392
        %v3394 = vpop.f32.mrf.mxu0
        %v3395 = vadd.f32 %v3226, %v3394
        %3396 = vmatmul.bf16.gmra.mxu0 %v1892
        %v3397 = vpop.f32.mrf.mxu0
        %v3398 = vadd.f32 %v3229, %v3397
        %v3399 = vpop.f32.mrf.mxu0
        %v3400 = vadd.f32 %v3231, %v3399
        %3401 = vmatmul.bf16.gmra.mxu0 %v1900
        %v3402 = vpop.f32.mrf.mxu0
        %v3403 = vadd.f32 %v3234, %v3402
        %v3404 = vpop.f32.mrf.mxu0
        %v3405 = vadd.f32 %v3236, %v3404
        %3406 = vmatmul.bf16.gmra.mxu0 %v1908
        %v3407 = vpop.f32.mrf.mxu0
        %v3408 = vadd.f32 %v3239, %v3407
        %v3409 = vpop.f32.mrf.mxu0
        %v3410 = vadd.f32 %v3241, %v3409
        %3411 = vmatmul.bf16.gmra.mxu0 %v1916
        %v3412 = vpop.f32.mrf.mxu0
        %v3413 = vadd.f32 %v3244, %v3412
        %v3414 = vpop.f32.mrf.mxu0
        %v3415 = vadd.f32 %v3246, %v3414
        %3416 = vmatmul.bf16.gmra.mxu0 %v1924
        %v3417 = vpop.f32.mrf.mxu0
        %v3418 = vadd.f32 %v3249, %v3417
        %v3419 = vpop.f32.mrf.mxu0
        %v3420 = vadd.f32 %v3251, %v3419
        %3421 = vmatmul.bf16.gmra.mxu0 %v1932
        %v3422 = vpop.f32.mrf.mxu0
        %v3423 = vadd.f32 %v3254, %v3422
        %v3424 = vpop.f32.mrf.mxu0
        %v3425 = vadd.f32 %v3256, %v3424
        %3426 = vmatmul.bf16.gmra.mxu0 %v1940
        %v3427 = vpop.f32.mrf.mxu0
        %v3428 = vadd.f32 %v3259, %v3427
        %v3429 = vpop.f32.mrf.mxu0
        %v3430 = vadd.f32 %v3261, %v3429
        %3431 = vmatmul.bf16.gmra.mxu0 %v1948
        %v3432 = vpop.f32.mrf.mxu0
        %v3433 = vadd.f32 %v3264, %v3432
        %v3434 = vpop.f32.mrf.mxu0
        %v3435 = vadd.f32 %v3266, %v3434
        %3436 = vdwg.mxu0
        %3437 = vmatpush.bf16.msra.mxu0 %v2511
        %3438 = vmatpush.bf16.msra.mxu0 %v2510
        %3439 = vmatpush.bf16.msra.mxu0 %v2509
        %3440 = vmatpush.bf16.msra.mxu0 %v2508
        %3441 = vmatpush.bf16.msra.mxu0 %v2507
        %3442 = vmatpush.bf16.msra.mxu0 %v2506
        %3443 = vmatpush.bf16.msra.mxu0 %v2505
        %3444 = vmatpush.bf16.msra.mxu0 %v2504
        %3445 = vmatmul.bf16.gmra.mxu0 %v1701
        %v3446 = vpop.f32.mrf.mxu0
        %v3447 = vadd.f32 %v3278, %v3446
        %v3448 = vpop.f32.mrf.mxu0
        %v3449 = vadd.f32 %v3280, %v3448
        %3450 = vmatmul.bf16.gmra.mxu0 %v1709
        %v3451 = vpop.f32.mrf.mxu0
        %v3452 = vadd.f32 %v3283, %v3451
        %v3453 = vpop.f32.mrf.mxu0
        %v3454 = vadd.f32 %v3285, %v3453
        %3455 = vmatmul.bf16.gmra.mxu0 %v1717
        %v3456 = vpop.f32.mrf.mxu0
        %v3457 = vadd.f32 %v3288, %v3456
        %v3458 = vpop.f32.mrf.mxu0
        %v3459 = vadd.f32 %v3290, %v3458
        %3460 = vmatmul.bf16.gmra.mxu0 %v1725
        %v3461 = vpop.f32.mrf.mxu0
        %v3462 = vadd.f32 %v3293, %v3461
        %v3463 = vpop.f32.mrf.mxu0
        %v3464 = vadd.f32 %v3295, %v3463
        %3465 = vmatmul.bf16.gmra.mxu0 %v1733
        %v3466 = vpop.f32.mrf.mxu0
        %v3467 = vadd.f32 %v3298, %v3466
        %v3468 = vpop.f32.mrf.mxu0
        %v3469 = vadd.f32 %v3300, %v3468
        %3470 = vmatmul.bf16.gmra.mxu0 %v1741
        %v3471 = vpop.f32.mrf.mxu0
        %v3472 = vadd.f32 %v3303, %v3471
        %v3473 = vpop.f32.mrf.mxu0
        %v3474 = vadd.f32 %v3305, %v3473
        %3475 = vmatmul.bf16.gmra.mxu0 %v1749
        %v3476 = vpop.f32.mrf.mxu0
        %v3477 = vadd.f32 %v3308, %v3476
        %v3478 = vpop.f32.mrf.mxu0
        %v3479 = vadd.f32 %v3310, %v3478
        %3480 = vmatmul.bf16.gmra.mxu0 %v1757
        %v3481 = vpop.f32.mrf.mxu0
        %v3482 = vadd.f32 %v3313, %v3481
        %v3483 = vpop.f32.mrf.mxu0
        %v3484 = vadd.f32 %v3315, %v3483
        %3485 = vmatmul.bf16.gmra.mxu0 %v1765
        %v3486 = vpop.f32.mrf.mxu0
        %v3487 = vadd.f32 %v3318, %v3486
        %v3488 = vpop.f32.mrf.mxu0
        %v3489 = vadd.f32 %v3320, %v3488
        %3490 = vmatmul.bf16.gmra.mxu0 %v1773
        %v3491 = vpop.f32.mrf.mxu0
        %v3492 = vadd.f32 %v3323, %v3491
        %v3493 = vpop.f32.mrf.mxu0
        %v3494 = vadd.f32 %v3325, %v3493
        %3495 = vmatmul.bf16.gmra.mxu0 %v1781
        %v3496 = vpop.f32.mrf.mxu0
        %v3497 = vadd.f32 %v3328, %v3496
        %v3498 = vpop.f32.mrf.mxu0
        %v3499 = vadd.f32 %v3330, %v3498
        %3500 = vmatmul.bf16.gmra.mxu0 %v1789
        %v3501 = vpop.f32.mrf.mxu0
        %v3502 = vadd.f32 %v3333, %v3501
        %v3503 = vpop.f32.mrf.mxu0
        %v3504 = vadd.f32 %v3335, %v3503
        %3505 = vmatmul.bf16.gmra.mxu0 %v1797
        %v3506 = vpop.f32.mrf.mxu0
        %v3507 = vadd.f32 %v3338, %v3506
        %v3508 = vpop.f32.mrf.mxu0
        %v3509 = vadd.f32 %v3340, %v3508
        %3510 = vmatmul.bf16.gmra.mxu0 %v1805
        %v3511 = vpop.f32.mrf.mxu0
        %v3512 = vadd.f32 %v3343, %v3511
        %v3513 = vpop.f32.mrf.mxu0
        %v3514 = vadd.f32 %v3345, %v3513
        %3515 = vmatmul.bf16.gmra.mxu0 %v1813
        %v3516 = vpop.f32.mrf.mxu0
        %v3517 = vadd.f32 %v3348, %v3516
        %v3518 = vpop.f32.mrf.mxu0
        %v3519 = vadd.f32 %v3350, %v3518
        %3520 = vmatmul.bf16.gmra.mxu0 %v1821
        %v3521 = vpop.f32.mrf.mxu0
        %v3522 = vadd.f32 %v3353, %v3521
        %v3523 = vpop.f32.mrf.mxu0
        %v3524 = vadd.f32 %v3355, %v3523
        %3525 = vmatmul.bf16.gmra.mxu0 %v1829
        %v3526 = vpop.f32.mrf.mxu0
        %v3527 = vadd.f32 %v3358, %v3526
        %v3528 = vpop.f32.mrf.mxu0
        %v3529 = vadd.f32 %v3360, %v3528
        %3530 = vmatmul.bf16.gmra.mxu0 %v1837
        %v3531 = vpop.f32.mrf.mxu0
        %v3532 = vadd.f32 %v3363, %v3531
        %v3533 = vpop.f32.mrf.mxu0
        %v3534 = vadd.f32 %v3365, %v3533
        %3535 = vmatmul.bf16.gmra.mxu0 %v1845
        %v3536 = vpop.f32.mrf.mxu0
        %v3537 = vadd.f32 %v3368, %v3536
        %v3538 = vpop.f32.mrf.mxu0
        %v3539 = vadd.f32 %v3370, %v3538
        %3540 = vmatmul.bf16.gmra.mxu0 %v1853
        %v3541 = vpop.f32.mrf.mxu0
        %v3542 = vadd.f32 %v3373, %v3541
        %v3543 = vpop.f32.mrf.mxu0
        %v3544 = vadd.f32 %v3375, %v3543
        %3545 = vmatmul.bf16.gmra.mxu0 %v1861
        %v3546 = vpop.f32.mrf.mxu0
        %v3547 = vadd.f32 %v3378, %v3546
        %v3548 = vpop.f32.mrf.mxu0
        %v3549 = vadd.f32 %v3380, %v3548
        %3550 = vmatmul.bf16.gmra.mxu0 %v1869
        %v3551 = vpop.f32.mrf.mxu0
        %v3552 = vadd.f32 %v3383, %v3551
        %v3553 = vpop.f32.mrf.mxu0
        %v3554 = vadd.f32 %v3385, %v3553
        %3555 = vmatmul.bf16.gmra.mxu0 %v1877
        %v3556 = vpop.f32.mrf.mxu0
        %v3557 = vadd.f32 %v3388, %v3556
        %v3558 = vpop.f32.mrf.mxu0
        %v3559 = vadd.f32 %v3390, %v3558
        %3560 = vmatmul.bf16.gmra.mxu0 %v1885
        %v3561 = vpop.f32.mrf.mxu0
        %v3562 = vadd.f32 %v3393, %v3561
        %v3563 = vpop.f32.mrf.mxu0
        %v3564 = vadd.f32 %v3395, %v3563
        %3565 = vmatmul.bf16.gmra.mxu0 %v1893
        %v3566 = vpop.f32.mrf.mxu0
        %v3567 = vadd.f32 %v3398, %v3566
        %v3568 = vpop.f32.mrf.mxu0
        %v3569 = vadd.f32 %v3400, %v3568
        %3570 = vmatmul.bf16.gmra.mxu0 %v1901
        %v3571 = vpop.f32.mrf.mxu0
        %v3572 = vadd.f32 %v3403, %v3571
        %v3573 = vpop.f32.mrf.mxu0
        %v3574 = vadd.f32 %v3405, %v3573
        %3575 = vmatmul.bf16.gmra.mxu0 %v1909
        %v3576 = vpop.f32.mrf.mxu0
        %v3577 = vadd.f32 %v3408, %v3576
        %v3578 = vpop.f32.mrf.mxu0
        %v3579 = vadd.f32 %v3410, %v3578
        %3580 = vmatmul.bf16.gmra.mxu0 %v1917
        %v3581 = vpop.f32.mrf.mxu0
        %v3582 = vadd.f32 %v3413, %v3581
        %v3583 = vpop.f32.mrf.mxu0
        %v3584 = vadd.f32 %v3415, %v3583
        %3585 = vmatmul.bf16.gmra.mxu0 %v1925
        %v3586 = vpop.f32.mrf.mxu0
        %v3587 = vadd.f32 %v3418, %v3586
        %v3588 = vpop.f32.mrf.mxu0
        %v3589 = vadd.f32 %v3420, %v3588
        %3590 = vmatmul.bf16.gmra.mxu0 %v1933
        %v3591 = vpop.f32.mrf.mxu0
        %v3592 = vadd.f32 %v3423, %v3591
        %v3593 = vpop.f32.mrf.mxu0
        %v3594 = vadd.f32 %v3425, %v3593
        %3595 = vmatmul.bf16.gmra.mxu0 %v1941
        %v3596 = vpop.f32.mrf.mxu0
        %v3597 = vadd.f32 %v3428, %v3596
        %v3598 = vpop.f32.mrf.mxu0
        %v3599 = vadd.f32 %v3430, %v3598
        %3600 = vmatmul.bf16.gmra.mxu0 %v1949
        %v3601 = vpop.f32.mrf.mxu0
        %v3602 = vadd.f32 %v3433, %v3601
        %v3603 = vpop.f32.mrf.mxu0
        %v3604 = vadd.f32 %v3435, %v3603
        %3605 = vdwg.mxu0
        %3606 = vmatpush.bf16.msra.mxu0 %v2519
        %3607 = vmatpush.bf16.msra.mxu0 %v2518
        %3608 = vmatpush.bf16.msra.mxu0 %v2517
        %3609 = vmatpush.bf16.msra.mxu0 %v2516
        %3610 = vmatpush.bf16.msra.mxu0 %v2515
        %3611 = vmatpush.bf16.msra.mxu0 %v2514
        %3612 = vmatpush.bf16.msra.mxu0 %v2513
        %3613 = vmatpush.bf16.msra.mxu0 %v2512
        %3614 = vmatmul.bf16.gmra.mxu0 %v1702
        %v3615 = vpop.f32.mrf.mxu0
        %v3616 = vadd.f32 %v3447, %v3615
        %v3617 = vpop.f32.mrf.mxu0
        %v3618 = vadd.f32 %v3449, %v3617
        %3619 = vmatmul.bf16.gmra.mxu0 %v1710
        %v3620 = vpop.f32.mrf.mxu0
        %v3621 = vadd.f32 %v3452, %v3620
        %v3622 = vpop.f32.mrf.mxu0
        %v3623 = vadd.f32 %v3454, %v3622
        %3624 = vmatmul.bf16.gmra.mxu0 %v1718
        %v3625 = vpop.f32.mrf.mxu0
        %v3626 = vadd.f32 %v3457, %v3625
        %v3627 = vpop.f32.mrf.mxu0
        %v3628 = vadd.f32 %v3459, %v3627
        %3629 = vmatmul.bf16.gmra.mxu0 %v1726
        %v3630 = vpop.f32.mrf.mxu0
        %v3631 = vadd.f32 %v3462, %v3630
        %v3632 = vpop.f32.mrf.mxu0
        %v3633 = vadd.f32 %v3464, %v3632
        %3634 = vmatmul.bf16.gmra.mxu0 %v1734
        %v3635 = vpop.f32.mrf.mxu0
        %v3636 = vadd.f32 %v3467, %v3635
        %v3637 = vpop.f32.mrf.mxu0
        %v3638 = vadd.f32 %v3469, %v3637
        %3639 = vmatmul.bf16.gmra.mxu0 %v1742
        %v3640 = vpop.f32.mrf.mxu0
        %v3641 = vadd.f32 %v3472, %v3640
        %v3642 = vpop.f32.mrf.mxu0
        %v3643 = vadd.f32 %v3474, %v3642
        %3644 = vmatmul.bf16.gmra.mxu0 %v1750
        %v3645 = vpop.f32.mrf.mxu0
        %v3646 = vadd.f32 %v3477, %v3645
        %v3647 = vpop.f32.mrf.mxu0
        %v3648 = vadd.f32 %v3479, %v3647
        %3649 = vmatmul.bf16.gmra.mxu0 %v1758
        %v3650 = vpop.f32.mrf.mxu0
        %v3651 = vadd.f32 %v3482, %v3650
        %v3652 = vpop.f32.mrf.mxu0
        %v3653 = vadd.f32 %v3484, %v3652
        %3654 = vmatmul.bf16.gmra.mxu0 %v1766
        %v3655 = vpop.f32.mrf.mxu0
        %v3656 = vadd.f32 %v3487, %v3655
        %v3657 = vpop.f32.mrf.mxu0
        %v3658 = vadd.f32 %v3489, %v3657
        %3659 = vmatmul.bf16.gmra.mxu0 %v1774
        %v3660 = vpop.f32.mrf.mxu0
        %v3661 = vadd.f32 %v3492, %v3660
        %v3662 = vpop.f32.mrf.mxu0
        %v3663 = vadd.f32 %v3494, %v3662
        %3664 = vmatmul.bf16.gmra.mxu0 %v1782
        %v3665 = vpop.f32.mrf.mxu0
        %v3666 = vadd.f32 %v3497, %v3665
        %v3667 = vpop.f32.mrf.mxu0
        %v3668 = vadd.f32 %v3499, %v3667
        %3669 = vmatmul.bf16.gmra.mxu0 %v1790
        %v3670 = vpop.f32.mrf.mxu0
        %v3671 = vadd.f32 %v3502, %v3670
        %v3672 = vpop.f32.mrf.mxu0
        %v3673 = vadd.f32 %v3504, %v3672
        %3674 = vmatmul.bf16.gmra.mxu0 %v1798
        %v3675 = vpop.f32.mrf.mxu0
        %v3676 = vadd.f32 %v3507, %v3675
        %v3677 = vpop.f32.mrf.mxu0
        %v3678 = vadd.f32 %v3509, %v3677
        %3679 = vmatmul.bf16.gmra.mxu0 %v1806
        %v3680 = vpop.f32.mrf.mxu0
        %v3681 = vadd.f32 %v3512, %v3680
        %v3682 = vpop.f32.mrf.mxu0
        %v3683 = vadd.f32 %v3514, %v3682
        %3684 = vmatmul.bf16.gmra.mxu0 %v1814
        %v3685 = vpop.f32.mrf.mxu0
        %v3686 = vadd.f32 %v3517, %v3685
        %v3687 = vpop.f32.mrf.mxu0
        %v3688 = vadd.f32 %v3519, %v3687
        %3689 = vmatmul.bf16.gmra.mxu0 %v1822
        %v3690 = vpop.f32.mrf.mxu0
        %v3691 = vadd.f32 %v3522, %v3690
        %v3692 = vpop.f32.mrf.mxu0
        %v3693 = vadd.f32 %v3524, %v3692
        %3694 = vmatmul.bf16.gmra.mxu0 %v1830
        %v3695 = vpop.f32.mrf.mxu0
        %v3696 = vadd.f32 %v3527, %v3695
        %v3697 = vpop.f32.mrf.mxu0
        %v3698 = vadd.f32 %v3529, %v3697
        %3699 = vmatmul.bf16.gmra.mxu0 %v1838
        %v3700 = vpop.f32.mrf.mxu0
        %v3701 = vadd.f32 %v3532, %v3700
        %v3702 = vpop.f32.mrf.mxu0
        %v3703 = vadd.f32 %v3534, %v3702
        %3704 = vmatmul.bf16.gmra.mxu0 %v1846
        %v3705 = vpop.f32.mrf.mxu0
        %v3706 = vadd.f32 %v3537, %v3705
        %v3707 = vpop.f32.mrf.mxu0
        %v3708 = vadd.f32 %v3539, %v3707
        %3709 = vmatmul.bf16.gmra.mxu0 %v1854
        %v3710 = vpop.f32.mrf.mxu0
        %v3711 = vadd.f32 %v3542, %v3710
        %v3712 = vpop.f32.mrf.mxu0
        %v3713 = vadd.f32 %v3544, %v3712
        %3714 = vmatmul.bf16.gmra.mxu0 %v1862
        %v3715 = vpop.f32.mrf.mxu0
        %v3716 = vadd.f32 %v3547, %v3715
        %v3717 = vpop.f32.mrf.mxu0
        %v3718 = vadd.f32 %v3549, %v3717
        %3719 = vmatmul.bf16.gmra.mxu0 %v1870
        %v3720 = vpop.f32.mrf.mxu0
        %v3721 = vadd.f32 %v3552, %v3720
        %v3722 = vpop.f32.mrf.mxu0
        %v3723 = vadd.f32 %v3554, %v3722
        %3724 = vmatmul.bf16.gmra.mxu0 %v1878
        %v3725 = vpop.f32.mrf.mxu0
        %v3726 = vadd.f32 %v3557, %v3725
        %v3727 = vpop.f32.mrf.mxu0
        %v3728 = vadd.f32 %v3559, %v3727
        %3729 = vmatmul.bf16.gmra.mxu0 %v1886
        %v3730 = vpop.f32.mrf.mxu0
        %v3731 = vadd.f32 %v3562, %v3730
        %v3732 = vpop.f32.mrf.mxu0
        %v3733 = vadd.f32 %v3564, %v3732
        %3734 = vmatmul.bf16.gmra.mxu0 %v1894
        %v3735 = vpop.f32.mrf.mxu0
        %v3736 = vadd.f32 %v3567, %v3735
        %v3737 = vpop.f32.mrf.mxu0
        %v3738 = vadd.f32 %v3569, %v3737
        %3739 = vmatmul.bf16.gmra.mxu0 %v1902
        %v3740 = vpop.f32.mrf.mxu0
        %v3741 = vadd.f32 %v3572, %v3740
        %v3742 = vpop.f32.mrf.mxu0
        %v3743 = vadd.f32 %v3574, %v3742
        %3744 = vmatmul.bf16.gmra.mxu0 %v1910
        %v3745 = vpop.f32.mrf.mxu0
        %v3746 = vadd.f32 %v3577, %v3745
        %v3747 = vpop.f32.mrf.mxu0
        %v3748 = vadd.f32 %v3579, %v3747
        %3749 = vmatmul.bf16.gmra.mxu0 %v1918
        %v3750 = vpop.f32.mrf.mxu0
        %v3751 = vadd.f32 %v3582, %v3750
        %v3752 = vpop.f32.mrf.mxu0
        %v3753 = vadd.f32 %v3584, %v3752
        %3754 = vmatmul.bf16.gmra.mxu0 %v1926
        %v3755 = vpop.f32.mrf.mxu0
        %v3756 = vadd.f32 %v3587, %v3755
        %v3757 = vpop.f32.mrf.mxu0
        %v3758 = vadd.f32 %v3589, %v3757
        %3759 = vmatmul.bf16.gmra.mxu0 %v1934
        %v3760 = vpop.f32.mrf.mxu0
        %v3761 = vadd.f32 %v3592, %v3760
        %v3762 = vpop.f32.mrf.mxu0
        %v3763 = vadd.f32 %v3594, %v3762
        %3764 = vmatmul.bf16.gmra.mxu0 %v1942
        %v3765 = vpop.f32.mrf.mxu0
        %v3766 = vadd.f32 %v3597, %v3765
        %v3767 = vpop.f32.mrf.mxu0
        %v3768 = vadd.f32 %v3599, %v3767
        %3769 = vmatmul.bf16.gmra.mxu0 %v1950
        %v3770 = vpop.f32.mrf.mxu0
        %v3771 = vadd.f32 %v3602, %v3770
        %v3772 = vpop.f32.mrf.mxu0
        %v3773 = vadd.f32 %v3604, %v3772
        %3774 = vdwg.mxu0
        %3775 = vmatpush.bf16.msra.mxu0 %v2527
        %3776 = vmatpush.bf16.msra.mxu0 %v2526
        %3777 = vmatpush.bf16.msra.mxu0 %v2525
        %3778 = vmatpush.bf16.msra.mxu0 %v2524
        %3779 = vmatpush.bf16.msra.mxu0 %v2523
        %3780 = vmatpush.bf16.msra.mxu0 %v2522
        %3781 = vmatpush.bf16.msra.mxu0 %v2521
        %3782 = vmatpush.bf16.msra.mxu0 %v2520
        %3783 = vmatmul.bf16.gmra.mxu0 %v1703
        %v3784 = vpop.f32.mrf.mxu0
        %v3785 = vadd.f32 %v3616, %v3784
        %v3786 = vpop.f32.mrf.mxu0
        %v3787 = vadd.f32 %v3618, %v3786
        %3788 = vmatmul.bf16.gmra.mxu0 %v1711
        %v3789 = vpop.f32.mrf.mxu0
        %v3790 = vadd.f32 %v3621, %v3789
        %v3791 = vpop.f32.mrf.mxu0
        %v3792 = vadd.f32 %v3623, %v3791
        %3793 = vmatmul.bf16.gmra.mxu0 %v1719
        %v3794 = vpop.f32.mrf.mxu0
        %v3795 = vadd.f32 %v3626, %v3794
        %v3796 = vpop.f32.mrf.mxu0
        %v3797 = vadd.f32 %v3628, %v3796
        %3798 = vmatmul.bf16.gmra.mxu0 %v1727
        %v3799 = vpop.f32.mrf.mxu0
        %v3800 = vadd.f32 %v3631, %v3799
        %v3801 = vpop.f32.mrf.mxu0
        %v3802 = vadd.f32 %v3633, %v3801
        %3803 = vmatmul.bf16.gmra.mxu0 %v1735
        %v3804 = vpop.f32.mrf.mxu0
        %v3805 = vadd.f32 %v3636, %v3804
        %v3806 = vpop.f32.mrf.mxu0
        %v3807 = vadd.f32 %v3638, %v3806
        %3808 = vmatmul.bf16.gmra.mxu0 %v1743
        %v3809 = vpop.f32.mrf.mxu0
        %v3810 = vadd.f32 %v3641, %v3809
        %v3811 = vpop.f32.mrf.mxu0
        %v3812 = vadd.f32 %v3643, %v3811
        %3813 = vmatmul.bf16.gmra.mxu0 %v1751
        %v3814 = vpop.f32.mrf.mxu0
        %v3815 = vadd.f32 %v3646, %v3814
        %v3816 = vpop.f32.mrf.mxu0
        %v3817 = vadd.f32 %v3648, %v3816
        %3818 = vmatmul.bf16.gmra.mxu0 %v1759
        %v3819 = vpop.f32.mrf.mxu0
        %v3820 = vadd.f32 %v3651, %v3819
        %v3821 = vpop.f32.mrf.mxu0
        %v3822 = vadd.f32 %v3653, %v3821
        %3823 = vmatmul.bf16.gmra.mxu0 %v1767
        %v3824 = vpop.f32.mrf.mxu0
        %v3825 = vadd.f32 %v3656, %v3824
        %v3826 = vpop.f32.mrf.mxu0
        %v3827 = vadd.f32 %v3658, %v3826
        %3828 = vmatmul.bf16.gmra.mxu0 %v1775
        %v3829 = vpop.f32.mrf.mxu0
        %v3830 = vadd.f32 %v3661, %v3829
        %v3831 = vpop.f32.mrf.mxu0
        %v3832 = vadd.f32 %v3663, %v3831
        %3833 = vmatmul.bf16.gmra.mxu0 %v1783
        %v3834 = vpop.f32.mrf.mxu0
        %v3835 = vadd.f32 %v3666, %v3834
        %v3836 = vpop.f32.mrf.mxu0
        %v3837 = vadd.f32 %v3668, %v3836
        %3838 = vmatmul.bf16.gmra.mxu0 %v1791
        %v3839 = vpop.f32.mrf.mxu0
        %v3840 = vadd.f32 %v3671, %v3839
        %v3841 = vpop.f32.mrf.mxu0
        %v3842 = vadd.f32 %v3673, %v3841
        %3843 = vmatmul.bf16.gmra.mxu0 %v1799
        %v3844 = vpop.f32.mrf.mxu0
        %v3845 = vadd.f32 %v3676, %v3844
        %v3846 = vpop.f32.mrf.mxu0
        %v3847 = vadd.f32 %v3678, %v3846
        %3848 = vmatmul.bf16.gmra.mxu0 %v1807
        %v3849 = vpop.f32.mrf.mxu0
        %v3850 = vadd.f32 %v3681, %v3849
        %v3851 = vpop.f32.mrf.mxu0
        %v3852 = vadd.f32 %v3683, %v3851
        %3853 = vmatmul.bf16.gmra.mxu0 %v1815
        %v3854 = vpop.f32.mrf.mxu0
        %v3855 = vadd.f32 %v3686, %v3854
        %v3856 = vpop.f32.mrf.mxu0
        %v3857 = vadd.f32 %v3688, %v3856
        %3858 = vmatmul.bf16.gmra.mxu0 %v1823
        %v3859 = vpop.f32.mrf.mxu0
        %v3860 = vadd.f32 %v3691, %v3859
        %v3861 = vpop.f32.mrf.mxu0
        %v3862 = vadd.f32 %v3693, %v3861
        %3863 = vmatmul.bf16.gmra.mxu0 %v1831
        %v3864 = vpop.f32.mrf.mxu0
        %v3865 = vadd.f32 %v3696, %v3864
        %v3866 = vpop.f32.mrf.mxu0
        %v3867 = vadd.f32 %v3698, %v3866
        %3868 = vmatmul.bf16.gmra.mxu0 %v1839
        %v3869 = vpop.f32.mrf.mxu0
        %v3870 = vadd.f32 %v3701, %v3869
        %v3871 = vpop.f32.mrf.mxu0
        %v3872 = vadd.f32 %v3703, %v3871
        %3873 = vmatmul.bf16.gmra.mxu0 %v1847
        %v3874 = vpop.f32.mrf.mxu0
        %v3875 = vadd.f32 %v3706, %v3874
        %v3876 = vpop.f32.mrf.mxu0
        %v3877 = vadd.f32 %v3708, %v3876
        %3878 = vmatmul.bf16.gmra.mxu0 %v1855
        %v3879 = vpop.f32.mrf.mxu0
        %v3880 = vadd.f32 %v3711, %v3879
        %v3881 = vpop.f32.mrf.mxu0
        %v3882 = vadd.f32 %v3713, %v3881
        %3883 = vmatmul.bf16.gmra.mxu0 %v1863
        %v3884 = vpop.f32.mrf.mxu0
        %v3885 = vadd.f32 %v3716, %v3884
        %v3886 = vpop.f32.mrf.mxu0
        %v3887 = vadd.f32 %v3718, %v3886
        %3888 = vmatmul.bf16.gmra.mxu0 %v1871
        %v3889 = vpop.f32.mrf.mxu0
        %v3890 = vadd.f32 %v3721, %v3889
        %v3891 = vpop.f32.mrf.mxu0
        %v3892 = vadd.f32 %v3723, %v3891
        %3893 = vmatmul.bf16.gmra.mxu0 %v1879
        %v3894 = vpop.f32.mrf.mxu0
        %v3895 = vadd.f32 %v3726, %v3894
        %v3896 = vpop.f32.mrf.mxu0
        %v3897 = vadd.f32 %v3728, %v3896
        %3898 = vmatmul.bf16.gmra.mxu0 %v1887
        %v3899 = vpop.f32.mrf.mxu0
        %v3900 = vadd.f32 %v3731, %v3899
        %v3901 = vpop.f32.mrf.mxu0
        %v3902 = vadd.f32 %v3733, %v3901
        %3903 = vmatmul.bf16.gmra.mxu0 %v1895
        %v3904 = vpop.f32.mrf.mxu0
        %v3905 = vadd.f32 %v3736, %v3904
        %v3906 = vpop.f32.mrf.mxu0
        %v3907 = vadd.f32 %v3738, %v3906
        %3908 = vmatmul.bf16.gmra.mxu0 %v1903
        %v3909 = vpop.f32.mrf.mxu0
        %v3910 = vadd.f32 %v3741, %v3909
        %v3911 = vpop.f32.mrf.mxu0
        %v3912 = vadd.f32 %v3743, %v3911
        %3913 = vmatmul.bf16.gmra.mxu0 %v1911
        %v3914 = vpop.f32.mrf.mxu0
        %v3915 = vadd.f32 %v3746, %v3914
        %v3916 = vpop.f32.mrf.mxu0
        %v3917 = vadd.f32 %v3748, %v3916
        %3918 = vmatmul.bf16.gmra.mxu0 %v1919
        %v3919 = vpop.f32.mrf.mxu0
        %v3920 = vadd.f32 %v3751, %v3919
        %v3921 = vpop.f32.mrf.mxu0
        %v3922 = vadd.f32 %v3753, %v3921
        %3923 = vmatmul.bf16.gmra.mxu0 %v1927
        %v3924 = vpop.f32.mrf.mxu0
        %v3925 = vadd.f32 %v3756, %v3924
        %v3926 = vpop.f32.mrf.mxu0
        %v3927 = vadd.f32 %v3758, %v3926
        %3928 = vmatmul.bf16.gmra.mxu0 %v1935
        %v3929 = vpop.f32.mrf.mxu0
        %v3930 = vadd.f32 %v3761, %v3929
        %v3931 = vpop.f32.mrf.mxu0
        %v3932 = vadd.f32 %v3763, %v3931
        %3933 = vmatmul.bf16.gmra.mxu0 %v1943
        %v3934 = vpop.f32.mrf.mxu0
        %v3935 = vadd.f32 %v3766, %v3934
        %v3936 = vpop.f32.mrf.mxu0
        %v3937 = vadd.f32 %v3768, %v3936
        %3938 = vmatmul.bf16.gmra.mxu0 %v1951
        %v3939 = vpop.f32.mrf.mxu0
        %v3940 = vadd.f32 %v3771, %v3939
        %v3941 = vpop.f32.mrf.mxu0
        %v3942 = vadd.f32 %v3773, %v3941
        %3943 = vdwg.mxu0
        %v3944 = vadd.f32 %v480, %v3785
        %v3945 = vadd.f32 %v481, %v3787
        %v3946 = vadd.f32 %v482, %v3790
        %v3947 = vadd.f32 %v483, %v3792
        %v3948 = vadd.f32 %v484, %v3795
        %v3949 = vadd.f32 %v485, %v3797
        %v3950 = vadd.f32 %v486, %v3800
        %v3951 = vadd.f32 %v487, %v3802
        %v3952 = vadd.f32 %v488, %v3805
        %v3953 = vadd.f32 %v489, %v3807
        %v3954 = vadd.f32 %v490, %v3810
        %v3955 = vadd.f32 %v491, %v3812
        %v3956 = vadd.f32 %v492, %v3815
        %v3957 = vadd.f32 %v493, %v3817
        %v3958 = vadd.f32 %v494, %v3820
        %v3959 = vadd.f32 %v495, %v3822
        %v3960 = vadd.f32 %v496, %v3825
        %v3961 = vadd.f32 %v497, %v3827
        %v3962 = vadd.f32 %v498, %v3830
        %v3963 = vadd.f32 %v499, %v3832
        %v3964 = vadd.f32 %v500, %v3835
        %v3965 = vadd.f32 %v501, %v3837
        %v3966 = vadd.f32 %v502, %v3840
        %v3967 = vadd.f32 %v503, %v3842
        %v3968 = vadd.f32 %v504, %v3845
        %v3969 = vadd.f32 %v505, %v3847
        %v3970 = vadd.f32 %v506, %v3850
        %v3971 = vadd.f32 %v507, %v3852
        %v3972 = vadd.f32 %v508, %v3855
        %v3973 = vadd.f32 %v509, %v3857
        %v3974 = vadd.f32 %v510, %v3860
        %v3975 = vadd.f32 %v511, %v3862
        %v3976 = vadd.f32 %v512, %v3865
        %v3977 = vadd.f32 %v513, %v3867
        %v3978 = vadd.f32 %v514, %v3870
        %v3979 = vadd.f32 %v515, %v3872
        %v3980 = vadd.f32 %v516, %v3875
        %v3981 = vadd.f32 %v517, %v3877
        %v3982 = vadd.f32 %v518, %v3880
        %v3983 = vadd.f32 %v519, %v3882
        %v3984 = vadd.f32 %v520, %v3885
        %v3985 = vadd.f32 %v521, %v3887
        %v3986 = vadd.f32 %v522, %v3890
        %v3987 = vadd.f32 %v523, %v3892
        %v3988 = vadd.f32 %v524, %v3895
        %v3989 = vadd.f32 %v525, %v3897
        %v3990 = vadd.f32 %v526, %v3900
        %v3991 = vadd.f32 %v527, %v3902
        %v3992 = vadd.f32 %v528, %v3905
        %v3993 = vadd.f32 %v529, %v3907
        %v3994 = vadd.f32 %v530, %v3910
        %v3995 = vadd.f32 %v531, %v3912
        %v3996 = vadd.f32 %v532, %v3915
        %v3997 = vadd.f32 %v533, %v3917
        %v3998 = vadd.f32 %v534, %v3920
        %v3999 = vadd.f32 %v535, %v3922
        %v4000 = vadd.f32 %v536, %v3925
        %v4001 = vadd.f32 %v537, %v3927
        %v4002 = vadd.f32 %v538, %v3930
        %v4003 = vadd.f32 %v539, %v3932
        %v4004 = vadd.f32 %v540, %v3935
        %v4005 = vadd.f32 %v541, %v3937
        %v4006 = vadd.f32 %v542, %v3940
        %v4007 = vadd.f32 %v543, %v3942
        %4008 = vst [vmem:[#allocation2] sm:$0xff] %v3944
        %4009 = vst [vmem:[#allocation2 + $0x8] sm:$0xff] %v3945
        %4010 = vst [vmem:[#allocation2 + $0x10] sm:$0xff] %v3946
        %4011 = vst [vmem:[#allocation2 + $0x18] sm:$0xff] %v3947
        %4012 = vst [vmem:[#allocation2 + $0x20] sm:$0xff] %v3948
        %4013 = vst [vmem:[#allocation2 + $0x28] sm:$0xff] %v3949
        %4014 = vst [vmem:[#allocation2 + $0x30] sm:$0xff] %v3950
        %4015 = vst [vmem:[#allocation2 + $0x38] sm:$0xff] %v3951
        %4016 = vst [vmem:[#allocation2 + $0x40] sm:$0xff] %v3952
        %4017 = vst [vmem:[#allocation2 + $0x48] sm:$0xff] %v3953
        %4018 = vst [vmem:[#allocation2 + $0x50] sm:$0xff] %v3954
        %4019 = vst [vmem:[#allocation2 + $0x58] sm:$0xff] %v3955
        %4020 = vst [vmem:[#allocation2 + $0x60] sm:$0xff] %v3956
        %4021 = vst [vmem:[#allocation2 + $0x68] sm:$0xff] %v3957
        %4022 = vst [vmem:[#allocation2 + $0x70] sm:$0xff] %v3958
        %4023 = vst [vmem:[#allocation2 + $0x78] sm:$0xff] %v3959
        %4024 = vst [vmem:[#allocation2 + $0x80] sm:$0xff] %v3960
        %4025 = vst [vmem:[#allocation2 + $0x88] sm:$0xff] %v3961
        %4026 = vst [vmem:[#allocation2 + $0x90] sm:$0xff] %v3962
        %4027 = vst [vmem:[#allocation2 + $0x98] sm:$0xff] %v3963
        %4028 = vst [vmem:[#allocation2 + $0xa0] sm:$0xff] %v3964
        %4029 = vst [vmem:[#allocation2 + $0xa8] sm:$0xff] %v3965
        %4030 = vst [vmem:[#allocation2 + $0xb0] sm:$0xff] %v3966
        %4031 = vst [vmem:[#allocation2 + $0xb8] sm:$0xff] %v3967
        %4032 = vst [vmem:[#allocation2 + $0xc0] sm:$0xff] %v3968
        %4033 = vst [vmem:[#allocation2 + $0xc8] sm:$0xff] %v3969
        %4034 = vst [vmem:[#allocation2 + $0xd0] sm:$0xff] %v3970
        %4035 = vst [vmem:[#allocation2 + $0xd8] sm:$0xff] %v3971
        %4036 = vst [vmem:[#allocation2 + $0xe0] sm:$0xff] %v3972
        %4037 = vst [vmem:[#allocation2 + $0xe8] sm:$0xff] %v3973
        %4038 = vst [vmem:[#allocation2 + $0xf0] sm:$0xff] %v3974
        %4039 = vst [vmem:[#allocation2 + $0xf8] sm:$0xff] %v3975
        %4040 = vst [vmem:[#allocation2 + $0x100] sm:$0xff] %v3976
        %4041 = vst [vmem:[#allocation2 + $0x108] sm:$0xff] %v3977
        %4042 = vst [vmem:[#allocation2 + $0x110] sm:$0xff] %v3978
        %4043 = vst [vmem:[#allocation2 + $0x118] sm:$0xff] %v3979
        %4044 = vst [vmem:[#allocation2 + $0x120] sm:$0xff] %v3980
        %4045 = vst [vmem:[#allocation2 + $0x128] sm:$0xff] %v3981
        %4046 = vst [vmem:[#allocation2 + $0x130] sm:$0xff] %v3982
        %4047 = vst [vmem:[#allocation2 + $0x138] sm:$0xff] %v3983
        %4048 = vst [vmem:[#allocation2 + $0x140] sm:$0xff] %v3984
        %4049 = vst [vmem:[#allocation2 + $0x148] sm:$0xff] %v3985
        %4050 = vst [vmem:[#allocation2 + $0x150] sm:$0xff] %v3986
        %4051 = vst [vmem:[#allocation2 + $0x158] sm:$0xff] %v3987
        %4052 = vst [vmem:[#allocation2 + $0x160] sm:$0xff] %v3988
        %4053 = vst [vmem:[#allocation2 + $0x168] sm:$0xff] %v3989
        %4054 = vst [vmem:[#allocation2 + $0x170] sm:$0xff] %v3990
        %4055 = vst [vmem:[#allocation2 + $0x178] sm:$0xff] %v3991
        %4056 = vst [vmem:[#allocation2 + $0x180] sm:$0xff] %v3992
        %4057 = vst [vmem:[#allocation2 + $0x188] sm:$0xff] %v3993
        %4058 = vst [vmem:[#allocation2 + $0x190] sm:$0xff] %v3994
        %4059 = vst [vmem:[#allocation2 + $0x198] sm:$0xff] %v3995
        %4060 = vst [vmem:[#allocation2 + $0x1a0] sm:$0xff] %v3996
        %4061 = vst [vmem:[#allocation2 + $0x1a8] sm:$0xff] %v3997
        %4062 = vst [vmem:[#allocation2 + $0x1b0] sm:$0xff] %v3998
        %4063 = vst [vmem:[#allocation2 + $0x1b8] sm:$0xff] %v3999
        %4064 = vst [vmem:[#allocation2 + $0x1c0] sm:$0xff] %v4000
        %4065 = vst [vmem:[#allocation2 + $0x1c8] sm:$0xff] %v4001
        %4066 = vst [vmem:[#allocation2 + $0x1d0] sm:$0xff] %v4002
        %4067 = vst [vmem:[#allocation2 + $0x1d8] sm:$0xff] %v4003
        %4068 = vst [vmem:[#allocation2 + $0x1e0] sm:$0xff] %v4004
        %4069 = vst [vmem:[#allocation2 + $0x1e8] sm:$0xff] %v4005
        %4070 = vst [vmem:[#allocation2 + $0x1f0] sm:$0xff] %v4006
        %4071 = vst [vmem:[#allocation2 + $0x1f8] sm:$0xff] %v4007
        // Predicated region
        $region69: #{tpu_custom_call.1} parent=43 // pred_check
          %p4072 = pneg %p412
        $region70: #{tpu_custom_call.1} parent=43 // pred_check_branch
          %4074 = sbr.rel (%p4072) target = $region72
        $region71: #{tpu_custom_call.1} parent=43 // pred_region
          %v4075 = vld [vmem:[%s409] sm:$0xff]
          %v4076 = vld [vmem:[%s409 + $0x8] sm:$0xff]
          %v4077 = vld [vmem:[%s409 + $0x10] sm:$0xff]
          %v4078 = vld [vmem:[%s409 + $0x18] sm:$0xff]
          %v4079 = vld [vmem:[%s409 + $0x20] sm:$0xff]
          %v4080 = vld [vmem:[%s409 + $0x28] sm:$0xff]
          %v4081 = vld [vmem:[%s409 + $0x30] sm:$0xff]
          %v4082 = vld [vmem:[%s409 + $0x38] sm:$0xff]
          %v4083 = vld [vmem:[%s409 + $0x40] sm:$0xff]
          %v4084 = vld [vmem:[%s409 + $0x48] sm:$0xff]
          %v4085 = vld [vmem:[%s409 + $0x50] sm:$0xff]
          %v4086 = vld [vmem:[%s409 + $0x58] sm:$0xff]
          %v4087 = vld [vmem:[%s409 + $0x60] sm:$0xff]
          %v4088 = vld [vmem:[%s409 + $0x68] sm:$0xff]
          %v4089 = vld [vmem:[%s409 + $0x70] sm:$0xff]
          %v4090 = vld [vmem:[%s409 + $0x78] sm:$0xff]
          %v4091 = vld [vmem:[%s409 + $0x80] sm:$0xff]
          %v4092 = vld [vmem:[%s409 + $0x88] sm:$0xff]
          %v4093 = vld [vmem:[%s409 + $0x90] sm:$0xff]
          %v4094 = vld [vmem:[%s409 + $0x98] sm:$0xff]
          %v4095 = vld [vmem:[%s409 + $0xa0] sm:$0xff]
          %v4096 = vld [vmem:[%s409 + $0xa8] sm:$0xff]
          %v4097 = vld [vmem:[%s409 + $0xb0] sm:$0xff]
          %v4098 = vld [vmem:[%s409 + $0xb8] sm:$0xff]
          %v4099 = vld [vmem:[%s409 + $0xc0] sm:$0xff]
          %v4100 = vld [vmem:[%s409 + $0xc8] sm:$0xff]
          %v4101 = vld [vmem:[%s409 + $0xd0] sm:$0xff]
          %v4102 = vld [vmem:[%s409 + $0xd8] sm:$0xff]
          %v4103 = vld [vmem:[%s409 + $0xe0] sm:$0xff]
          %v4104 = vld [vmem:[%s409 + $0xe8] sm:$0xff]
          %v4105 = vld [vmem:[%s409 + $0xf0] sm:$0xff]
          %v4106 = vld [vmem:[%s409 + $0xf8] sm:$0xff]
          %v4107 = vld [vmem:[%s409 + $0x100] sm:$0xff]
          %v4108 = vld [vmem:[%s409 + $0x108] sm:$0xff]
          %v4109 = vld [vmem:[%s409 + $0x110] sm:$0xff]
          %v4110 = vld [vmem:[%s409 + $0x118] sm:$0xff]
          %v4111 = vld [vmem:[%s409 + $0x120] sm:$0xff]
          %v4112 = vld [vmem:[%s409 + $0x128] sm:$0xff]
          %v4113 = vld [vmem:[%s409 + $0x130] sm:$0xff]
          %v4114 = vld [vmem:[%s409 + $0x138] sm:$0xff]
          %v4115 = vld [vmem:[%s409 + $0x140] sm:$0xff]
          %v4116 = vld [vmem:[%s409 + $0x148] sm:$0xff]
          %v4117 = vld [vmem:[%s409 + $0x150] sm:$0xff]
          %v4118 = vld [vmem:[%s409 + $0x158] sm:$0xff]
          %v4119 = vld [vmem:[%s409 + $0x160] sm:$0xff]
          %v4120 = vld [vmem:[%s409 + $0x168] sm:$0xff]
          %v4121 = vld [vmem:[%s409 + $0x170] sm:$0xff]
          %v4122 = vld [vmem:[%s409 + $0x178] sm:$0xff]
          %v4123 = vld [vmem:[%s409 + $0x180] sm:$0xff]
          %v4124 = vld [vmem:[%s409 + $0x188] sm:$0xff]
          %v4125 = vld [vmem:[%s409 + $0x190] sm:$0xff]
          %v4126 = vld [vmem:[%s409 + $0x198] sm:$0xff]
          %v4127 = vld [vmem:[%s409 + $0x1a0] sm:$0xff]
          %v4128 = vld [vmem:[%s409 + $0x1a8] sm:$0xff]
          %v4129 = vld [vmem:[%s409 + $0x1b0] sm:$0xff]
          %v4130 = vld [vmem:[%s409 + $0x1b8] sm:$0xff]
          %v4131 = vld [vmem:[%s409 + $0x1c0] sm:$0xff]
          %v4132 = vld [vmem:[%s409 + $0x1c8] sm:$0xff]
          %v4133 = vld [vmem:[%s409 + $0x1d0] sm:$0xff]
          %v4134 = vld [vmem:[%s409 + $0x1d8] sm:$0xff]
          %v4135 = vld [vmem:[%s409 + $0x1e0] sm:$0xff]
          %v4136 = vld [vmem:[%s409 + $0x1e8] sm:$0xff]
          %v4137 = vld [vmem:[%s409 + $0x1f0] sm:$0xff]
          %v4138 = vld [vmem:[%s409 + $0x1f8] sm:$0xff]
          %v4139 = vrcp.pop %v4075
          %v4140 = vmul.f32 %v4075, %v4139
          %v4141 = vsub.f32 1.0, %v4140
          %v4142 = vmul.f32 %v4139, %v4141
          %v4143 = vadd.f32 %v4139, %v4142
          %vm4144 = vweird.f32 %v4075
          %vm4145 = vweird.f32 %v4139
          %vm4146 = vmor %vm4144, %vm4145
          %v4147 = vsel %vm4146, %v4139, %v4143
          %v4148 = vand.u32 2147483647, %v4075
          %vm4149 = vcmp.eq.f32.partialorder %v4148, 8.507059e+37
          %v4150 = vand.u32 %v4075, 2147483648
          %v4151 = vor.u32 1.1754944e-38, %v4150
          %v4152 = vsel %vm4149, %v4151, %v4147
          %v4153 = vrcp.pop %v4076
          %v4154 = vmul.f32 %v4076, %v4153
          %v4155 = vsub.f32 1.0, %v4154
          %v4156 = vmul.f32 %v4153, %v4155
          %v4157 = vadd.f32 %v4153, %v4156
          %vm4158 = vweird.f32 %v4076
          %vm4159 = vweird.f32 %v4153
          %vm4160 = vmor %vm4158, %vm4159
          %v4161 = vsel %vm4160, %v4153, %v4157
          %v4162 = vand.u32 2147483647, %v4076
          %vm4163 = vcmp.eq.f32.partialorder %v4162, 8.507059e+37
          %v4164 = vand.u32 %v4076, 2147483648
          %v4165 = vor.u32 1.1754944e-38, %v4164
          %v4166 = vsel %vm4163, %v4165, %v4161
          %v4167 = vrcp.pop %v4077
          %v4168 = vmul.f32 %v4077, %v4167
          %v4169 = vsub.f32 1.0, %v4168
          %v4170 = vmul.f32 %v4167, %v4169
          %v4171 = vadd.f32 %v4167, %v4170
          %vm4172 = vweird.f32 %v4077
          %vm4173 = vweird.f32 %v4167
          %vm4174 = vmor %vm4172, %vm4173
          %v4175 = vsel %vm4174, %v4167, %v4171
          %v4176 = vand.u32 2147483647, %v4077
          %vm4177 = vcmp.eq.f32.partialorder %v4176, 8.507059e+37
          %v4178 = vand.u32 %v4077, 2147483648
          %v4179 = vor.u32 1.1754944e-38, %v4178
          %v4180 = vsel %vm4177, %v4179, %v4175
          %v4181 = vrcp.pop %v4078
          %v4182 = vmul.f32 %v4078, %v4181
          %v4183 = vsub.f32 1.0, %v4182
          %v4184 = vmul.f32 %v4181, %v4183
          %v4185 = vadd.f32 %v4181, %v4184
          %vm4186 = vweird.f32 %v4078
          %vm4187 = vweird.f32 %v4181
          %vm4188 = vmor %vm4186, %vm4187
          %v4189 = vsel %vm4188, %v4181, %v4185
          %v4190 = vand.u32 2147483647, %v4078
          %vm4191 = vcmp.eq.f32.partialorder %v4190, 8.507059e+37
          %v4192 = vand.u32 %v4078, 2147483648
          %v4193 = vor.u32 1.1754944e-38, %v4192
          %v4194 = vsel %vm4191, %v4193, %v4189
          %v4195 = vrcp.pop %v4079
          %v4196 = vmul.f32 %v4079, %v4195
          %v4197 = vsub.f32 1.0, %v4196
          %v4198 = vmul.f32 %v4195, %v4197
          %v4199 = vadd.f32 %v4195, %v4198
          %vm4200 = vweird.f32 %v4079
          %vm4201 = vweird.f32 %v4195
          %vm4202 = vmor %vm4200, %vm4201
          %v4203 = vsel %vm4202, %v4195, %v4199
          %v4204 = vand.u32 2147483647, %v4079
          %vm4205 = vcmp.eq.f32.partialorder %v4204, 8.507059e+37
          %v4206 = vand.u32 %v4079, 2147483648
          %v4207 = vor.u32 1.1754944e-38, %v4206
          %v4208 = vsel %vm4205, %v4207, %v4203
          %v4209 = vrcp.pop %v4080
          %v4210 = vmul.f32 %v4080, %v4209
          %v4211 = vsub.f32 1.0, %v4210
          %v4212 = vmul.f32 %v4209, %v4211
          %v4213 = vadd.f32 %v4209, %v4212
          %vm4214 = vweird.f32 %v4080
          %vm4215 = vweird.f32 %v4209
          %vm4216 = vmor %vm4214, %vm4215
          %v4217 = vsel %vm4216, %v4209, %v4213
          %v4218 = vand.u32 2147483647, %v4080
          %vm4219 = vcmp.eq.f32.partialorder %v4218, 8.507059e+37
          %v4220 = vand.u32 %v4080, 2147483648
          %v4221 = vor.u32 1.1754944e-38, %v4220
          %v4222 = vsel %vm4219, %v4221, %v4217
          %v4223 = vrcp.pop %v4081
          %v4224 = vmul.f32 %v4081, %v4223
          %v4225 = vsub.f32 1.0, %v4224
          %v4226 = vmul.f32 %v4223, %v4225
          %v4227 = vadd.f32 %v4223, %v4226
          %vm4228 = vweird.f32 %v4081
          %vm4229 = vweird.f32 %v4223
          %vm4230 = vmor %vm4228, %vm4229
          %v4231 = vsel %vm4230, %v4223, %v4227
          %v4232 = vand.u32 2147483647, %v4081
          %vm4233 = vcmp.eq.f32.partialorder %v4232, 8.507059e+37
          %v4234 = vand.u32 %v4081, 2147483648
          %v4235 = vor.u32 1.1754944e-38, %v4234
          %v4236 = vsel %vm4233, %v4235, %v4231
          %v4237 = vrcp.pop %v4082
          %v4238 = vmul.f32 %v4082, %v4237
          %v4239 = vsub.f32 1.0, %v4238
          %v4240 = vmul.f32 %v4237, %v4239
          %v4241 = vadd.f32 %v4237, %v4240
          %vm4242 = vweird.f32 %v4082
          %vm4243 = vweird.f32 %v4237
          %vm4244 = vmor %vm4242, %vm4243
          %v4245 = vsel %vm4244, %v4237, %v4241
          %v4246 = vand.u32 2147483647, %v4082
          %vm4247 = vcmp.eq.f32.partialorder %v4246, 8.507059e+37
          %v4248 = vand.u32 %v4082, 2147483648
          %v4249 = vor.u32 1.1754944e-38, %v4248
          %v4250 = vsel %vm4247, %v4249, %v4245
          %v4251 = vrcp.pop %v4083
          %v4252 = vmul.f32 %v4083, %v4251
          %v4253 = vsub.f32 1.0, %v4252
          %v4254 = vmul.f32 %v4251, %v4253
          %v4255 = vadd.f32 %v4251, %v4254
          %vm4256 = vweird.f32 %v4083
          %vm4257 = vweird.f32 %v4251
          %vm4258 = vmor %vm4256, %vm4257
          %v4259 = vsel %vm4258, %v4251, %v4255
          %v4260 = vand.u32 2147483647, %v4083
          %vm4261 = vcmp.eq.f32.partialorder %v4260, 8.507059e+37
          %v4262 = vand.u32 %v4083, 2147483648
          %v4263 = vor.u32 1.1754944e-38, %v4262
          %v4264 = vsel %vm4261, %v4263, %v4259
          %v4265 = vrcp.pop %v4084
          %v4266 = vmul.f32 %v4084, %v4265
          %v4267 = vsub.f32 1.0, %v4266
          %v4268 = vmul.f32 %v4265, %v4267
          %v4269 = vadd.f32 %v4265, %v4268
          %vm4270 = vweird.f32 %v4084
          %vm4271 = vweird.f32 %v4265
          %vm4272 = vmor %vm4270, %vm4271
          %v4273 = vsel %vm4272, %v4265, %v4269
          %v4274 = vand.u32 2147483647, %v4084
          %vm4275 = vcmp.eq.f32.partialorder %v4274, 8.507059e+37
          %v4276 = vand.u32 %v4084, 2147483648
          %v4277 = vor.u32 1.1754944e-38, %v4276
          %v4278 = vsel %vm4275, %v4277, %v4273
          %v4279 = vrcp.pop %v4085
          %v4280 = vmul.f32 %v4085, %v4279
          %v4281 = vsub.f32 1.0, %v4280
          %v4282 = vmul.f32 %v4279, %v4281
          %v4283 = vadd.f32 %v4279, %v4282
          %vm4284 = vweird.f32 %v4085
          %vm4285 = vweird.f32 %v4279
          %vm4286 = vmor %vm4284, %vm4285
          %v4287 = vsel %vm4286, %v4279, %v4283
          %v4288 = vand.u32 2147483647, %v4085
          %vm4289 = vcmp.eq.f32.partialorder %v4288, 8.507059e+37
          %v4290 = vand.u32 %v4085, 2147483648
          %v4291 = vor.u32 1.1754944e-38, %v4290
          %v4292 = vsel %vm4289, %v4291, %v4287
          %v4293 = vrcp.pop %v4086
          %v4294 = vmul.f32 %v4086, %v4293
          %v4295 = vsub.f32 1.0, %v4294
          %v4296 = vmul.f32 %v4293, %v4295
          %v4297 = vadd.f32 %v4293, %v4296
          %vm4298 = vweird.f32 %v4086
          %vm4299 = vweird.f32 %v4293
          %vm4300 = vmor %vm4298, %vm4299
          %v4301 = vsel %vm4300, %v4293, %v4297
          %v4302 = vand.u32 2147483647, %v4086
          %vm4303 = vcmp.eq.f32.partialorder %v4302, 8.507059e+37
          %v4304 = vand.u32 %v4086, 2147483648
          %v4305 = vor.u32 1.1754944e-38, %v4304
          %v4306 = vsel %vm4303, %v4305, %v4301
          %v4307 = vrcp.pop %v4087
          %v4308 = vmul.f32 %v4087, %v4307
          %v4309 = vsub.f32 1.0, %v4308
          %v4310 = vmul.f32 %v4307, %v4309
          %v4311 = vadd.f32 %v4307, %v4310
          %vm4312 = vweird.f32 %v4087
          %vm4313 = vweird.f32 %v4307
          %vm4314 = vmor %vm4312, %vm4313
          %v4315 = vsel %vm4314, %v4307, %v4311
          %v4316 = vand.u32 2147483647, %v4087
          %vm4317 = vcmp.eq.f32.partialorder %v4316, 8.507059e+37
          %v4318 = vand.u32 %v4087, 2147483648
          %v4319 = vor.u32 1.1754944e-38, %v4318
          %v4320 = vsel %vm4317, %v4319, %v4315
          %v4321 = vrcp.pop %v4088
          %v4322 = vmul.f32 %v4088, %v4321
          %v4323 = vsub.f32 1.0, %v4322
          %v4324 = vmul.f32 %v4321, %v4323
          %v4325 = vadd.f32 %v4321, %v4324
          %vm4326 = vweird.f32 %v4088
          %vm4327 = vweird.f32 %v4321
          %vm4328 = vmor %vm4326, %vm4327
          %v4329 = vsel %vm4328, %v4321, %v4325
          %v4330 = vand.u32 2147483647, %v4088
          %vm4331 = vcmp.eq.f32.partialorder %v4330, 8.507059e+37
          %v4332 = vand.u32 %v4088, 2147483648
          %v4333 = vor.u32 1.1754944e-38, %v4332
          %v4334 = vsel %vm4331, %v4333, %v4329
          %v4335 = vrcp.pop %v4089
          %v4336 = vmul.f32 %v4089, %v4335
          %v4337 = vsub.f32 1.0, %v4336
          %v4338 = vmul.f32 %v4335, %v4337
          %v4339 = vadd.f32 %v4335, %v4338
          %vm4340 = vweird.f32 %v4089
          %vm4341 = vweird.f32 %v4335
          %vm4342 = vmor %vm4340, %vm4341
          %v4343 = vsel %vm4342, %v4335, %v4339
          %v4344 = vand.u32 2147483647, %v4089
          %vm4345 = vcmp.eq.f32.partialorder %v4344, 8.507059e+37
          %v4346 = vand.u32 %v4089, 2147483648
          %v4347 = vor.u32 1.1754944e-38, %v4346
          %v4348 = vsel %vm4345, %v4347, %v4343
          %v4349 = vrcp.pop %v4090
          %v4350 = vmul.f32 %v4090, %v4349
          %v4351 = vsub.f32 1.0, %v4350
          %v4352 = vmul.f32 %v4349, %v4351
          %v4353 = vadd.f32 %v4349, %v4352
          %vm4354 = vweird.f32 %v4090
          %vm4355 = vweird.f32 %v4349
          %vm4356 = vmor %vm4354, %vm4355
          %v4357 = vsel %vm4356, %v4349, %v4353
          %v4358 = vand.u32 2147483647, %v4090
          %vm4359 = vcmp.eq.f32.partialorder %v4358, 8.507059e+37
          %v4360 = vand.u32 %v4090, 2147483648
          %v4361 = vor.u32 1.1754944e-38, %v4360
          %v4362 = vsel %vm4359, %v4361, %v4357
          %v4363 = vrcp.pop %v4091
          %v4364 = vmul.f32 %v4091, %v4363
          %v4365 = vsub.f32 1.0, %v4364
          %v4366 = vmul.f32 %v4363, %v4365
          %v4367 = vadd.f32 %v4363, %v4366
          %vm4368 = vweird.f32 %v4091
          %vm4369 = vweird.f32 %v4363
          %vm4370 = vmor %vm4368, %vm4369
          %v4371 = vsel %vm4370, %v4363, %v4367
          %v4372 = vand.u32 2147483647, %v4091
          %vm4373 = vcmp.eq.f32.partialorder %v4372, 8.507059e+37
          %v4374 = vand.u32 %v4091, 2147483648
          %v4375 = vor.u32 1.1754944e-38, %v4374
          %v4376 = vsel %vm4373, %v4375, %v4371
          %v4377 = vrcp.pop %v4092
          %v4378 = vmul.f32 %v4092, %v4377
          %v4379 = vsub.f32 1.0, %v4378
          %v4380 = vmul.f32 %v4377, %v4379
          %v4381 = vadd.f32 %v4377, %v4380
          %vm4382 = vweird.f32 %v4092
          %vm4383 = vweird.f32 %v4377
          %vm4384 = vmor %vm4382, %vm4383
          %v4385 = vsel %vm4384, %v4377, %v4381
          %v4386 = vand.u32 2147483647, %v4092
          %vm4387 = vcmp.eq.f32.partialorder %v4386, 8.507059e+37
          %v4388 = vand.u32 %v4092, 2147483648
          %v4389 = vor.u32 1.1754944e-38, %v4388
          %v4390 = vsel %vm4387, %v4389, %v4385
          %v4391 = vrcp.pop %v4093
          %v4392 = vmul.f32 %v4093, %v4391
          %v4393 = vsub.f32 1.0, %v4392
          %v4394 = vmul.f32 %v4391, %v4393
          %v4395 = vadd.f32 %v4391, %v4394
          %vm4396 = vweird.f32 %v4093
          %vm4397 = vweird.f32 %v4391
          %vm4398 = vmor %vm4396, %vm4397
          %v4399 = vsel %vm4398, %v4391, %v4395
          %v4400 = vand.u32 2147483647, %v4093
          %vm4401 = vcmp.eq.f32.partialorder %v4400, 8.507059e+37
          %v4402 = vand.u32 %v4093, 2147483648
          %v4403 = vor.u32 1.1754944e-38, %v4402
          %v4404 = vsel %vm4401, %v4403, %v4399
          %v4405 = vrcp.pop %v4094
          %v4406 = vmul.f32 %v4094, %v4405
          %v4407 = vsub.f32 1.0, %v4406
          %v4408 = vmul.f32 %v4405, %v4407
          %v4409 = vadd.f32 %v4405, %v4408
          %vm4410 = vweird.f32 %v4094
          %vm4411 = vweird.f32 %v4405
          %vm4412 = vmor %vm4410, %vm4411
          %v4413 = vsel %vm4412, %v4405, %v4409
          %v4414 = vand.u32 2147483647, %v4094
          %vm4415 = vcmp.eq.f32.partialorder %v4414, 8.507059e+37
          %v4416 = vand.u32 %v4094, 2147483648
          %v4417 = vor.u32 1.1754944e-38, %v4416
          %v4418 = vsel %vm4415, %v4417, %v4413
          %v4419 = vrcp.pop %v4095
          %v4420 = vmul.f32 %v4095, %v4419
          %v4421 = vsub.f32 1.0, %v4420
          %v4422 = vmul.f32 %v4419, %v4421
          %v4423 = vadd.f32 %v4419, %v4422
          %vm4424 = vweird.f32 %v4095
          %vm4425 = vweird.f32 %v4419
          %vm4426 = vmor %vm4424, %vm4425
          %v4427 = vsel %vm4426, %v4419, %v4423
          %v4428 = vand.u32 2147483647, %v4095
          %vm4429 = vcmp.eq.f32.partialorder %v4428, 8.507059e+37
          %v4430 = vand.u32 %v4095, 2147483648
          %v4431 = vor.u32 1.1754944e-38, %v4430
          %v4432 = vsel %vm4429, %v4431, %v4427
          %v4433 = vrcp.pop %v4096
          %v4434 = vmul.f32 %v4096, %v4433
          %v4435 = vsub.f32 1.0, %v4434
          %v4436 = vmul.f32 %v4433, %v4435
          %v4437 = vadd.f32 %v4433, %v4436
          %vm4438 = vweird.f32 %v4096
          %vm4439 = vweird.f32 %v4433
          %vm4440 = vmor %vm4438, %vm4439
          %v4441 = vsel %vm4440, %v4433, %v4437
          %v4442 = vand.u32 2147483647, %v4096
          %vm4443 = vcmp.eq.f32.partialorder %v4442, 8.507059e+37
          %v4444 = vand.u32 %v4096, 2147483648
          %v4445 = vor.u32 1.1754944e-38, %v4444
          %v4446 = vsel %vm4443, %v4445, %v4441
          %v4447 = vrcp.pop %v4097
          %v4448 = vmul.f32 %v4097, %v4447
          %v4449 = vsub.f32 1.0, %v4448
          %v4450 = vmul.f32 %v4447, %v4449
          %v4451 = vadd.f32 %v4447, %v4450
          %vm4452 = vweird.f32 %v4097
          %vm4453 = vweird.f32 %v4447
          %vm4454 = vmor %vm4452, %vm4453
          %v4455 = vsel %vm4454, %v4447, %v4451
          %v4456 = vand.u32 2147483647, %v4097
          %vm4457 = vcmp.eq.f32.partialorder %v4456, 8.507059e+37
          %v4458 = vand.u32 %v4097, 2147483648
          %v4459 = vor.u32 1.1754944e-38, %v4458
          %v4460 = vsel %vm4457, %v4459, %v4455
          %v4461 = vrcp.pop %v4098
          %v4462 = vmul.f32 %v4098, %v4461
          %v4463 = vsub.f32 1.0, %v4462
          %v4464 = vmul.f32 %v4461, %v4463
          %v4465 = vadd.f32 %v4461, %v4464
          %vm4466 = vweird.f32 %v4098
          %vm4467 = vweird.f32 %v4461
          %vm4468 = vmor %vm4466, %vm4467
          %v4469 = vsel %vm4468, %v4461, %v4465
          %v4470 = vand.u32 2147483647, %v4098
          %vm4471 = vcmp.eq.f32.partialorder %v4470, 8.507059e+37
          %v4472 = vand.u32 %v4098, 2147483648
          %v4473 = vor.u32 1.1754944e-38, %v4472
          %v4474 = vsel %vm4471, %v4473, %v4469
          %v4475 = vrcp.pop %v4099
          %v4476 = vmul.f32 %v4099, %v4475
          %v4477 = vsub.f32 1.0, %v4476
          %v4478 = vmul.f32 %v4475, %v4477
          %v4479 = vadd.f32 %v4475, %v4478
          %vm4480 = vweird.f32 %v4099
          %vm4481 = vweird.f32 %v4475
          %vm4482 = vmor %vm4480, %vm4481
          %v4483 = vsel %vm4482, %v4475, %v4479
          %v4484 = vand.u32 2147483647, %v4099
          %vm4485 = vcmp.eq.f32.partialorder %v4484, 8.507059e+37
          %v4486 = vand.u32 %v4099, 2147483648
          %v4487 = vor.u32 1.1754944e-38, %v4486
          %v4488 = vsel %vm4485, %v4487, %v4483
          %v4489 = vrcp.pop %v4100
          %v4490 = vmul.f32 %v4100, %v4489
          %v4491 = vsub.f32 1.0, %v4490
          %v4492 = vmul.f32 %v4489, %v4491
          %v4493 = vadd.f32 %v4489, %v4492
          %vm4494 = vweird.f32 %v4100
          %vm4495 = vweird.f32 %v4489
          %vm4496 = vmor %vm4494, %vm4495
          %v4497 = vsel %vm4496, %v4489, %v4493
          %v4498 = vand.u32 2147483647, %v4100
          %vm4499 = vcmp.eq.f32.partialorder %v4498, 8.507059e+37
          %v4500 = vand.u32 %v4100, 2147483648
          %v4501 = vor.u32 1.1754944e-38, %v4500
          %v4502 = vsel %vm4499, %v4501, %v4497
          %v4503 = vrcp.pop %v4101
          %v4504 = vmul.f32 %v4101, %v4503
          %v4505 = vsub.f32 1.0, %v4504
          %v4506 = vmul.f32 %v4503, %v4505
          %v4507 = vadd.f32 %v4503, %v4506
          %vm4508 = vweird.f32 %v4101
          %vm4509 = vweird.f32 %v4503
          %vm4510 = vmor %vm4508, %vm4509
          %v4511 = vsel %vm4510, %v4503, %v4507
          %v4512 = vand.u32 2147483647, %v4101
          %vm4513 = vcmp.eq.f32.partialorder %v4512, 8.507059e+37
          %v4514 = vand.u32 %v4101, 2147483648
          %v4515 = vor.u32 1.1754944e-38, %v4514
          %v4516 = vsel %vm4513, %v4515, %v4511
          %v4517 = vrcp.pop %v4102
          %v4518 = vmul.f32 %v4102, %v4517
          %v4519 = vsub.f32 1.0, %v4518
          %v4520 = vmul.f32 %v4517, %v4519
          %v4521 = vadd.f32 %v4517, %v4520
          %vm4522 = vweird.f32 %v4102
          %vm4523 = vweird.f32 %v4517
          %vm4524 = vmor %vm4522, %vm4523
          %v4525 = vsel %vm4524, %v4517, %v4521
          %v4526 = vand.u32 2147483647, %v4102
          %vm4527 = vcmp.eq.f32.partialorder %v4526, 8.507059e+37
          %v4528 = vand.u32 %v4102, 2147483648
          %v4529 = vor.u32 1.1754944e-38, %v4528
          %v4530 = vsel %vm4527, %v4529, %v4525
          %v4531 = vrcp.pop %v4103
          %v4532 = vmul.f32 %v4103, %v4531
          %v4533 = vsub.f32 1.0, %v4532
          %v4534 = vmul.f32 %v4531, %v4533
          %v4535 = vadd.f32 %v4531, %v4534
          %vm4536 = vweird.f32 %v4103
          %vm4537 = vweird.f32 %v4531
          %vm4538 = vmor %vm4536, %vm4537
          %v4539 = vsel %vm4538, %v4531, %v4535
          %v4540 = vand.u32 2147483647, %v4103
          %vm4541 = vcmp.eq.f32.partialorder %v4540, 8.507059e+37
          %v4542 = vand.u32 %v4103, 2147483648
          %v4543 = vor.u32 1.1754944e-38, %v4542
          %v4544 = vsel %vm4541, %v4543, %v4539
          %v4545 = vrcp.pop %v4104
          %v4546 = vmul.f32 %v4104, %v4545
          %v4547 = vsub.f32 1.0, %v4546
          %v4548 = vmul.f32 %v4545, %v4547
          %v4549 = vadd.f32 %v4545, %v4548
          %vm4550 = vweird.f32 %v4104
          %vm4551 = vweird.f32 %v4545
          %vm4552 = vmor %vm4550, %vm4551
          %v4553 = vsel %vm4552, %v4545, %v4549
          %v4554 = vand.u32 2147483647, %v4104
          %vm4555 = vcmp.eq.f32.partialorder %v4554, 8.507059e+37
          %v4556 = vand.u32 %v4104, 2147483648
          %v4557 = vor.u32 1.1754944e-38, %v4556
          %v4558 = vsel %vm4555, %v4557, %v4553
          %v4559 = vrcp.pop %v4105
          %v4560 = vmul.f32 %v4105, %v4559
          %v4561 = vsub.f32 1.0, %v4560
          %v4562 = vmul.f32 %v4559, %v4561
          %v4563 = vadd.f32 %v4559, %v4562
          %vm4564 = vweird.f32 %v4105
          %vm4565 = vweird.f32 %v4559
          %vm4566 = vmor %vm4564, %vm4565
          %v4567 = vsel %vm4566, %v4559, %v4563
          %v4568 = vand.u32 2147483647, %v4105
          %vm4569 = vcmp.eq.f32.partialorder %v4568, 8.507059e+37
          %v4570 = vand.u32 %v4105, 2147483648
          %v4571 = vor.u32 1.1754944e-38, %v4570
          %v4572 = vsel %vm4569, %v4571, %v4567
          %v4573 = vrcp.pop %v4106
          %v4574 = vmul.f32 %v4106, %v4573
          %v4575 = vsub.f32 1.0, %v4574
          %v4576 = vmul.f32 %v4573, %v4575
          %v4577 = vadd.f32 %v4573, %v4576
          %vm4578 = vweird.f32 %v4106
          %vm4579 = vweird.f32 %v4573
          %vm4580 = vmor %vm4578, %vm4579
          %v4581 = vsel %vm4580, %v4573, %v4577
          %v4582 = vand.u32 2147483647, %v4106
          %vm4583 = vcmp.eq.f32.partialorder %v4582, 8.507059e+37
          %v4584 = vand.u32 %v4106, 2147483648
          %v4585 = vor.u32 1.1754944e-38, %v4584
          %v4586 = vsel %vm4583, %v4585, %v4581
          %v4587 = vrcp.pop %v4107
          %v4588 = vmul.f32 %v4107, %v4587
          %v4589 = vsub.f32 1.0, %v4588
          %v4590 = vmul.f32 %v4587, %v4589
          %v4591 = vadd.f32 %v4587, %v4590
          %vm4592 = vweird.f32 %v4107
          %vm4593 = vweird.f32 %v4587
          %vm4594 = vmor %vm4592, %vm4593
          %v4595 = vsel %vm4594, %v4587, %v4591
          %v4596 = vand.u32 2147483647, %v4107
          %vm4597 = vcmp.eq.f32.partialorder %v4596, 8.507059e+37
          %v4598 = vand.u32 %v4107, 2147483648
          %v4599 = vor.u32 1.1754944e-38, %v4598
          %v4600 = vsel %vm4597, %v4599, %v4595
          %v4601 = vrcp.pop %v4108
          %v4602 = vmul.f32 %v4108, %v4601
          %v4603 = vsub.f32 1.0, %v4602
          %v4604 = vmul.f32 %v4601, %v4603
          %v4605 = vadd.f32 %v4601, %v4604
          %vm4606 = vweird.f32 %v4108
          %vm4607 = vweird.f32 %v4601
          %vm4608 = vmor %vm4606, %vm4607
          %v4609 = vsel %vm4608, %v4601, %v4605
          %v4610 = vand.u32 2147483647, %v4108
          %vm4611 = vcmp.eq.f32.partialorder %v4610, 8.507059e+37
          %v4612 = vand.u32 %v4108, 2147483648
          %v4613 = vor.u32 1.1754944e-38, %v4612
          %v4614 = vsel %vm4611, %v4613, %v4609
          %v4615 = vrcp.pop %v4109
          %v4616 = vmul.f32 %v4109, %v4615
          %v4617 = vsub.f32 1.0, %v4616
          %v4618 = vmul.f32 %v4615, %v4617
          %v4619 = vadd.f32 %v4615, %v4618
          %vm4620 = vweird.f32 %v4109
          %vm4621 = vweird.f32 %v4615
          %vm4622 = vmor %vm4620, %vm4621
          %v4623 = vsel %vm4622, %v4615, %v4619
          %v4624 = vand.u32 2147483647, %v4109
          %vm4625 = vcmp.eq.f32.partialorder %v4624, 8.507059e+37
          %v4626 = vand.u32 %v4109, 2147483648
          %v4627 = vor.u32 1.1754944e-38, %v4626
          %v4628 = vsel %vm4625, %v4627, %v4623
          %v4629 = vrcp.pop %v4110
          %v4630 = vmul.f32 %v4110, %v4629
          %v4631 = vsub.f32 1.0, %v4630
          %v4632 = vmul.f32 %v4629, %v4631
          %v4633 = vadd.f32 %v4629, %v4632
          %vm4634 = vweird.f32 %v4110
          %vm4635 = vweird.f32 %v4629
          %vm4636 = vmor %vm4634, %vm4635
          %v4637 = vsel %vm4636, %v4629, %v4633
          %v4638 = vand.u32 2147483647, %v4110
          %vm4639 = vcmp.eq.f32.partialorder %v4638, 8.507059e+37
          %v4640 = vand.u32 %v4110, 2147483648
          %v4641 = vor.u32 1.1754944e-38, %v4640
          %v4642 = vsel %vm4639, %v4641, %v4637
          %v4643 = vrcp.pop %v4111
          %v4644 = vmul.f32 %v4111, %v4643
          %v4645 = vsub.f32 1.0, %v4644
          %v4646 = vmul.f32 %v4643, %v4645
          %v4647 = vadd.f32 %v4643, %v4646
          %vm4648 = vweird.f32 %v4111
          %vm4649 = vweird.f32 %v4643
          %vm4650 = vmor %vm4648, %vm4649
          %v4651 = vsel %vm4650, %v4643, %v4647
          %v4652 = vand.u32 2147483647, %v4111
          %vm4653 = vcmp.eq.f32.partialorder %v4652, 8.507059e+37
          %v4654 = vand.u32 %v4111, 2147483648
          %v4655 = vor.u32 1.1754944e-38, %v4654
          %v4656 = vsel %vm4653, %v4655, %v4651
          %v4657 = vrcp.pop %v4112
          %v4658 = vmul.f32 %v4112, %v4657
          %v4659 = vsub.f32 1.0, %v4658
          %v4660 = vmul.f32 %v4657, %v4659
          %v4661 = vadd.f32 %v4657, %v4660
          %vm4662 = vweird.f32 %v4112
          %vm4663 = vweird.f32 %v4657
          %vm4664 = vmor %vm4662, %vm4663
          %v4665 = vsel %vm4664, %v4657, %v4661
          %v4666 = vand.u32 2147483647, %v4112
          %vm4667 = vcmp.eq.f32.partialorder %v4666, 8.507059e+37
          %v4668 = vand.u32 %v4112, 2147483648
          %v4669 = vor.u32 1.1754944e-38, %v4668
          %v4670 = vsel %vm4667, %v4669, %v4665
          %v4671 = vrcp.pop %v4113
          %v4672 = vmul.f32 %v4113, %v4671
          %v4673 = vsub.f32 1.0, %v4672
          %v4674 = vmul.f32 %v4671, %v4673
          %v4675 = vadd.f32 %v4671, %v4674
          %vm4676 = vweird.f32 %v4113
          %vm4677 = vweird.f32 %v4671
          %vm4678 = vmor %vm4676, %vm4677
          %v4679 = vsel %vm4678, %v4671, %v4675
          %v4680 = vand.u32 2147483647, %v4113
          %vm4681 = vcmp.eq.f32.partialorder %v4680, 8.507059e+37
          %v4682 = vand.u32 %v4113, 2147483648
          %v4683 = vor.u32 1.1754944e-38, %v4682
          %v4684 = vsel %vm4681, %v4683, %v4679
          %v4685 = vrcp.pop %v4114
          %v4686 = vmul.f32 %v4114, %v4685
          %v4687 = vsub.f32 1.0, %v4686
          %v4688 = vmul.f32 %v4685, %v4687
          %v4689 = vadd.f32 %v4685, %v4688
          %vm4690 = vweird.f32 %v4114
          %vm4691 = vweird.f32 %v4685
          %vm4692 = vmor %vm4690, %vm4691
          %v4693 = vsel %vm4692, %v4685, %v4689
          %v4694 = vand.u32 2147483647, %v4114
          %vm4695 = vcmp.eq.f32.partialorder %v4694, 8.507059e+37
          %v4696 = vand.u32 %v4114, 2147483648
          %v4697 = vor.u32 1.1754944e-38, %v4696
          %v4698 = vsel %vm4695, %v4697, %v4693
          %v4699 = vrcp.pop %v4115
          %v4700 = vmul.f32 %v4115, %v4699
          %v4701 = vsub.f32 1.0, %v4700
          %v4702 = vmul.f32 %v4699, %v4701
          %v4703 = vadd.f32 %v4699, %v4702
          %vm4704 = vweird.f32 %v4115
          %vm4705 = vweird.f32 %v4699
          %vm4706 = vmor %vm4704, %vm4705
          %v4707 = vsel %vm4706, %v4699, %v4703
          %v4708 = vand.u32 2147483647, %v4115
          %vm4709 = vcmp.eq.f32.partialorder %v4708, 8.507059e+37
          %v4710 = vand.u32 %v4115, 2147483648
          %v4711 = vor.u32 1.1754944e-38, %v4710
          %v4712 = vsel %vm4709, %v4711, %v4707
          %v4713 = vrcp.pop %v4116
          %v4714 = vmul.f32 %v4116, %v4713
          %v4715 = vsub.f32 1.0, %v4714
          %v4716 = vmul.f32 %v4713, %v4715
          %v4717 = vadd.f32 %v4713, %v4716
          %vm4718 = vweird.f32 %v4116
          %vm4719 = vweird.f32 %v4713
          %vm4720 = vmor %vm4718, %vm4719
          %v4721 = vsel %vm4720, %v4713, %v4717
          %v4722 = vand.u32 2147483647, %v4116
          %vm4723 = vcmp.eq.f32.partialorder %v4722, 8.507059e+37
          %v4724 = vand.u32 %v4116, 2147483648
          %v4725 = vor.u32 1.1754944e-38, %v4724
          %v4726 = vsel %vm4723, %v4725, %v4721
          %v4727 = vrcp.pop %v4117
          %v4728 = vmul.f32 %v4117, %v4727
          %v4729 = vsub.f32 1.0, %v4728
          %v4730 = vmul.f32 %v4727, %v4729
          %v4731 = vadd.f32 %v4727, %v4730
          %vm4732 = vweird.f32 %v4117
          %vm4733 = vweird.f32 %v4727
          %vm4734 = vmor %vm4732, %vm4733
          %v4735 = vsel %vm4734, %v4727, %v4731
          %v4736 = vand.u32 2147483647, %v4117
          %vm4737 = vcmp.eq.f32.partialorder %v4736, 8.507059e+37
          %v4738 = vand.u32 %v4117, 2147483648
          %v4739 = vor.u32 1.1754944e-38, %v4738
          %v4740 = vsel %vm4737, %v4739, %v4735
          %v4741 = vrcp.pop %v4118
          %v4742 = vmul.f32 %v4118, %v4741
          %v4743 = vsub.f32 1.0, %v4742
          %v4744 = vmul.f32 %v4741, %v4743
          %v4745 = vadd.f32 %v4741, %v4744
          %vm4746 = vweird.f32 %v4118
          %vm4747 = vweird.f32 %v4741
          %vm4748 = vmor %vm4746, %vm4747
          %v4749 = vsel %vm4748, %v4741, %v4745
          %v4750 = vand.u32 2147483647, %v4118
          %vm4751 = vcmp.eq.f32.partialorder %v4750, 8.507059e+37
          %v4752 = vand.u32 %v4118, 2147483648
          %v4753 = vor.u32 1.1754944e-38, %v4752
          %v4754 = vsel %vm4751, %v4753, %v4749
          %v4755 = vrcp.pop %v4119
          %v4756 = vmul.f32 %v4119, %v4755
          %v4757 = vsub.f32 1.0, %v4756
          %v4758 = vmul.f32 %v4755, %v4757
          %v4759 = vadd.f32 %v4755, %v4758
          %vm4760 = vweird.f32 %v4119
          %vm4761 = vweird.f32 %v4755
          %vm4762 = vmor %vm4760, %vm4761
          %v4763 = vsel %vm4762, %v4755, %v4759
          %v4764 = vand.u32 2147483647, %v4119
          %vm4765 = vcmp.eq.f32.partialorder %v4764, 8.507059e+37
          %v4766 = vand.u32 %v4119, 2147483648
          %v4767 = vor.u32 1.1754944e-38, %v4766
          %v4768 = vsel %vm4765, %v4767, %v4763
          %v4769 = vrcp.pop %v4120
          %v4770 = vmul.f32 %v4120, %v4769
          %v4771 = vsub.f32 1.0, %v4770
          %v4772 = vmul.f32 %v4769, %v4771
          %v4773 = vadd.f32 %v4769, %v4772
          %vm4774 = vweird.f32 %v4120
          %vm4775 = vweird.f32 %v4769
          %vm4776 = vmor %vm4774, %vm4775
          %v4777 = vsel %vm4776, %v4769, %v4773
          %v4778 = vand.u32 2147483647, %v4120
          %vm4779 = vcmp.eq.f32.partialorder %v4778, 8.507059e+37
          %v4780 = vand.u32 %v4120, 2147483648
          %v4781 = vor.u32 1.1754944e-38, %v4780
          %v4782 = vsel %vm4779, %v4781, %v4777
          %v4783 = vrcp.pop %v4121
          %v4784 = vmul.f32 %v4121, %v4783
          %v4785 = vsub.f32 1.0, %v4784
          %v4786 = vmul.f32 %v4783, %v4785
          %v4787 = vadd.f32 %v4783, %v4786
          %vm4788 = vweird.f32 %v4121
          %vm4789 = vweird.f32 %v4783
          %vm4790 = vmor %vm4788, %vm4789
          %v4791 = vsel %vm4790, %v4783, %v4787
          %v4792 = vand.u32 2147483647, %v4121
          %vm4793 = vcmp.eq.f32.partialorder %v4792, 8.507059e+37
          %v4794 = vand.u32 %v4121, 2147483648
          %v4795 = vor.u32 1.1754944e-38, %v4794
          %v4796 = vsel %vm4793, %v4795, %v4791
          %v4797 = vrcp.pop %v4122
          %v4798 = vmul.f32 %v4122, %v4797
          %v4799 = vsub.f32 1.0, %v4798
          %v4800 = vmul.f32 %v4797, %v4799
          %v4801 = vadd.f32 %v4797, %v4800
          %vm4802 = vweird.f32 %v4122
          %vm4803 = vweird.f32 %v4797
          %vm4804 = vmor %vm4802, %vm4803
          %v4805 = vsel %vm4804, %v4797, %v4801
          %v4806 = vand.u32 2147483647, %v4122
          %vm4807 = vcmp.eq.f32.partialorder %v4806, 8.507059e+37
          %v4808 = vand.u32 %v4122, 2147483648
          %v4809 = vor.u32 1.1754944e-38, %v4808
          %v4810 = vsel %vm4807, %v4809, %v4805
          %v4811 = vrcp.pop %v4123
          %v4812 = vmul.f32 %v4123, %v4811
          %v4813 = vsub.f32 1.0, %v4812
          %v4814 = vmul.f32 %v4811, %v4813
          %v4815 = vadd.f32 %v4811, %v4814
          %vm4816 = vweird.f32 %v4123
          %vm4817 = vweird.f32 %v4811
          %vm4818 = vmor %vm4816, %vm4817
          %v4819 = vsel %vm4818, %v4811, %v4815
          %v4820 = vand.u32 2147483647, %v4123
          %vm4821 = vcmp.eq.f32.partialorder %v4820, 8.507059e+37
          %v4822 = vand.u32 %v4123, 2147483648
          %v4823 = vor.u32 1.1754944e-38, %v4822
          %v4824 = vsel %vm4821, %v4823, %v4819
          %v4825 = vrcp.pop %v4124
          %v4826 = vmul.f32 %v4124, %v4825
          %v4827 = vsub.f32 1.0, %v4826
          %v4828 = vmul.f32 %v4825, %v4827
          %v4829 = vadd.f32 %v4825, %v4828
          %vm4830 = vweird.f32 %v4124
          %vm4831 = vweird.f32 %v4825
          %vm4832 = vmor %vm4830, %vm4831
          %v4833 = vsel %vm4832, %v4825, %v4829
          %v4834 = vand.u32 2147483647, %v4124
          %vm4835 = vcmp.eq.f32.partialorder %v4834, 8.507059e+37
          %v4836 = vand.u32 %v4124, 2147483648
          %v4837 = vor.u32 1.1754944e-38, %v4836
          %v4838 = vsel %vm4835, %v4837, %v4833
          %v4839 = vrcp.pop %v4125
          %v4840 = vmul.f32 %v4125, %v4839
          %v4841 = vsub.f32 1.0, %v4840
          %v4842 = vmul.f32 %v4839, %v4841
          %v4843 = vadd.f32 %v4839, %v4842
          %vm4844 = vweird.f32 %v4125
          %vm4845 = vweird.f32 %v4839
          %vm4846 = vmor %vm4844, %vm4845
          %v4847 = vsel %vm4846, %v4839, %v4843
          %v4848 = vand.u32 2147483647, %v4125
          %vm4849 = vcmp.eq.f32.partialorder %v4848, 8.507059e+37
          %v4850 = vand.u32 %v4125, 2147483648
          %v4851 = vor.u32 1.1754944e-38, %v4850
          %v4852 = vsel %vm4849, %v4851, %v4847
          %v4853 = vrcp.pop %v4126
          %v4854 = vmul.f32 %v4126, %v4853
          %v4855 = vsub.f32 1.0, %v4854
          %v4856 = vmul.f32 %v4853, %v4855
          %v4857 = vadd.f32 %v4853, %v4856
          %vm4858 = vweird.f32 %v4126
          %vm4859 = vweird.f32 %v4853
          %vm4860 = vmor %vm4858, %vm4859
          %v4861 = vsel %vm4860, %v4853, %v4857
          %v4862 = vand.u32 2147483647, %v4126
          %vm4863 = vcmp.eq.f32.partialorder %v4862, 8.507059e+37
          %v4864 = vand.u32 %v4126, 2147483648
          %v4865 = vor.u32 1.1754944e-38, %v4864
          %v4866 = vsel %vm4863, %v4865, %v4861
          %v4867 = vrcp.pop %v4127
          %v4868 = vmul.f32 %v4127, %v4867
          %v4869 = vsub.f32 1.0, %v4868
          %v4870 = vmul.f32 %v4867, %v4869
          %v4871 = vadd.f32 %v4867, %v4870
          %vm4872 = vweird.f32 %v4127
          %vm4873 = vweird.f32 %v4867
          %vm4874 = vmor %vm4872, %vm4873
          %v4875 = vsel %vm4874, %v4867, %v4871
          %v4876 = vand.u32 2147483647, %v4127
          %vm4877 = vcmp.eq.f32.partialorder %v4876, 8.507059e+37
          %v4878 = vand.u32 %v4127, 2147483648
          %v4879 = vor.u32 1.1754944e-38, %v4878
          %v4880 = vsel %vm4877, %v4879, %v4875
          %v4881 = vrcp.pop %v4128
          %v4882 = vmul.f32 %v4128, %v4881
          %v4883 = vsub.f32 1.0, %v4882
          %v4884 = vmul.f32 %v4881, %v4883
          %v4885 = vadd.f32 %v4881, %v4884
          %vm4886 = vweird.f32 %v4128
          %vm4887 = vweird.f32 %v4881
          %vm4888 = vmor %vm4886, %vm4887
          %v4889 = vsel %vm4888, %v4881, %v4885
          %v4890 = vand.u32 2147483647, %v4128
          %vm4891 = vcmp.eq.f32.partialorder %v4890, 8.507059e+37
          %v4892 = vand.u32 %v4128, 2147483648
          %v4893 = vor.u32 1.1754944e-38, %v4892
          %v4894 = vsel %vm4891, %v4893, %v4889
          %v4895 = vrcp.pop %v4129
          %v4896 = vmul.f32 %v4129, %v4895
          %v4897 = vsub.f32 1.0, %v4896
          %v4898 = vmul.f32 %v4895, %v4897
          %v4899 = vadd.f32 %v4895, %v4898
          %vm4900 = vweird.f32 %v4129
          %vm4901 = vweird.f32 %v4895
          %vm4902 = vmor %vm4900, %vm4901
          %v4903 = vsel %vm4902, %v4895, %v4899
          %v4904 = vand.u32 2147483647, %v4129
          %vm4905 = vcmp.eq.f32.partialorder %v4904, 8.507059e+37
          %v4906 = vand.u32 %v4129, 2147483648
          %v4907 = vor.u32 1.1754944e-38, %v4906
          %v4908 = vsel %vm4905, %v4907, %v4903
          %v4909 = vrcp.pop %v4130
          %v4910 = vmul.f32 %v4130, %v4909
          %v4911 = vsub.f32 1.0, %v4910
          %v4912 = vmul.f32 %v4909, %v4911
          %v4913 = vadd.f32 %v4909, %v4912
          %vm4914 = vweird.f32 %v4130
          %vm4915 = vweird.f32 %v4909
          %vm4916 = vmor %vm4914, %vm4915
          %v4917 = vsel %vm4916, %v4909, %v4913
          %v4918 = vand.u32 2147483647, %v4130
          %vm4919 = vcmp.eq.f32.partialorder %v4918, 8.507059e+37
          %v4920 = vand.u32 %v4130, 2147483648
          %v4921 = vor.u32 1.1754944e-38, %v4920
          %v4922 = vsel %vm4919, %v4921, %v4917
          %v4923 = vrcp.pop %v4131
          %v4924 = vmul.f32 %v4131, %v4923
          %v4925 = vsub.f32 1.0, %v4924
          %v4926 = vmul.f32 %v4923, %v4925
          %v4927 = vadd.f32 %v4923, %v4926
          %vm4928 = vweird.f32 %v4131
          %vm4929 = vweird.f32 %v4923
          %vm4930 = vmor %vm4928, %vm4929
          %v4931 = vsel %vm4930, %v4923, %v4927
          %v4932 = vand.u32 2147483647, %v4131
          %vm4933 = vcmp.eq.f32.partialorder %v4932, 8.507059e+37
          %v4934 = vand.u32 %v4131, 2147483648
          %v4935 = vor.u32 1.1754944e-38, %v4934
          %v4936 = vsel %vm4933, %v4935, %v4931
          %v4937 = vrcp.pop %v4132
          %v4938 = vmul.f32 %v4132, %v4937
          %v4939 = vsub.f32 1.0, %v4938
          %v4940 = vmul.f32 %v4937, %v4939
          %v4941 = vadd.f32 %v4937, %v4940
          %vm4942 = vweird.f32 %v4132
          %vm4943 = vweird.f32 %v4937
          %vm4944 = vmor %vm4942, %vm4943
          %v4945 = vsel %vm4944, %v4937, %v4941
          %v4946 = vand.u32 2147483647, %v4132
          %vm4947 = vcmp.eq.f32.partialorder %v4946, 8.507059e+37
          %v4948 = vand.u32 %v4132, 2147483648
          %v4949 = vor.u32 1.1754944e-38, %v4948
          %v4950 = vsel %vm4947, %v4949, %v4945
          %v4951 = vrcp.pop %v4133
          %v4952 = vmul.f32 %v4133, %v4951
          %v4953 = vsub.f32 1.0, %v4952
          %v4954 = vmul.f32 %v4951, %v4953
          %v4955 = vadd.f32 %v4951, %v4954
          %vm4956 = vweird.f32 %v4133
          %vm4957 = vweird.f32 %v4951
          %vm4958 = vmor %vm4956, %vm4957
          %v4959 = vsel %vm4958, %v4951, %v4955
          %v4960 = vand.u32 2147483647, %v4133
          %vm4961 = vcmp.eq.f32.partialorder %v4960, 8.507059e+37
          %v4962 = vand.u32 %v4133, 2147483648
          %v4963 = vor.u32 1.1754944e-38, %v4962
          %v4964 = vsel %vm4961, %v4963, %v4959
          %v4965 = vrcp.pop %v4134
          %v4966 = vmul.f32 %v4134, %v4965
          %v4967 = vsub.f32 1.0, %v4966
          %v4968 = vmul.f32 %v4965, %v4967
          %v4969 = vadd.f32 %v4965, %v4968
          %vm4970 = vweird.f32 %v4134
          %vm4971 = vweird.f32 %v4965
          %vm4972 = vmor %vm4970, %vm4971
          %v4973 = vsel %vm4972, %v4965, %v4969
          %v4974 = vand.u32 2147483647, %v4134
          %vm4975 = vcmp.eq.f32.partialorder %v4974, 8.507059e+37
          %v4976 = vand.u32 %v4134, 2147483648
          %v4977 = vor.u32 1.1754944e-38, %v4976
          %v4978 = vsel %vm4975, %v4977, %v4973
          %v4979 = vrcp.pop %v4135
          %v4980 = vmul.f32 %v4135, %v4979
          %v4981 = vsub.f32 1.0, %v4980
          %v4982 = vmul.f32 %v4979, %v4981
          %v4983 = vadd.f32 %v4979, %v4982
          %vm4984 = vweird.f32 %v4135
          %vm4985 = vweird.f32 %v4979
          %vm4986 = vmor %vm4984, %vm4985
          %v4987 = vsel %vm4986, %v4979, %v4983
          %v4988 = vand.u32 2147483647, %v4135
          %vm4989 = vcmp.eq.f32.partialorder %v4988, 8.507059e+37
          %v4990 = vand.u32 %v4135, 2147483648
          %v4991 = vor.u32 1.1754944e-38, %v4990
          %v4992 = vsel %vm4989, %v4991, %v4987
          %v4993 = vrcp.pop %v4136
          %v4994 = vmul.f32 %v4136, %v4993
          %v4995 = vsub.f32 1.0, %v4994
          %v4996 = vmul.f32 %v4993, %v4995
          %v4997 = vadd.f32 %v4993, %v4996
          %vm4998 = vweird.f32 %v4136
          %vm4999 = vweird.f32 %v4993
          %vm5000 = vmor %vm4998, %vm4999
          %v5001 = vsel %vm5000, %v4993, %v4997
          %v5002 = vand.u32 2147483647, %v4136
          %vm5003 = vcmp.eq.f32.partialorder %v5002, 8.507059e+37
          %v5004 = vand.u32 %v4136, 2147483648
          %v5005 = vor.u32 1.1754944e-38, %v5004
          %v5006 = vsel %vm5003, %v5005, %v5001
          %v5007 = vrcp.pop %v4137
          %v5008 = vmul.f32 %v4137, %v5007
          %v5009 = vsub.f32 1.0, %v5008
          %v5010 = vmul.f32 %v5007, %v5009
          %v5011 = vadd.f32 %v5007, %v5010
          %vm5012 = vweird.f32 %v4137
          %vm5013 = vweird.f32 %v5007
          %vm5014 = vmor %vm5012, %vm5013
          %v5015 = vsel %vm5014, %v5007, %v5011
          %v5016 = vand.u32 2147483647, %v4137
          %vm5017 = vcmp.eq.f32.partialorder %v5016, 8.507059e+37
          %v5018 = vand.u32 %v4137, 2147483648
          %v5019 = vor.u32 1.1754944e-38, %v5018
          %v5020 = vsel %vm5017, %v5019, %v5015
          %v5021 = vrcp.pop %v4138
          %v5022 = vmul.f32 %v4138, %v5021
          %v5023 = vsub.f32 1.0, %v5022
          %v5024 = vmul.f32 %v5021, %v5023
          %v5025 = vadd.f32 %v5021, %v5024
          %vm5026 = vweird.f32 %v4138
          %vm5027 = vweird.f32 %v5021
          %vm5028 = vmor %vm5026, %vm5027
          %v5029 = vsel %vm5028, %v5021, %v5025
          %v5030 = vand.u32 2147483647, %v4138
          %vm5031 = vcmp.eq.f32.partialorder %v5030, 8.507059e+37
          %v5032 = vand.u32 %v4138, 2147483648
          %v5033 = vor.u32 1.1754944e-38, %v5032
          %v5034 = vsel %vm5031, %v5033, %v5029
          %v5035 = vld [vmem:[#allocation2] sm:$0xff]
          %v5036 = vld [vmem:[#allocation2 + $0x8] sm:$0xff]
          %v5037 = vld [vmem:[#allocation2 + $0x10] sm:$0xff]
          %v5038 = vld [vmem:[#allocation2 + $0x18] sm:$0xff]
          %v5039 = vld [vmem:[#allocation2 + $0x20] sm:$0xff]
          %v5040 = vld [vmem:[#allocation2 + $0x28] sm:$0xff]
          %v5041 = vld [vmem:[#allocation2 + $0x30] sm:$0xff]
          %v5042 = vld [vmem:[#allocation2 + $0x38] sm:$0xff]
          %v5043 = vld [vmem:[#allocation2 + $0x40] sm:$0xff]
          %v5044 = vld [vmem:[#allocation2 + $0x48] sm:$0xff]
          %v5045 = vld [vmem:[#allocation2 + $0x50] sm:$0xff]
          %v5046 = vld [vmem:[#allocation2 + $0x58] sm:$0xff]
          %v5047 = vld [vmem:[#allocation2 + $0x60] sm:$0xff]
          %v5048 = vld [vmem:[#allocation2 + $0x68] sm:$0xff]
          %v5049 = vld [vmem:[#allocation2 + $0x70] sm:$0xff]
          %v5050 = vld [vmem:[#allocation2 + $0x78] sm:$0xff]
          %v5051 = vld [vmem:[#allocation2 + $0x80] sm:$0xff]
          %v5052 = vld [vmem:[#allocation2 + $0x88] sm:$0xff]
          %v5053 = vld [vmem:[#allocation2 + $0x90] sm:$0xff]
          %v5054 = vld [vmem:[#allocation2 + $0x98] sm:$0xff]
          %v5055 = vld [vmem:[#allocation2 + $0xa0] sm:$0xff]
          %v5056 = vld [vmem:[#allocation2 + $0xa8] sm:$0xff]
          %v5057 = vld [vmem:[#allocation2 + $0xb0] sm:$0xff]
          %v5058 = vld [vmem:[#allocation2 + $0xb8] sm:$0xff]
          %v5059 = vld [vmem:[#allocation2 + $0xc0] sm:$0xff]
          %v5060 = vld [vmem:[#allocation2 + $0xc8] sm:$0xff]
          %v5061 = vld [vmem:[#allocation2 + $0xd0] sm:$0xff]
          %v5062 = vld [vmem:[#allocation2 + $0xd8] sm:$0xff]
          %v5063 = vld [vmem:[#allocation2 + $0xe0] sm:$0xff]
          %v5064 = vld [vmem:[#allocation2 + $0xe8] sm:$0xff]
          %v5065 = vld [vmem:[#allocation2 + $0xf0] sm:$0xff]
          %v5066 = vld [vmem:[#allocation2 + $0xf8] sm:$0xff]
          %v5067 = vld [vmem:[#allocation2 + $0x100] sm:$0xff]
          %v5068 = vld [vmem:[#allocation2 + $0x108] sm:$0xff]
          %v5069 = vld [vmem:[#allocation2 + $0x110] sm:$0xff]
          %v5070 = vld [vmem:[#allocation2 + $0x118] sm:$0xff]
          %v5071 = vld [vmem:[#allocation2 + $0x120] sm:$0xff]
          %v5072 = vld [vmem:[#allocation2 + $0x128] sm:$0xff]
          %v5073 = vld [vmem:[#allocation2 + $0x130] sm:$0xff]
          %v5074 = vld [vmem:[#allocation2 + $0x138] sm:$0xff]
          %v5075 = vld [vmem:[#allocation2 + $0x140] sm:$0xff]
          %v5076 = vld [vmem:[#allocation2 + $0x148] sm:$0xff]
          %v5077 = vld [vmem:[#allocation2 + $0x150] sm:$0xff]
          %v5078 = vld [vmem:[#allocation2 + $0x158] sm:$0xff]
          %v5079 = vld [vmem:[#allocation2 + $0x160] sm:$0xff]
          %v5080 = vld [vmem:[#allocation2 + $0x168] sm:$0xff]
          %v5081 = vld [vmem:[#allocation2 + $0x170] sm:$0xff]
          %v5082 = vld [vmem:[#allocation2 + $0x178] sm:$0xff]
          %v5083 = vld [vmem:[#allocation2 + $0x180] sm:$0xff]
          %v5084 = vld [vmem:[#allocation2 + $0x188] sm:$0xff]
          %v5085 = vld [vmem:[#allocation2 + $0x190] sm:$0xff]
          %v5086 = vld [vmem:[#allocation2 + $0x198] sm:$0xff]
          %v5087 = vld [vmem:[#allocation2 + $0x1a0] sm:$0xff]
          %v5088 = vld [vmem:[#allocation2 + $0x1a8] sm:$0xff]
          %v5089 = vld [vmem:[#allocation2 + $0x1b0] sm:$0xff]
          %v5090 = vld [vmem:[#allocation2 + $0x1b8] sm:$0xff]
          %v5091 = vld [vmem:[#allocation2 + $0x1c0] sm:$0xff]
          %v5092 = vld [vmem:[#allocation2 + $0x1c8] sm:$0xff]
          %v5093 = vld [vmem:[#allocation2 + $0x1d0] sm:$0xff]
          %v5094 = vld [vmem:[#allocation2 + $0x1d8] sm:$0xff]
          %v5095 = vld [vmem:[#allocation2 + $0x1e0] sm:$0xff]
          %v5096 = vld [vmem:[#allocation2 + $0x1e8] sm:$0xff]
          %v5097 = vld [vmem:[#allocation2 + $0x1f0] sm:$0xff]
          %v5098 = vld [vmem:[#allocation2 + $0x1f8] sm:$0xff]
          %5100 = vset.pattern.permute.xlu0 0
          %5101 = vperm.xlu0 %5100, %v4152
          %v5102 = vpop.permute.xlu0 %5101
          %5105 = vset.pattern.permute.xlu0 0
          %5106 = vperm.xlu0 %5105, %v4166
          %v5107 = vpop.permute.xlu0 %5106
          %5110 = vset.pattern.permute.xlu0 0
          %5111 = vperm.xlu0 %5110, %v4180
          %v5112 = vpop.permute.xlu0 %5111
          %5115 = vset.pattern.permute.xlu0 0
          %5116 = vperm.xlu0 %5115, %v4194
          %v5117 = vpop.permute.xlu0 %5116
          %5120 = vset.pattern.permute.xlu0 0
          %5121 = vperm.xlu0 %5120, %v4208
          %v5122 = vpop.permute.xlu0 %5121
          %5125 = vset.pattern.permute.xlu0 0
          %5126 = vperm.xlu0 %5125, %v4222
          %v5127 = vpop.permute.xlu0 %5126
          %5130 = vset.pattern.permute.xlu0 0
          %5131 = vperm.xlu0 %5130, %v4236
          %v5132 = vpop.permute.xlu0 %5131
          %5135 = vset.pattern.permute.xlu0 0
          %5136 = vperm.xlu0 %5135, %v4250
          %v5137 = vpop.permute.xlu0 %5136
          %5140 = vset.pattern.permute.xlu0 0
          %5141 = vperm.xlu0 %5140, %v4264
          %v5142 = vpop.permute.xlu0 %5141
          %5145 = vset.pattern.permute.xlu0 0
          %5146 = vperm.xlu0 %5145, %v4278
          %v5147 = vpop.permute.xlu0 %5146
          %5150 = vset.pattern.permute.xlu0 0
          %5151 = vperm.xlu0 %5150, %v4292
          %v5152 = vpop.permute.xlu0 %5151
          %5155 = vset.pattern.permute.xlu0 0
          %5156 = vperm.xlu0 %5155, %v4306
          %v5157 = vpop.permute.xlu0 %5156
          %5160 = vset.pattern.permute.xlu0 0
          %5161 = vperm.xlu0 %5160, %v4320
          %v5162 = vpop.permute.xlu0 %5161
          %5165 = vset.pattern.permute.xlu0 0
          %5166 = vperm.xlu0 %5165, %v4334
          %v5167 = vpop.permute.xlu0 %5166
          %5170 = vset.pattern.permute.xlu0 0
          %5171 = vperm.xlu0 %5170, %v4348
          %v5172 = vpop.permute.xlu0 %5171
          %5175 = vset.pattern.permute.xlu0 0
          %5176 = vperm.xlu0 %5175, %v4362
          %v5177 = vpop.permute.xlu0 %5176
          %5180 = vset.pattern.permute.xlu0 0
          %5181 = vperm.xlu0 %5180, %v4376
          %v5182 = vpop.permute.xlu0 %5181
          %5185 = vset.pattern.permute.xlu0 0
          %5186 = vperm.xlu0 %5185, %v4390
          %v5187 = vpop.permute.xlu0 %5186
          %5190 = vset.pattern.permute.xlu0 0
          %5191 = vperm.xlu0 %5190, %v4404
          %v5192 = vpop.permute.xlu0 %5191
          %5195 = vset.pattern.permute.xlu0 0
          %5196 = vperm.xlu0 %5195, %v4418
          %v5197 = vpop.permute.xlu0 %5196
          %5200 = vset.pattern.permute.xlu0 0
          %5201 = vperm.xlu0 %5200, %v4432
          %v5202 = vpop.permute.xlu0 %5201
          %5205 = vset.pattern.permute.xlu0 0
          %5206 = vperm.xlu0 %5205, %v4446
          %v5207 = vpop.permute.xlu0 %5206
          %5210 = vset.pattern.permute.xlu0 0
          %5211 = vperm.xlu0 %5210, %v4460
          %v5212 = vpop.permute.xlu0 %5211
          %5215 = vset.pattern.permute.xlu0 0
          %5216 = vperm.xlu0 %5215, %v4474
          %v5217 = vpop.permute.xlu0 %5216
          %5220 = vset.pattern.permute.xlu0 0
          %5221 = vperm.xlu0 %5220, %v4488
          %v5222 = vpop.permute.xlu0 %5221
          %5225 = vset.pattern.permute.xlu0 0
          %5226 = vperm.xlu0 %5225, %v4502
          %v5227 = vpop.permute.xlu0 %5226
          %5230 = vset.pattern.permute.xlu0 0
          %5231 = vperm.xlu0 %5230, %v4516
          %v5232 = vpop.permute.xlu0 %5231
          %5235 = vset.pattern.permute.xlu0 0
          %5236 = vperm.xlu0 %5235, %v4530
          %v5237 = vpop.permute.xlu0 %5236
          %5240 = vset.pattern.permute.xlu0 0
          %5241 = vperm.xlu0 %5240, %v4544
          %v5242 = vpop.permute.xlu0 %5241
          %5245 = vset.pattern.permute.xlu0 0
          %5246 = vperm.xlu0 %5245, %v4558
          %v5247 = vpop.permute.xlu0 %5246
          %5250 = vset.pattern.permute.xlu0 0
          %5251 = vperm.xlu0 %5250, %v4572
          %v5252 = vpop.permute.xlu0 %5251
          %5255 = vset.pattern.permute.xlu0 0
          %5256 = vperm.xlu0 %5255, %v4586
          %v5257 = vpop.permute.xlu0 %5256
          %5260 = vset.pattern.permute.xlu0 0
          %5261 = vperm.xlu0 %5260, %v4600
          %v5262 = vpop.permute.xlu0 %5261
          %5265 = vset.pattern.permute.xlu0 0
          %5266 = vperm.xlu0 %5265, %v4614
          %v5267 = vpop.permute.xlu0 %5266
          %5270 = vset.pattern.permute.xlu0 0
          %5271 = vperm.xlu0 %5270, %v4628
          %v5272 = vpop.permute.xlu0 %5271
          %5275 = vset.pattern.permute.xlu0 0
          %5276 = vperm.xlu0 %5275, %v4642
          %v5277 = vpop.permute.xlu0 %5276
          %5280 = vset.pattern.permute.xlu0 0
          %5281 = vperm.xlu0 %5280, %v4656
          %v5282 = vpop.permute.xlu0 %5281
          %5285 = vset.pattern.permute.xlu0 0
          %5286 = vperm.xlu0 %5285, %v4670
          %v5287 = vpop.permute.xlu0 %5286
          %5290 = vset.pattern.permute.xlu0 0
          %5291 = vperm.xlu0 %5290, %v4684
          %v5292 = vpop.permute.xlu0 %5291
          %5295 = vset.pattern.permute.xlu0 0
          %5296 = vperm.xlu0 %5295, %v4698
          %v5297 = vpop.permute.xlu0 %5296
          %5300 = vset.pattern.permute.xlu0 0
          %5301 = vperm.xlu0 %5300, %v4712
          %v5302 = vpop.permute.xlu0 %5301
          %5305 = vset.pattern.permute.xlu0 0
          %5306 = vperm.xlu0 %5305, %v4726
          %v5307 = vpop.permute.xlu0 %5306
          %5310 = vset.pattern.permute.xlu0 0
          %5311 = vperm.xlu0 %5310, %v4740
          %v5312 = vpop.permute.xlu0 %5311
          %5315 = vset.pattern.permute.xlu0 0
          %5316 = vperm.xlu0 %5315, %v4754
          %v5317 = vpop.permute.xlu0 %5316
          %5320 = vset.pattern.permute.xlu0 0
          %5321 = vperm.xlu0 %5320, %v4768
          %v5322 = vpop.permute.xlu0 %5321
          %5325 = vset.pattern.permute.xlu0 0
          %5326 = vperm.xlu0 %5325, %v4782
          %v5327 = vpop.permute.xlu0 %5326
          %5330 = vset.pattern.permute.xlu0 0
          %5331 = vperm.xlu0 %5330, %v4796
          %v5332 = vpop.permute.xlu0 %5331
          %5335 = vset.pattern.permute.xlu0 0
          %5336 = vperm.xlu0 %5335, %v4810
          %v5337 = vpop.permute.xlu0 %5336
          %5340 = vset.pattern.permute.xlu0 0
          %5341 = vperm.xlu0 %5340, %v4824
          %v5342 = vpop.permute.xlu0 %5341
          %5345 = vset.pattern.permute.xlu0 0
          %5346 = vperm.xlu0 %5345, %v4838
          %v5347 = vpop.permute.xlu0 %5346
          %5350 = vset.pattern.permute.xlu0 0
          %5351 = vperm.xlu0 %5350, %v4852
          %v5352 = vpop.permute.xlu0 %5351
          %5355 = vset.pattern.permute.xlu0 0
          %5356 = vperm.xlu0 %5355, %v4866
          %v5357 = vpop.permute.xlu0 %5356
          %5360 = vset.pattern.permute.xlu0 0
          %5361 = vperm.xlu0 %5360, %v4880
          %v5362 = vpop.permute.xlu0 %5361
          %5365 = vset.pattern.permute.xlu0 0
          %5366 = vperm.xlu0 %5365, %v4894
          %v5367 = vpop.permute.xlu0 %5366
          %5370 = vset.pattern.permute.xlu0 0
          %5371 = vperm.xlu0 %5370, %v4908
          %v5372 = vpop.permute.xlu0 %5371
          %5375 = vset.pattern.permute.xlu0 0
          %5376 = vperm.xlu0 %5375, %v4922
          %v5377 = vpop.permute.xlu0 %5376
          %5380 = vset.pattern.permute.xlu0 0
          %5381 = vperm.xlu0 %5380, %v4936
          %v5382 = vpop.permute.xlu0 %5381
          %5385 = vset.pattern.permute.xlu0 0
          %5386 = vperm.xlu0 %5385, %v4950
          %v5387 = vpop.permute.xlu0 %5386
          %5390 = vset.pattern.permute.xlu0 0
          %5391 = vperm.xlu0 %5390, %v4964
          %v5392 = vpop.permute.xlu0 %5391
          %5395 = vset.pattern.permute.xlu0 0
          %5396 = vperm.xlu0 %5395, %v4978
          %v5397 = vpop.permute.xlu0 %5396
          %5400 = vset.pattern.permute.xlu0 0
          %5401 = vperm.xlu0 %5400, %v4992
          %v5402 = vpop.permute.xlu0 %5401
          %5405 = vset.pattern.permute.xlu0 0
          %5406 = vperm.xlu0 %5405, %v5006
          %v5407 = vpop.permute.xlu0 %5406
          %5410 = vset.pattern.permute.xlu0 0
          %5411 = vperm.xlu0 %5410, %v5020
          %v5412 = vpop.permute.xlu0 %5411
          %5415 = vset.pattern.permute.xlu0 0
          %5416 = vperm.xlu0 %5415, %v5034
          %v5417 = vpop.permute.xlu0 %5416
          %v5419 = vmul.f32 %v5035, %v5102
          %v5420 = vmul.f32 %v5036, %v5107
          %v5421 = vmul.f32 %v5037, %v5112
          %v5422 = vmul.f32 %v5038, %v5117
          %v5423 = vmul.f32 %v5039, %v5122
          %v5424 = vmul.f32 %v5040, %v5127
          %v5425 = vmul.f32 %v5041, %v5132
          %v5426 = vmul.f32 %v5042, %v5137
          %v5427 = vmul.f32 %v5043, %v5142
          %v5428 = vmul.f32 %v5044, %v5147
          %v5429 = vmul.f32 %v5045, %v5152
          %v5430 = vmul.f32 %v5046, %v5157
          %v5431 = vmul.f32 %v5047, %v5162
          %v5432 = vmul.f32 %v5048, %v5167
          %v5433 = vmul.f32 %v5049, %v5172
          %v5434 = vmul.f32 %v5050, %v5177
          %v5435 = vmul.f32 %v5051, %v5182
          %v5436 = vmul.f32 %v5052, %v5187
          %v5437 = vmul.f32 %v5053, %v5192
          %v5438 = vmul.f32 %v5054, %v5197
          %v5439 = vmul.f32 %v5055, %v5202
          %v5440 = vmul.f32 %v5056, %v5207
          %v5441 = vmul.f32 %v5057, %v5212
          %v5442 = vmul.f32 %v5058, %v5217
          %v5443 = vmul.f32 %v5059, %v5222
          %v5444 = vmul.f32 %v5060, %v5227
          %v5445 = vmul.f32 %v5061, %v5232
          %v5446 = vmul.f32 %v5062, %v5237
          %v5447 = vmul.f32 %v5063, %v5242
          %v5448 = vmul.f32 %v5064, %v5247
          %v5449 = vmul.f32 %v5065, %v5252
          %v5450 = vmul.f32 %v5066, %v5257
          %v5451 = vmul.f32 %v5067, %v5262
          %v5452 = vmul.f32 %v5068, %v5267
          %v5453 = vmul.f32 %v5069, %v5272
          %v5454 = vmul.f32 %v5070, %v5277
          %v5455 = vmul.f32 %v5071, %v5282
          %v5456 = vmul.f32 %v5072, %v5287
          %v5457 = vmul.f32 %v5073, %v5292
          %v5458 = vmul.f32 %v5074, %v5297
          %v5459 = vmul.f32 %v5075, %v5302
          %v5460 = vmul.f32 %v5076, %v5307
          %v5461 = vmul.f32 %v5077, %v5312
          %v5462 = vmul.f32 %v5078, %v5317
          %v5463 = vmul.f32 %v5079, %v5322
          %v5464 = vmul.f32 %v5080, %v5327
          %v5465 = vmul.f32 %v5081, %v5332
          %v5466 = vmul.f32 %v5082, %v5337
          %v5467 = vmul.f32 %v5083, %v5342
          %v5468 = vmul.f32 %v5084, %v5347
          %v5469 = vmul.f32 %v5085, %v5352
          %v5470 = vmul.f32 %v5086, %v5357
          %v5471 = vmul.f32 %v5087, %v5362
          %v5472 = vmul.f32 %v5088, %v5367
          %v5473 = vmul.f32 %v5089, %v5372
          %v5474 = vmul.f32 %v5090, %v5377
          %v5475 = vmul.f32 %v5091, %v5382
          %v5476 = vmul.f32 %v5092, %v5387
          %v5477 = vmul.f32 %v5093, %v5392
          %v5478 = vmul.f32 %v5094, %v5397
          %v5479 = vmul.f32 %v5095, %v5402
          %v5480 = vmul.f32 %v5096, %v5407
          %v5481 = vmul.f32 %v5097, %v5412
          %v5482 = vmul.f32 %v5098, %v5417
          %v5483 = vld [vmem:[%s351] sm:$0xff]
          %v5484 = vld [vmem:[%s351 + $0x8] sm:$0xff]
          %v5485 = vld [vmem:[%s351 + $0x10] sm:$0xff]
          %v5486 = vld [vmem:[%s351 + $0x18] sm:$0xff]
          %v5487 = vld [vmem:[%s351 + $0x20] sm:$0xff]
          %v5488 = vld [vmem:[%s351 + $0x28] sm:$0xff]
          %v5489 = vld [vmem:[%s351 + $0x30] sm:$0xff]
          %v5490 = vld [vmem:[%s351 + $0x38] sm:$0xff]
          %v5491 = vld [vmem:[%s351 + $0x40] sm:$0xff]
          %v5492 = vld [vmem:[%s351 + $0x48] sm:$0xff]
          %v5493 = vld [vmem:[%s351 + $0x50] sm:$0xff]
          %v5494 = vld [vmem:[%s351 + $0x58] sm:$0xff]
          %v5495 = vld [vmem:[%s351 + $0x60] sm:$0xff]
          %v5496 = vld [vmem:[%s351 + $0x68] sm:$0xff]
          %v5497 = vld [vmem:[%s351 + $0x70] sm:$0xff]
          %v5498 = vld [vmem:[%s351 + $0x78] sm:$0xff]
          %v5499 = vld [vmem:[%s351 + $0x80] sm:$0xff]
          %v5500 = vld [vmem:[%s351 + $0x88] sm:$0xff]
          %v5501 = vld [vmem:[%s351 + $0x90] sm:$0xff]
          %v5502 = vld [vmem:[%s351 + $0x98] sm:$0xff]
          %v5503 = vld [vmem:[%s351 + $0xa0] sm:$0xff]
          %v5504 = vld [vmem:[%s351 + $0xa8] sm:$0xff]
          %v5505 = vld [vmem:[%s351 + $0xb0] sm:$0xff]
          %v5506 = vld [vmem:[%s351 + $0xb8] sm:$0xff]
          %v5507 = vld [vmem:[%s351 + $0xc0] sm:$0xff]
          %v5508 = vld [vmem:[%s351 + $0xc8] sm:$0xff]
          %v5509 = vld [vmem:[%s351 + $0xd0] sm:$0xff]
          %v5510 = vld [vmem:[%s351 + $0xd8] sm:$0xff]
          %v5511 = vld [vmem:[%s351 + $0xe0] sm:$0xff]
          %v5512 = vld [vmem:[%s351 + $0xe8] sm:$0xff]
          %v5513 = vld [vmem:[%s351 + $0xf0] sm:$0xff]
          %v5514 = vld [vmem:[%s351 + $0xf8] sm:$0xff]
          %v5515 = vld [vmem:[%s351 + $0x100] sm:$0xff]
          %v5516 = vld [vmem:[%s351 + $0x108] sm:$0xff]
          %v5517 = vld [vmem:[%s351 + $0x110] sm:$0xff]
          %v5518 = vld [vmem:[%s351 + $0x118] sm:$0xff]
          %v5519 = vld [vmem:[%s351 + $0x120] sm:$0xff]
          %v5520 = vld [vmem:[%s351 + $0x128] sm:$0xff]
          %v5521 = vld [vmem:[%s351 + $0x130] sm:$0xff]
          %v5522 = vld [vmem:[%s351 + $0x138] sm:$0xff]
          %v5523 = vld [vmem:[%s351 + $0x140] sm:$0xff]
          %v5524 = vld [vmem:[%s351 + $0x148] sm:$0xff]
          %v5525 = vld [vmem:[%s351 + $0x150] sm:$0xff]
          %v5526 = vld [vmem:[%s351 + $0x158] sm:$0xff]
          %v5527 = vld [vmem:[%s351 + $0x160] sm:$0xff]
          %v5528 = vld [vmem:[%s351 + $0x168] sm:$0xff]
          %v5529 = vld [vmem:[%s351 + $0x170] sm:$0xff]
          %v5530 = vld [vmem:[%s351 + $0x178] sm:$0xff]
          %v5531 = vld [vmem:[%s351 + $0x180] sm:$0xff]
          %v5532 = vld [vmem:[%s351 + $0x188] sm:$0xff]
          %v5533 = vld [vmem:[%s351 + $0x190] sm:$0xff]
          %v5534 = vld [vmem:[%s351 + $0x198] sm:$0xff]
          %v5535 = vld [vmem:[%s351 + $0x1a0] sm:$0xff]
          %v5536 = vld [vmem:[%s351 + $0x1a8] sm:$0xff]
          %v5537 = vld [vmem:[%s351 + $0x1b0] sm:$0xff]
          %v5538 = vld [vmem:[%s351 + $0x1b8] sm:$0xff]
          %v5539 = vld [vmem:[%s351 + $0x1c0] sm:$0xff]
          %v5540 = vld [vmem:[%s351 + $0x1c8] sm:$0xff]
          %v5541 = vld [vmem:[%s351 + $0x1d0] sm:$0xff]
          %v5542 = vld [vmem:[%s351 + $0x1d8] sm:$0xff]
          %v5543 = vld [vmem:[%s351 + $0x1e0] sm:$0xff]
          %v5544 = vld [vmem:[%s351 + $0x1e8] sm:$0xff]
          %v5545 = vld [vmem:[%s351 + $0x1f0] sm:$0xff]
          %v5546 = vld [vmem:[%s351 + $0x1f8] sm:$0xff]
          %v5547 = vld [vmem:[%s351 + $0x200] sm:$0xff]
          %v5548 = vld [vmem:[%s351 + $0x208] sm:$0xff]
          %v5549 = vld [vmem:[%s351 + $0x210] sm:$0xff]
          %v5550 = vld [vmem:[%s351 + $0x218] sm:$0xff]
          %v5551 = vld [vmem:[%s351 + $0x220] sm:$0xff]
          %v5552 = vld [vmem:[%s351 + $0x228] sm:$0xff]
          %v5553 = vld [vmem:[%s351 + $0x230] sm:$0xff]
          %v5554 = vld [vmem:[%s351 + $0x238] sm:$0xff]
          %v5555 = vld [vmem:[%s351 + $0x240] sm:$0xff]
          %v5556 = vld [vmem:[%s351 + $0x248] sm:$0xff]
          %v5557 = vld [vmem:[%s351 + $0x250] sm:$0xff]
          %v5558 = vld [vmem:[%s351 + $0x258] sm:$0xff]
          %v5559 = vld [vmem:[%s351 + $0x260] sm:$0xff]
          %v5560 = vld [vmem:[%s351 + $0x268] sm:$0xff]
          %v5561 = vld [vmem:[%s351 + $0x270] sm:$0xff]
          %v5562 = vld [vmem:[%s351 + $0x278] sm:$0xff]
          %v5563 = vld [vmem:[%s351 + $0x280] sm:$0xff]
          %v5564 = vld [vmem:[%s351 + $0x288] sm:$0xff]
          %v5565 = vld [vmem:[%s351 + $0x290] sm:$0xff]
          %v5566 = vld [vmem:[%s351 + $0x298] sm:$0xff]
          %v5567 = vld [vmem:[%s351 + $0x2a0] sm:$0xff]
          %v5568 = vld [vmem:[%s351 + $0x2a8] sm:$0xff]
          %v5569 = vld [vmem:[%s351 + $0x2b0] sm:$0xff]
          %v5570 = vld [vmem:[%s351 + $0x2b8] sm:$0xff]
          %v5571 = vld [vmem:[%s351 + $0x2c0] sm:$0xff]
          %v5572 = vld [vmem:[%s351 + $0x2c8] sm:$0xff]
          %v5573 = vld [vmem:[%s351 + $0x2d0] sm:$0xff]
          %v5574 = vld [vmem:[%s351 + $0x2d8] sm:$0xff]
          %v5575 = vld [vmem:[%s351 + $0x2e0] sm:$0xff]
          %v5576 = vld [vmem:[%s351 + $0x2e8] sm:$0xff]
          %v5577 = vld [vmem:[%s351 + $0x2f0] sm:$0xff]
          %v5578 = vld [vmem:[%s351 + $0x2f8] sm:$0xff]
          %v5579 = vld [vmem:[%s351 + $0x300] sm:$0xff]
          %v5580 = vld [vmem:[%s351 + $0x308] sm:$0xff]
          %v5581 = vld [vmem:[%s351 + $0x310] sm:$0xff]
          %v5582 = vld [vmem:[%s351 + $0x318] sm:$0xff]
          %v5583 = vld [vmem:[%s351 + $0x320] sm:$0xff]
          %v5584 = vld [vmem:[%s351 + $0x328] sm:$0xff]
          %v5585 = vld [vmem:[%s351 + $0x330] sm:$0xff]
          %v5586 = vld [vmem:[%s351 + $0x338] sm:$0xff]
          %v5587 = vld [vmem:[%s351 + $0x340] sm:$0xff]
          %v5588 = vld [vmem:[%s351 + $0x348] sm:$0xff]
          %v5589 = vld [vmem:[%s351 + $0x350] sm:$0xff]
          %v5590 = vld [vmem:[%s351 + $0x358] sm:$0xff]
          %v5591 = vld [vmem:[%s351 + $0x360] sm:$0xff]
          %v5592 = vld [vmem:[%s351 + $0x368] sm:$0xff]
          %v5593 = vld [vmem:[%s351 + $0x370] sm:$0xff]
          %v5594 = vld [vmem:[%s351 + $0x378] sm:$0xff]
          %v5595 = vld [vmem:[%s351 + $0x380] sm:$0xff]
          %v5596 = vld [vmem:[%s351 + $0x388] sm:$0xff]
          %v5597 = vld [vmem:[%s351 + $0x390] sm:$0xff]
          %v5598 = vld [vmem:[%s351 + $0x398] sm:$0xff]
          %v5599 = vld [vmem:[%s351 + $0x3a0] sm:$0xff]
          %v5600 = vld [vmem:[%s351 + $0x3a8] sm:$0xff]
          %v5601 = vld [vmem:[%s351 + $0x3b0] sm:$0xff]
          %v5602 = vld [vmem:[%s351 + $0x3b8] sm:$0xff]
          %v5603 = vld [vmem:[%s351 + $0x3c0] sm:$0xff]
          %v5604 = vld [vmem:[%s351 + $0x3c8] sm:$0xff]
          %v5605 = vld [vmem:[%s351 + $0x3d0] sm:$0xff]
          %v5606 = vld [vmem:[%s351 + $0x3d8] sm:$0xff]
          %v5607 = vld [vmem:[%s351 + $0x3e0] sm:$0xff]
          %v5608 = vld [vmem:[%s351 + $0x3e8] sm:$0xff]
          %v5609 = vld [vmem:[%s351 + $0x3f0] sm:$0xff]
          %v5610 = vld [vmem:[%s351 + $0x3f8] sm:$0xff]
          %v5611 = vld [vmem:[#allocation9] sm:$0xff]
          %v5612 = vld [vmem:[#allocation9 + $0x8] sm:$0xff]
          %v5613 = vld [vmem:[#allocation9 + $0x10] sm:$0xff]
          %v5614 = vld [vmem:[#allocation9 + $0x18] sm:$0xff]
          %v5615 = vld [vmem:[#allocation9 + $0x20] sm:$0xff]
          %v5616 = vld [vmem:[#allocation9 + $0x28] sm:$0xff]
          %v5617 = vld [vmem:[#allocation9 + $0x30] sm:$0xff]
          %v5618 = vld [vmem:[#allocation9 + $0x38] sm:$0xff]
          %v5619 = vld [vmem:[#allocation9 + $0x40] sm:$0xff]
          %v5620 = vld [vmem:[#allocation9 + $0x48] sm:$0xff]
          %v5621 = vld [vmem:[#allocation9 + $0x50] sm:$0xff]
          %v5622 = vld [vmem:[#allocation9 + $0x58] sm:$0xff]
          %v5623 = vld [vmem:[#allocation9 + $0x60] sm:$0xff]
          %v5624 = vld [vmem:[#allocation9 + $0x68] sm:$0xff]
          %v5625 = vld [vmem:[#allocation9 + $0x70] sm:$0xff]
          %v5626 = vld [vmem:[#allocation9 + $0x78] sm:$0xff]
          %v5627 = vld [vmem:[#allocation9 + $0x80] sm:$0xff]
          %v5628 = vld [vmem:[#allocation9 + $0x88] sm:$0xff]
          %v5629 = vld [vmem:[#allocation9 + $0x90] sm:$0xff]
          %v5630 = vld [vmem:[#allocation9 + $0x98] sm:$0xff]
          %v5631 = vld [vmem:[#allocation9 + $0xa0] sm:$0xff]
          %v5632 = vld [vmem:[#allocation9 + $0xa8] sm:$0xff]
          %v5633 = vld [vmem:[#allocation9 + $0xb0] sm:$0xff]
          %v5634 = vld [vmem:[#allocation9 + $0xb8] sm:$0xff]
          %v5635 = vld [vmem:[#allocation9 + $0xc0] sm:$0xff]
          %v5636 = vld [vmem:[#allocation9 + $0xc8] sm:$0xff]
          %v5637 = vld [vmem:[#allocation9 + $0xd0] sm:$0xff]
          %v5638 = vld [vmem:[#allocation9 + $0xd8] sm:$0xff]
          %v5639 = vld [vmem:[#allocation9 + $0xe0] sm:$0xff]
          %v5640 = vld [vmem:[#allocation9 + $0xe8] sm:$0xff]
          %v5641 = vld [vmem:[#allocation9 + $0xf0] sm:$0xff]
          %v5642 = vld [vmem:[#allocation9 + $0xf8] sm:$0xff]
          %v5643 = vld [vmem:[#allocation10] sm:$0x1]
          %v5645 = vperm.slane %v5643, 0
          %5647 = vmatpush.msra.mxu0 %v5626
          %5648 = vmatpush.msra.mxu0 %v5625
          %5649 = vmatpush.msra.mxu0 %v5624
          %5650 = vmatpush.msra.mxu0 %v5623
          %5651 = vmatpush.msra.mxu0 %v5622
          %5652 = vmatpush.msra.mxu0 %v5621
          %5653 = vmatpush.msra.mxu0 %v5620
          %5654 = vmatpush.msra.mxu0 %v5619
          %5655 = vmatpush.msra.mxu0 %v5618
          %5656 = vmatpush.msra.mxu0 %v5617
          %5657 = vmatpush.msra.mxu0 %v5616
          %5658 = vmatpush.msra.mxu0 %v5615
          %5659 = vmatpush.msra.mxu0 %v5614
          %5660 = vmatpush.msra.mxu0 %v5613
          %5661 = vmatpush.msra.mxu0 %v5612
          %5662 = vmatpush.msra.mxu0 %v5611
          %5663 = vmatmul.f32.gmra.mxu0 %v5483
          %v5664 = vpop.f32.mrf.mxu0
          %v5665 = vadd.f32 %v5645, %v5664
          %5666 = vmatmul.f32.gmra.mxu0 %v5485
          %v5667 = vpop.f32.mrf.mxu0
          %v5668 = vadd.f32 %v5645, %v5667
          %5669 = vmatmul.f32.gmra.mxu0 %v5487
          %v5670 = vpop.f32.mrf.mxu0
          %v5671 = vadd.f32 %v5645, %v5670
          %5672 = vmatmul.f32.gmra.mxu0 %v5489
          %v5673 = vpop.f32.mrf.mxu0
          %v5674 = vadd.f32 %v5645, %v5673
          %5675 = vmatmul.f32.gmra.mxu0 %v5491
          %v5676 = vpop.f32.mrf.mxu0
          %v5677 = vadd.f32 %v5645, %v5676
          %5678 = vmatmul.f32.gmra.mxu0 %v5493
          %v5679 = vpop.f32.mrf.mxu0
          %v5680 = vadd.f32 %v5645, %v5679
          %5681 = vmatmul.f32.gmra.mxu0 %v5495
          %v5682 = vpop.f32.mrf.mxu0
          %v5683 = vadd.f32 %v5645, %v5682
          %5684 = vmatmul.f32.gmra.mxu0 %v5497
          %v5685 = vpop.f32.mrf.mxu0
          %v5686 = vadd.f32 %v5645, %v5685
          %5687 = vmatmul.f32.gmra.mxu0 %v5499
          %v5688 = vpop.f32.mrf.mxu0
          %v5689 = vadd.f32 %v5645, %v5688
          %5690 = vmatmul.f32.gmra.mxu0 %v5501
          %v5691 = vpop.f32.mrf.mxu0
          %v5692 = vadd.f32 %v5645, %v5691
          %5693 = vmatmul.f32.gmra.mxu0 %v5503
          %v5694 = vpop.f32.mrf.mxu0
          %v5695 = vadd.f32 %v5645, %v5694
          %5696 = vmatmul.f32.gmra.mxu0 %v5505
          %v5697 = vpop.f32.mrf.mxu0
          %v5698 = vadd.f32 %v5645, %v5697
          %5699 = vmatmul.f32.gmra.mxu0 %v5507
          %v5700 = vpop.f32.mrf.mxu0
          %v5701 = vadd.f32 %v5645, %v5700
          %5702 = vmatmul.f32.gmra.mxu0 %v5509
          %v5703 = vpop.f32.mrf.mxu0
          %v5704 = vadd.f32 %v5645, %v5703
          %5705 = vmatmul.f32.gmra.mxu0 %v5511
          %v5706 = vpop.f32.mrf.mxu0
          %v5707 = vadd.f32 %v5645, %v5706
          %5708 = vmatmul.f32.gmra.mxu0 %v5513
          %v5709 = vpop.f32.mrf.mxu0
          %v5710 = vadd.f32 %v5645, %v5709
          %5711 = vmatmul.f32.gmra.mxu0 %v5515
          %v5712 = vpop.f32.mrf.mxu0
          %v5713 = vadd.f32 %v5645, %v5712
          %5714 = vmatmul.f32.gmra.mxu0 %v5517
          %v5715 = vpop.f32.mrf.mxu0
          %v5716 = vadd.f32 %v5645, %v5715
          %5717 = vmatmul.f32.gmra.mxu0 %v5519
          %v5718 = vpop.f32.mrf.mxu0
          %v5719 = vadd.f32 %v5645, %v5718
          %5720 = vmatmul.f32.gmra.mxu0 %v5521
          %v5721 = vpop.f32.mrf.mxu0
          %v5722 = vadd.f32 %v5645, %v5721
          %5723 = vmatmul.f32.gmra.mxu0 %v5523
          %v5724 = vpop.f32.mrf.mxu0
          %v5725 = vadd.f32 %v5645, %v5724
          %5726 = vmatmul.f32.gmra.mxu0 %v5525
          %v5727 = vpop.f32.mrf.mxu0
          %v5728 = vadd.f32 %v5645, %v5727
          %5729 = vmatmul.f32.gmra.mxu0 %v5527
          %v5730 = vpop.f32.mrf.mxu0
          %v5731 = vadd.f32 %v5645, %v5730
          %5732 = vmatmul.f32.gmra.mxu0 %v5529
          %v5733 = vpop.f32.mrf.mxu0
          %v5734 = vadd.f32 %v5645, %v5733
          %5735 = vmatmul.f32.gmra.mxu0 %v5531
          %v5736 = vpop.f32.mrf.mxu0
          %v5737 = vadd.f32 %v5645, %v5736
          %5738 = vmatmul.f32.gmra.mxu0 %v5533
          %v5739 = vpop.f32.mrf.mxu0
          %v5740 = vadd.f32 %v5645, %v5739
          %5741 = vmatmul.f32.gmra.mxu0 %v5535
          %v5742 = vpop.f32.mrf.mxu0
          %v5743 = vadd.f32 %v5645, %v5742
          %5744 = vmatmul.f32.gmra.mxu0 %v5537
          %v5745 = vpop.f32.mrf.mxu0
          %v5746 = vadd.f32 %v5645, %v5745
          %5747 = vmatmul.f32.gmra.mxu0 %v5539
          %v5748 = vpop.f32.mrf.mxu0
          %v5749 = vadd.f32 %v5645, %v5748
          %5750 = vmatmul.f32.gmra.mxu0 %v5541
          %v5751 = vpop.f32.mrf.mxu0
          %v5752 = vadd.f32 %v5645, %v5751
          %5753 = vmatmul.f32.gmra.mxu0 %v5543
          %v5754 = vpop.f32.mrf.mxu0
          %v5755 = vadd.f32 %v5645, %v5754
          %5756 = vmatmul.f32.gmra.mxu0 %v5545
          %v5757 = vpop.f32.mrf.mxu0
          %v5758 = vadd.f32 %v5645, %v5757
          %5759 = vmatmul.f32.gmra.mxu0 %v5547
          %v5760 = vpop.f32.mrf.mxu0
          %v5761 = vadd.f32 %v5645, %v5760
          %5762 = vmatmul.f32.gmra.mxu0 %v5549
          %v5763 = vpop.f32.mrf.mxu0
          %v5764 = vadd.f32 %v5645, %v5763
          %5765 = vmatmul.f32.gmra.mxu0 %v5551
          %v5766 = vpop.f32.mrf.mxu0
          %v5767 = vadd.f32 %v5645, %v5766
          %5768 = vmatmul.f32.gmra.mxu0 %v5553
          %v5769 = vpop.f32.mrf.mxu0
          %v5770 = vadd.f32 %v5645, %v5769
          %5771 = vmatmul.f32.gmra.mxu0 %v5555
          %v5772 = vpop.f32.mrf.mxu0
          %v5773 = vadd.f32 %v5645, %v5772
          %5774 = vmatmul.f32.gmra.mxu0 %v5557
          %v5775 = vpop.f32.mrf.mxu0
          %v5776 = vadd.f32 %v5645, %v5775
          %5777 = vmatmul.f32.gmra.mxu0 %v5559
          %v5778 = vpop.f32.mrf.mxu0
          %v5779 = vadd.f32 %v5645, %v5778
          %5780 = vmatmul.f32.gmra.mxu0 %v5561
          %v5781 = vpop.f32.mrf.mxu0
          %v5782 = vadd.f32 %v5645, %v5781
          %5783 = vmatmul.f32.gmra.mxu0 %v5563
          %v5784 = vpop.f32.mrf.mxu0
          %v5785 = vadd.f32 %v5645, %v5784
          %5786 = vmatmul.f32.gmra.mxu0 %v5565
          %v5787 = vpop.f32.mrf.mxu0
          %v5788 = vadd.f32 %v5645, %v5787
          %5789 = vmatmul.f32.gmra.mxu0 %v5567
          %v5790 = vpop.f32.mrf.mxu0
          %v5791 = vadd.f32 %v5645, %v5790
          %5792 = vmatmul.f32.gmra.mxu0 %v5569
          %v5793 = vpop.f32.mrf.mxu0
          %v5794 = vadd.f32 %v5645, %v5793
          %5795 = vmatmul.f32.gmra.mxu0 %v5571
          %v5796 = vpop.f32.mrf.mxu0
          %v5797 = vadd.f32 %v5645, %v5796
          %5798 = vmatmul.f32.gmra.mxu0 %v5573
          %v5799 = vpop.f32.mrf.mxu0
          %v5800 = vadd.f32 %v5645, %v5799
          %5801 = vmatmul.f32.gmra.mxu0 %v5575
          %v5802 = vpop.f32.mrf.mxu0
          %v5803 = vadd.f32 %v5645, %v5802
          %5804 = vmatmul.f32.gmra.mxu0 %v5577
          %v5805 = vpop.f32.mrf.mxu0
          %v5806 = vadd.f32 %v5645, %v5805
          %5807 = vmatmul.f32.gmra.mxu0 %v5579
          %v5808 = vpop.f32.mrf.mxu0
          %v5809 = vadd.f32 %v5645, %v5808
          %5810 = vmatmul.f32.gmra.mxu0 %v5581
          %v5811 = vpop.f32.mrf.mxu0
          %v5812 = vadd.f32 %v5645, %v5811
          %5813 = vmatmul.f32.gmra.mxu0 %v5583
          %v5814 = vpop.f32.mrf.mxu0
          %v5815 = vadd.f32 %v5645, %v5814
          %5816 = vmatmul.f32.gmra.mxu0 %v5585
          %v5817 = vpop.f32.mrf.mxu0
          %v5818 = vadd.f32 %v5645, %v5817
          %5819 = vmatmul.f32.gmra.mxu0 %v5587
          %v5820 = vpop.f32.mrf.mxu0
          %v5821 = vadd.f32 %v5645, %v5820
          %5822 = vmatmul.f32.gmra.mxu0 %v5589
          %v5823 = vpop.f32.mrf.mxu0
          %v5824 = vadd.f32 %v5645, %v5823
          %5825 = vmatmul.f32.gmra.mxu0 %v5591
          %v5826 = vpop.f32.mrf.mxu0
          %v5827 = vadd.f32 %v5645, %v5826
          %5828 = vmatmul.f32.gmra.mxu0 %v5593
          %v5829 = vpop.f32.mrf.mxu0
          %v5830 = vadd.f32 %v5645, %v5829
          %5831 = vmatmul.f32.gmra.mxu0 %v5595
          %v5832 = vpop.f32.mrf.mxu0
          %v5833 = vadd.f32 %v5645, %v5832
          %5834 = vmatmul.f32.gmra.mxu0 %v5597
          %v5835 = vpop.f32.mrf.mxu0
          %v5836 = vadd.f32 %v5645, %v5835
          %5837 = vmatmul.f32.gmra.mxu0 %v5599
          %v5838 = vpop.f32.mrf.mxu0
          %v5839 = vadd.f32 %v5645, %v5838
          %5840 = vmatmul.f32.gmra.mxu0 %v5601
          %v5841 = vpop.f32.mrf.mxu0
          %v5842 = vadd.f32 %v5645, %v5841
          %5843 = vmatmul.f32.gmra.mxu0 %v5603
          %v5844 = vpop.f32.mrf.mxu0
          %v5845 = vadd.f32 %v5645, %v5844
          %5846 = vmatmul.f32.gmra.mxu0 %v5605
          %v5847 = vpop.f32.mrf.mxu0
          %v5848 = vadd.f32 %v5645, %v5847
          %5849 = vmatmul.f32.gmra.mxu0 %v5607
          %v5850 = vpop.f32.mrf.mxu0
          %v5851 = vadd.f32 %v5645, %v5850
          %5852 = vmatmul.f32.gmra.mxu0 %v5609
          %v5853 = vpop.f32.mrf.mxu0
          %v5854 = vadd.f32 %v5645, %v5853
          %5855 = vdwg.mxu0
          %5856 = vmatpush.msra.mxu0 %v5642
          %5857 = vmatpush.msra.mxu0 %v5641
          %5858 = vmatpush.msra.mxu0 %v5640
          %5859 = vmatpush.msra.mxu0 %v5639
          %5860 = vmatpush.msra.mxu0 %v5638
          %5861 = vmatpush.msra.mxu0 %v5637
          %5862 = vmatpush.msra.mxu0 %v5636
          %5863 = vmatpush.msra.mxu0 %v5635
          %5864 = vmatpush.msra.mxu0 %v5634
          %5865 = vmatpush.msra.mxu0 %v5633
          %5866 = vmatpush.msra.mxu0 %v5632
          %5867 = vmatpush.msra.mxu0 %v5631
          %5868 = vmatpush.msra.mxu0 %v5630
          %5869 = vmatpush.msra.mxu0 %v5629
          %5870 = vmatpush.msra.mxu0 %v5628
          %5871 = vmatpush.msra.mxu0 %v5627
          %5872 = vmatmul.f32.gmra.mxu0 %v5484
          %v5873 = vpop.f32.mrf.mxu0
          %v5874 = vadd.f32 %v5665, %v5873
          %5875 = vmatmul.f32.gmra.mxu0 %v5486
          %v5876 = vpop.f32.mrf.mxu0
          %v5877 = vadd.f32 %v5668, %v5876
          %5878 = vmatmul.f32.gmra.mxu0 %v5488
          %v5879 = vpop.f32.mrf.mxu0
          %v5880 = vadd.f32 %v5671, %v5879
          %5881 = vmatmul.f32.gmra.mxu0 %v5490
          %v5882 = vpop.f32.mrf.mxu0
          %v5883 = vadd.f32 %v5674, %v5882
          %5884 = vmatmul.f32.gmra.mxu0 %v5492
          %v5885 = vpop.f32.mrf.mxu0
          %v5886 = vadd.f32 %v5677, %v5885
          %5887 = vmatmul.f32.gmra.mxu0 %v5494
          %v5888 = vpop.f32.mrf.mxu0
          %v5889 = vadd.f32 %v5680, %v5888
          %5890 = vmatmul.f32.gmra.mxu0 %v5496
          %v5891 = vpop.f32.mrf.mxu0
          %v5892 = vadd.f32 %v5683, %v5891
          %5893 = vmatmul.f32.gmra.mxu0 %v5498
          %v5894 = vpop.f32.mrf.mxu0
          %v5895 = vadd.f32 %v5686, %v5894
          %5896 = vmatmul.f32.gmra.mxu0 %v5500
          %v5897 = vpop.f32.mrf.mxu0
          %v5898 = vadd.f32 %v5689, %v5897
          %5899 = vmatmul.f32.gmra.mxu0 %v5502
          %v5900 = vpop.f32.mrf.mxu0
          %v5901 = vadd.f32 %v5692, %v5900
          %5902 = vmatmul.f32.gmra.mxu0 %v5504
          %v5903 = vpop.f32.mrf.mxu0
          %v5904 = vadd.f32 %v5695, %v5903
          %5905 = vmatmul.f32.gmra.mxu0 %v5506
          %v5906 = vpop.f32.mrf.mxu0
          %v5907 = vadd.f32 %v5698, %v5906
          %5908 = vmatmul.f32.gmra.mxu0 %v5508
          %v5909 = vpop.f32.mrf.mxu0
          %v5910 = vadd.f32 %v5701, %v5909
          %5911 = vmatmul.f32.gmra.mxu0 %v5510
          %v5912 = vpop.f32.mrf.mxu0
          %v5913 = vadd.f32 %v5704, %v5912
          %5914 = vmatmul.f32.gmra.mxu0 %v5512
          %v5915 = vpop.f32.mrf.mxu0
          %v5916 = vadd.f32 %v5707, %v5915
          %5917 = vmatmul.f32.gmra.mxu0 %v5514
          %v5918 = vpop.f32.mrf.mxu0
          %v5919 = vadd.f32 %v5710, %v5918
          %5920 = vmatmul.f32.gmra.mxu0 %v5516
          %v5921 = vpop.f32.mrf.mxu0
          %v5922 = vadd.f32 %v5713, %v5921
          %5923 = vmatmul.f32.gmra.mxu0 %v5518
          %v5924 = vpop.f32.mrf.mxu0
          %v5925 = vadd.f32 %v5716, %v5924
          %5926 = vmatmul.f32.gmra.mxu0 %v5520
          %v5927 = vpop.f32.mrf.mxu0
          %v5928 = vadd.f32 %v5719, %v5927
          %5929 = vmatmul.f32.gmra.mxu0 %v5522
          %v5930 = vpop.f32.mrf.mxu0
          %v5931 = vadd.f32 %v5722, %v5930
          %5932 = vmatmul.f32.gmra.mxu0 %v5524
          %v5933 = vpop.f32.mrf.mxu0
          %v5934 = vadd.f32 %v5725, %v5933
          %5935 = vmatmul.f32.gmra.mxu0 %v5526
          %v5936 = vpop.f32.mrf.mxu0
          %v5937 = vadd.f32 %v5728, %v5936
          %5938 = vmatmul.f32.gmra.mxu0 %v5528
          %v5939 = vpop.f32.mrf.mxu0
          %v5940 = vadd.f32 %v5731, %v5939
          %5941 = vmatmul.f32.gmra.mxu0 %v5530
          %v5942 = vpop.f32.mrf.mxu0
          %v5943 = vadd.f32 %v5734, %v5942
          %5944 = vmatmul.f32.gmra.mxu0 %v5532
          %v5945 = vpop.f32.mrf.mxu0
          %v5946 = vadd.f32 %v5737, %v5945
          %5947 = vmatmul.f32.gmra.mxu0 %v5534
          %v5948 = vpop.f32.mrf.mxu0
          %v5949 = vadd.f32 %v5740, %v5948
          %5950 = vmatmul.f32.gmra.mxu0 %v5536
          %v5951 = vpop.f32.mrf.mxu0
          %v5952 = vadd.f32 %v5743, %v5951
          %5953 = vmatmul.f32.gmra.mxu0 %v5538
          %v5954 = vpop.f32.mrf.mxu0
          %v5955 = vadd.f32 %v5746, %v5954
          %5956 = vmatmul.f32.gmra.mxu0 %v5540
          %v5957 = vpop.f32.mrf.mxu0
          %v5958 = vadd.f32 %v5749, %v5957
          %5959 = vmatmul.f32.gmra.mxu0 %v5542
          %v5960 = vpop.f32.mrf.mxu0
          %v5961 = vadd.f32 %v5752, %v5960
          %5962 = vmatmul.f32.gmra.mxu0 %v5544
          %v5963 = vpop.f32.mrf.mxu0
          %v5964 = vadd.f32 %v5755, %v5963
          %5965 = vmatmul.f32.gmra.mxu0 %v5546
          %v5966 = vpop.f32.mrf.mxu0
          %v5967 = vadd.f32 %v5758, %v5966
          %5968 = vmatmul.f32.gmra.mxu0 %v5548
          %v5969 = vpop.f32.mrf.mxu0
          %v5970 = vadd.f32 %v5761, %v5969
          %5971 = vmatmul.f32.gmra.mxu0 %v5550
          %v5972 = vpop.f32.mrf.mxu0
          %v5973 = vadd.f32 %v5764, %v5972
          %5974 = vmatmul.f32.gmra.mxu0 %v5552
          %v5975 = vpop.f32.mrf.mxu0
          %v5976 = vadd.f32 %v5767, %v5975
          %5977 = vmatmul.f32.gmra.mxu0 %v5554
          %v5978 = vpop.f32.mrf.mxu0
          %v5979 = vadd.f32 %v5770, %v5978
          %5980 = vmatmul.f32.gmra.mxu0 %v5556
          %v5981 = vpop.f32.mrf.mxu0
          %v5982 = vadd.f32 %v5773, %v5981
          %5983 = vmatmul.f32.gmra.mxu0 %v5558
          %v5984 = vpop.f32.mrf.mxu0
          %v5985 = vadd.f32 %v5776, %v5984
          %5986 = vmatmul.f32.gmra.mxu0 %v5560
          %v5987 = vpop.f32.mrf.mxu0
          %v5988 = vadd.f32 %v5779, %v5987
          %5989 = vmatmul.f32.gmra.mxu0 %v5562
          %v5990 = vpop.f32.mrf.mxu0
          %v5991 = vadd.f32 %v5782, %v5990
          %5992 = vmatmul.f32.gmra.mxu0 %v5564
          %v5993 = vpop.f32.mrf.mxu0
          %v5994 = vadd.f32 %v5785, %v5993
          %5995 = vmatmul.f32.gmra.mxu0 %v5566
          %v5996 = vpop.f32.mrf.mxu0
          %v5997 = vadd.f32 %v5788, %v5996
          %5998 = vmatmul.f32.gmra.mxu0 %v5568
          %v5999 = vpop.f32.mrf.mxu0
          %v6000 = vadd.f32 %v5791, %v5999
          %6001 = vmatmul.f32.gmra.mxu0 %v5570
          %v6002 = vpop.f32.mrf.mxu0
          %v6003 = vadd.f32 %v5794, %v6002
          %6004 = vmatmul.f32.gmra.mxu0 %v5572
          %v6005 = vpop.f32.mrf.mxu0
          %v6006 = vadd.f32 %v5797, %v6005
          %6007 = vmatmul.f32.gmra.mxu0 %v5574
          %v6008 = vpop.f32.mrf.mxu0
          %v6009 = vadd.f32 %v5800, %v6008
          %6010 = vmatmul.f32.gmra.mxu0 %v5576
          %v6011 = vpop.f32.mrf.mxu0
          %v6012 = vadd.f32 %v5803, %v6011
          %6013 = vmatmul.f32.gmra.mxu0 %v5578
          %v6014 = vpop.f32.mrf.mxu0
          %v6015 = vadd.f32 %v5806, %v6014
          %6016 = vmatmul.f32.gmra.mxu0 %v5580
          %v6017 = vpop.f32.mrf.mxu0
          %v6018 = vadd.f32 %v5809, %v6017
          %6019 = vmatmul.f32.gmra.mxu0 %v5582
          %v6020 = vpop.f32.mrf.mxu0
          %v6021 = vadd.f32 %v5812, %v6020
          %6022 = vmatmul.f32.gmra.mxu0 %v5584
          %v6023 = vpop.f32.mrf.mxu0
          %v6024 = vadd.f32 %v5815, %v6023
          %6025 = vmatmul.f32.gmra.mxu0 %v5586
          %v6026 = vpop.f32.mrf.mxu0
          %v6027 = vadd.f32 %v5818, %v6026
          %6028 = vmatmul.f32.gmra.mxu0 %v5588
          %v6029 = vpop.f32.mrf.mxu0
          %v6030 = vadd.f32 %v5821, %v6029
          %6031 = vmatmul.f32.gmra.mxu0 %v5590
          %v6032 = vpop.f32.mrf.mxu0
          %v6033 = vadd.f32 %v5824, %v6032
          %6034 = vmatmul.f32.gmra.mxu0 %v5592
          %v6035 = vpop.f32.mrf.mxu0
          %v6036 = vadd.f32 %v5827, %v6035
          %6037 = vmatmul.f32.gmra.mxu0 %v5594
          %v6038 = vpop.f32.mrf.mxu0
          %v6039 = vadd.f32 %v5830, %v6038
          %6040 = vmatmul.f32.gmra.mxu0 %v5596
          %v6041 = vpop.f32.mrf.mxu0
          %v6042 = vadd.f32 %v5833, %v6041
          %6043 = vmatmul.f32.gmra.mxu0 %v5598
          %v6044 = vpop.f32.mrf.mxu0
          %v6045 = vadd.f32 %v5836, %v6044
          %6046 = vmatmul.f32.gmra.mxu0 %v5600
          %v6047 = vpop.f32.mrf.mxu0
          %v6048 = vadd.f32 %v5839, %v6047
          %6049 = vmatmul.f32.gmra.mxu0 %v5602
          %v6050 = vpop.f32.mrf.mxu0
          %v6051 = vadd.f32 %v5842, %v6050
          %6052 = vmatmul.f32.gmra.mxu0 %v5604
          %v6053 = vpop.f32.mrf.mxu0
          %v6054 = vadd.f32 %v5845, %v6053
          %6055 = vmatmul.f32.gmra.mxu0 %v5606
          %v6056 = vpop.f32.mrf.mxu0
          %v6057 = vadd.f32 %v5848, %v6056
          %6058 = vmatmul.f32.gmra.mxu0 %v5608
          %v6059 = vpop.f32.mrf.mxu0
          %v6060 = vadd.f32 %v5851, %v6059
          %6061 = vmatmul.f32.gmra.mxu0 %v5610
          %v6062 = vpop.f32.mrf.mxu0
          %v6063 = vadd.f32 %v5854, %v6062
          %6064 = vdwg.mxu0
          %v6065 = vadd.f32 %v5874, %v5419
          %v6066 = vadd.f32 %v5877, %v5420
          %v6067 = vadd.f32 %v5880, %v5421
          %v6068 = vadd.f32 %v5883, %v5422
          %v6069 = vadd.f32 %v5886, %v5423
          %v6070 = vadd.f32 %v5889, %v5424
          %v6071 = vadd.f32 %v5892, %v5425
          %v6072 = vadd.f32 %v5895, %v5426
          %v6073 = vadd.f32 %v5898, %v5427
          %v6074 = vadd.f32 %v5901, %v5428
          %v6075 = vadd.f32 %v5904, %v5429
          %v6076 = vadd.f32 %v5907, %v5430
          %v6077 = vadd.f32 %v5910, %v5431
          %v6078 = vadd.f32 %v5913, %v5432
          %v6079 = vadd.f32 %v5916, %v5433
          %v6080 = vadd.f32 %v5919, %v5434
          %v6081 = vadd.f32 %v5922, %v5435
          %v6082 = vadd.f32 %v5925, %v5436
          %v6083 = vadd.f32 %v5928, %v5437
          %v6084 = vadd.f32 %v5931, %v5438
          %v6085 = vadd.f32 %v5934, %v5439
          %v6086 = vadd.f32 %v5937, %v5440
          %v6087 = vadd.f32 %v5940, %v5441
          %v6088 = vadd.f32 %v5943, %v5442
          %v6089 = vadd.f32 %v5946, %v5443
          %v6090 = vadd.f32 %v5949, %v5444
          %v6091 = vadd.f32 %v5952, %v5445
          %v6092 = vadd.f32 %v5955, %v5446
          %v6093 = vadd.f32 %v5958, %v5447
          %v6094 = vadd.f32 %v5961, %v5448
          %v6095 = vadd.f32 %v5964, %v5449
          %v6096 = vadd.f32 %v5967, %v5450
          %v6097 = vadd.f32 %v5970, %v5451
          %v6098 = vadd.f32 %v5973, %v5452
          %v6099 = vadd.f32 %v5976, %v5453
          %v6100 = vadd.f32 %v5979, %v5454
          %v6101 = vadd.f32 %v5982, %v5455
          %v6102 = vadd.f32 %v5985, %v5456
          %v6103 = vadd.f32 %v5988, %v5457
          %v6104 = vadd.f32 %v5991, %v5458
          %v6105 = vadd.f32 %v5994, %v5459
          %v6106 = vadd.f32 %v5997, %v5460
          %v6107 = vadd.f32 %v6000, %v5461
          %v6108 = vadd.f32 %v6003, %v5462
          %v6109 = vadd.f32 %v6006, %v5463
          %v6110 = vadd.f32 %v6009, %v5464
          %v6111 = vadd.f32 %v6012, %v5465
          %v6112 = vadd.f32 %v6015, %v5466
          %v6113 = vadd.f32 %v6018, %v5467
          %v6114 = vadd.f32 %v6021, %v5468
          %v6115 = vadd.f32 %v6024, %v5469
          %v6116 = vadd.f32 %v6027, %v5470
          %v6117 = vadd.f32 %v6030, %v5471
          %v6118 = vadd.f32 %v6033, %v5472
          %v6119 = vadd.f32 %v6036, %v5473
          %v6120 = vadd.f32 %v6039, %v5474
          %v6121 = vadd.f32 %v6042, %v5475
          %v6122 = vadd.f32 %v6045, %v5476
          %v6123 = vadd.f32 %v6048, %v5477
          %v6124 = vadd.f32 %v6051, %v5478
          %v6125 = vadd.f32 %v6054, %v5479
          %v6126 = vadd.f32 %v6057, %v5480
          %v6127 = vadd.f32 %v6060, %v5481
          %v6128 = vadd.f32 %v6063, %v5482
          %6129 = vst [vmem:[%s400] sm:$0xff] %v6065
          %6130 = vst [vmem:[%s400 + $0x8] sm:$0xff] %v6066
          %6131 = vst [vmem:[%s400 + $0x10] sm:$0xff] %v6067
          %6132 = vst [vmem:[%s400 + $0x18] sm:$0xff] %v6068
          %6133 = vst [vmem:[%s400 + $0x20] sm:$0xff] %v6069
          %6134 = vst [vmem:[%s400 + $0x28] sm:$0xff] %v6070
          %6135 = vst [vmem:[%s400 + $0x30] sm:$0xff] %v6071
          %6136 = vst [vmem:[%s400 + $0x38] sm:$0xff] %v6072
          %6137 = vst [vmem:[%s400 + $0x40] sm:$0xff] %v6073
          %6138 = vst [vmem:[%s400 + $0x48] sm:$0xff] %v6074
          %6139 = vst [vmem:[%s400 + $0x50] sm:$0xff] %v6075
          %6140 = vst [vmem:[%s400 + $0x58] sm:$0xff] %v6076
          %6141 = vst [vmem:[%s400 + $0x60] sm:$0xff] %v6077
          %6142 = vst [vmem:[%s400 + $0x68] sm:$0xff] %v6078
          %6143 = vst [vmem:[%s400 + $0x70] sm:$0xff] %v6079
          %6144 = vst [vmem:[%s400 + $0x78] sm:$0xff] %v6080
          %6145 = vst [vmem:[%s400 + $0x80] sm:$0xff] %v6081
          %6146 = vst [vmem:[%s400 + $0x88] sm:$0xff] %v6082
          %6147 = vst [vmem:[%s400 + $0x90] sm:$0xff] %v6083
          %6148 = vst [vmem:[%s400 + $0x98] sm:$0xff] %v6084
          %6149 = vst [vmem:[%s400 + $0xa0] sm:$0xff] %v6085
          %6150 = vst [vmem:[%s400 + $0xa8] sm:$0xff] %v6086
          %6151 = vst [vmem:[%s400 + $0xb0] sm:$0xff] %v6087
          %6152 = vst [vmem:[%s400 + $0xb8] sm:$0xff] %v6088
          %6153 = vst [vmem:[%s400 + $0xc0] sm:$0xff] %v6089
          %6154 = vst [vmem:[%s400 + $0xc8] sm:$0xff] %v6090
          %6155 = vst [vmem:[%s400 + $0xd0] sm:$0xff] %v6091
          %6156 = vst [vmem:[%s400 + $0xd8] sm:$0xff] %v6092
          %6157 = vst [vmem:[%s400 + $0xe0] sm:$0xff] %v6093
          %6158 = vst [vmem:[%s400 + $0xe8] sm:$0xff] %v6094
          %6159 = vst [vmem:[%s400 + $0xf0] sm:$0xff] %v6095
          %6160 = vst [vmem:[%s400 + $0xf8] sm:$0xff] %v6096
          %6161 = vst [vmem:[%s400 + $0x100] sm:$0xff] %v6097
          %6162 = vst [vmem:[%s400 + $0x108] sm:$0xff] %v6098
          %6163 = vst [vmem:[%s400 + $0x110] sm:$0xff] %v6099
          %6164 = vst [vmem:[%s400 + $0x118] sm:$0xff] %v6100
          %6165 = vst [vmem:[%s400 + $0x120] sm:$0xff] %v6101
          %6166 = vst [vmem:[%s400 + $0x128] sm:$0xff] %v6102
          %6167 = vst [vmem:[%s400 + $0x130] sm:$0xff] %v6103
          %6168 = vst [vmem:[%s400 + $0x138] sm:$0xff] %v6104
          %6169 = vst [vmem:[%s400 + $0x140] sm:$0xff] %v6105
          %6170 = vst [vmem:[%s400 + $0x148] sm:$0xff] %v6106
          %6171 = vst [vmem:[%s400 + $0x150] sm:$0xff] %v6107
          %6172 = vst [vmem:[%s400 + $0x158] sm:$0xff] %v6108
          %6173 = vst [vmem:[%s400 + $0x160] sm:$0xff] %v6109
          %6174 = vst [vmem:[%s400 + $0x168] sm:$0xff] %v6110
          %6175 = vst [vmem:[%s400 + $0x170] sm:$0xff] %v6111
          %6176 = vst [vmem:[%s400 + $0x178] sm:$0xff] %v6112
          %6177 = vst [vmem:[%s400 + $0x180] sm:$0xff] %v6113
          %6178 = vst [vmem:[%s400 + $0x188] sm:$0xff] %v6114
          %6179 = vst [vmem:[%s400 + $0x190] sm:$0xff] %v6115
          %6180 = vst [vmem:[%s400 + $0x198] sm:$0xff] %v6116
          %6181 = vst [vmem:[%s400 + $0x1a0] sm:$0xff] %v6117
          %6182 = vst [vmem:[%s400 + $0x1a8] sm:$0xff] %v6118
          %6183 = vst [vmem:[%s400 + $0x1b0] sm:$0xff] %v6119
          %6184 = vst [vmem:[%s400 + $0x1b8] sm:$0xff] %v6120
          %6185 = vst [vmem:[%s400 + $0x1c0] sm:$0xff] %v6121
          %6186 = vst [vmem:[%s400 + $0x1c8] sm:$0xff] %v6122
          %6187 = vst [vmem:[%s400 + $0x1d0] sm:$0xff] %v6123
          %6188 = vst [vmem:[%s400 + $0x1d8] sm:$0xff] %v6124
          %6189 = vst [vmem:[%s400 + $0x1e0] sm:$0xff] %v6125
          %6190 = vst [vmem:[%s400 + $0x1e8] sm:$0xff] %v6126
          %6191 = vst [vmem:[%s400 + $0x1f0] sm:$0xff] %v6127
          %6192 = vst [vmem:[%s400 + $0x1f8] sm:$0xff] %v6128
        $region72: #{tpu_custom_call.1} parent=43 // pred_fallthru
          _
        %s6193 = sand.u32 %s193, 1
        %s6194 = scalar_lea.sflag [#allocation5], %s6193
        %s6195 = sand.u32 %s193, 1
        %s6196 = smul.addr %s6195, 512
        %s6197 = scalar_lea.vmem [#allocation12], %s6196
        // Predicated region
        $region73: #{tpu_custom_call.1} parent=43 // pred_check
          %p6198 = pneg %p203
        $region74: #{tpu_custom_call.1} parent=43 // pred_check_branch
          %6200 = sbr.rel (%p6198) target = $region76
        $region75: #{tpu_custom_call.1} parent=43 // pred_region
          %s6201 = smul.u32 64, %s29
          %6203 = vsyncadd %s6194, 0
          %s6204 = smul.addr %s6201, 8
          %s6205 = scalar_lea.hbm %s6, %s6204
          %s6206 = sshll.u32 %s6197, 4
          %s6207 = int_to_ptr.vmem [resolvable:$true] %s6206
          %s6208 = sshll.u32 %s6205, 4
          %s6209 = int_to_ptr.hbm [resolvable:$true] %s6208
          %6214 = dma.vmem_to_hbm [thread:$0]  %s6207, 8192, %s6209, %s6194, 128, 128, 8
        $region76: #{tpu_custom_call.1} parent=43 // pred_fallthru
          _
      $region44: #{tpu_custom_call.1} parent=5 // pred_fallthru
        _
      %p6215 = scmp.le.s32.totalorder 2, %s20
      // Predicated region
      $region77: #{tpu_custom_call.1} parent=5 // pred_check
        %p6216 = pneg %p6215
      $region78: #{tpu_custom_call.1} parent=5 // pred_check_branch
        %6218 = sbr.rel (%p6216) target = $region80
      $region79: #{tpu_custom_call.1} parent=5 // pred_region
        %s6219 = ssub.s32 %s20, 2
        // Predicated region
        $region81: #{tpu_custom_call.1} parent=79 // pred_check
          %p6220 = pneg %p209
        $region82: #{tpu_custom_call.1} parent=79 // pred_check_branch
          %6222 = sbr.rel (%p6220) target = $region84
        $region83: #{tpu_custom_call.1} parent=79 // pred_region
          %s6223 = sand.u32 %s194, 1
          %s6224 = scalar_lea.sflag [#allocation5], %s6223
          %s6225 = sand.u32 %s194, 1
          %s6226 = smul.addr %s6225, 512
          %s6227 = scalar_lea.vmem [#allocation12], %s6226
          %6229 = dma.done %s6224, 8192
        $region84: #{tpu_custom_call.1} parent=79 // pred_fallthru
          _
      $region80: #{tpu_custom_call.1} parent=5 // pred_fallthru
        _
    $region6: #{tpu_custom_call.1} parent=1 // loop_footer
      %s24 = sadd.s32 1, %s20
    $region7: #{tpu_custom_call.1} parent=1 // loop_footer_branch
      %19 = sbr.rel target = $region3
    $region8: #{tpu_custom_call.1} parent=1 // loop_exit
      _
    %6230 = vsyncpa [#allocation4], 1
    %s6231 = scalar_lea.sflag [#allocation4], 1
    %6232 = vsyncpa %s6231, 1
    %6233 = vsyncpa [#allocation7], 1
    %6234 = vsyncpa [#allocation11], 1
    %6235 = vsyncpa [#allocation5], 1
    %s6236 = scalar_lea.sflag [#allocation5], 1
    %6237 = vsyncpa %s6236, 1

</llo_original>
